<compile_context>
chip_gen: v7x
topology: tpu7x:2x2x1
jax: 0.10.0
libtpu: 0.0.40
codegen_flags: <defaults>
</compile_context>

<pallas_src>
import math

import jax
import jax.numpy as jnp
from jax.experimental import pallas as pl
from jax.experimental.pallas import tpu as pltpu

EMB = 256     # emb_size (module default)
HEADS = 4     # num_heads
MLP = 512     # mlp_dim (module default)
EPS = 1e-5    # nn.LayerNorm default eps

# Row indices inside the packed (13, >=3E) f32 vector slab.
R_SU_B, R_N1_G, R_N1_B, R_BQKV, R_BO = 0, 1, 2, 3, 4
R_CW0, R_CW1, R_CW2, R_CB = 5, 6, 7, 8
R_N2_G, R_N2_B, R_B1, R_B2 = 9, 10, 11, 12

# Column offsets inside the packed (E, 6E) bf16 matrix slab:
#   [0, 3E)   fused q|k|v projection weight (q part pre-scaled by 1/sqrt(hd))
#   [3E, 4E)  attention out_proj weight
#   [4E, 6E)  MLP first Linear weight (E -> MLP)


def make_kernel(seq, heads):
    def ssb_kernel(x_ref, st_ref, su_ref, mat_ref, w2_ref, vec_ref,
                   x_out_ref, st_out_ref):
        f32, bf16 = jnp.float32, jnp.bfloat16

        x = x_ref[...]          # (R, E) f32, R = nb * seq packed rows
        state = st_ref[...]     # (R, E) f32
        R, E = x.shape
        nb = R // seq
        hd = E // heads
        M = w2_ref.shape[0]

        def mm(a, b):
            # bf16 x bf16 -> f32 accumulation: single-pass native MXU rate.
            return jnp.dot(a, b, preferred_element_type=f32)

        def vrow(r, width):
            return vec_ref[r:r + 1, 0:width]          # (1, width) f32

        def layernorm(v, g, b):
            mu = jnp.mean(v, axis=-1, keepdims=True)
            var = jnp.mean((v - mu) ** 2, axis=-1, keepdims=True)
            return (v - mu) * jax.lax.rsqrt(var + EPS) * g + b

        # ---- state = Linear(state) + x  (kept f32: long-lived carry) ------
        new_state = jnp.dot(state, su_ref[...],
                            preferred_element_type=f32,
                            precision=jax.lax.Precision.HIGHEST) \
            + vrow(R_SU_B, E) + x

        # ---- pre-attention LayerNorm (f32 statistics) ----------------------
        nx = layernorm(x, vrow(R_N1_G, E), vrow(R_N1_B, E)).astype(bf16)

        # ---- fused QKV projection: one (R,E)@(E,3E) MXU pass ----------------
        qkv = mm(nx, mat_ref[:, 0:3 * E]) + vrow(R_BQKV, 3 * E)   # (R,3E) f32
        qkv = qkv.astype(bf16)   # single cast; scale already folded into Wq/bq

        # ---- multi-head self-attention (attn dropout = identity in eval) ---
        # Per-batch-element loop (nb is small); heads are exact lane slices of
        # the fused qkv.  Head outputs are lane-concatenated and run through a
        # single K=E out-projection matmul for all R rows at once.
        head_cat = []
        for bi in range(nb):
            r0 = bi * seq
            ohs = []
            for h in range(heads):
                qh = qkv[r0:r0 + seq, h * hd:(h + 1) * hd]
                kh = qkv[r0:r0 + seq, E + h * hd:E + (h + 1) * hd]
                vh = qkv[r0:r0 + seq, 2 * E + h * hd:2 * E + (h + 1) * hd]
                sc = jax.lax.dot_general(qh, kh, (((1,), (1,)), ((), ())),
                                         preferred_element_type=f32)
                sc = sc - jnp.max(sc, axis=-1, keepdims=True)
                p = jnp.exp(sc)                                   # unnormalised
                denom = jnp.sum(p, axis=-1, keepdims=True)
                oh = jnp.dot(p.astype(bf16), vh, preferred_element_type=f32)
                # deferred softmax normalisation: scale (seq, hd) accumulator
                ohs.append(oh * pl.reciprocal(denom, approx=True))
            head_cat.append(jnp.concatenate(ohs, axis=1))          # (seq, E)
        attn_in = jnp.concatenate(head_cat, axis=0).astype(bf16)  # (R, E)
        x1 = x + mm(attn_in, mat_ref[:, 3 * E:4 * E]) + vrow(R_BO, E)

        # ---- depthwise Conv1d(k=3, padding=1) along sequence, then SiLU ----
        # pltpu.roll keeps the shifts on the XLU; a narrow (R,1) position
        # vector masks both the zero padding and the batch boundaries inside
        # the packed block.
        pos = jax.lax.broadcasted_iota(jnp.int32, (R, 1), 0) % seq
        x_prev = jnp.where(pos == 0, 0.0, pltpu.roll(x1, shift=1, axis=0))
        x_next = jnp.where(pos == seq - 1, 0.0,
                           pltpu.roll(x1, shift=R - 1, axis=0))
        conv = (x_prev * vrow(R_CW0, E) + x1 * vrow(R_CW1, E)
                + x_next * vrow(R_CW2, E) + vrow(R_CB, E))
        conv = conv * jax.nn.sigmoid(conv)                          # SiLU

        x2 = x1 + conv + new_state

        # ---- MLP branch (dropout = identity in eval) ------------------------
        n2 = layernorm(x2, vrow(R_N2_G, E), vrow(R_N2_B, E)).astype(bf16)
        h1 = mm(n2, mat_ref[:, 4 * E:6 * E]) + vrow(R_B1, M)
        # tanh-approx GELU: one EUP tanh + a few VPU ops.
        h1 = 0.5 * h1 * (1.0 + jnp.tanh(0.7978845608028654
                                        * (h1 + 0.044715 * h1 * h1 * h1)))
        h2 = mm(h1.astype(bf16), w2_ref[...]) + vrow(R_B2, E)

        x_out_ref[...] = (x2 + h2).astype(x_out_ref.dtype)
        st_out_ref[...] = new_state.astype(st_out_ref.dtype)

    return ssb_kernel


def pack_params(p):
    """Pack parameters into 4 slabs; attention scale folded into Wq/bq."""
    E = p["n1_g"].shape[-1]
    hd = E // HEADS
    scale = 1.0 / math.sqrt(hd)

    su_w = p["su_w"].astype(jnp.float32)                 # (E, E) f32
    mat = jnp.concatenate(
        [p["wq"] * scale, p["wk"], p["wv"], p["wo"], p["w1"]],
        axis=1).astype(jnp.bfloat16)                     # (E, 6E)
    w2 = p["w2"].astype(jnp.bfloat16)                    # (MLP, E)

    width = max(3 * E, p["b1"].shape[-1])

    def padrow(v):
        return jnp.pad(v, ((0, 0), (0, width - v.shape[-1])))

    rows = [p["su_b"], p["n1_g"], p["n1_b"],
            jnp.concatenate([p["bq"] * scale, p["bk"], p["bv"]], axis=1),
            p["bo"],
            p["cw"][0:1], p["cw"][1:2], p["cw"][2:3], p["cb"],
            p["n2_g"], p["n2_b"], p["b1"], p["b2"]]
    vec = jnp.concatenate([padrow(r) for r in rows],
                          axis=0).astype(jnp.float32)    # (13, width)
    return su_w, mat, w2, vec


def state_space_block(x, state, params, rows_target=256):
    """Fused forward: returns (x_out, new_state), both (B, S, E)."""
    B, S, E = x.shape
    su_w, mat, w2, vec = pack_params(params)

    # Batch-block size: pack >=rows_target rows per grid step when B allows
    # (v6e/v7x MXU wants ~256 sublanes; v5e saturates at 128 - pass 128).
    bb = min(B, max(1, rows_target // S))
    while B % bb:
        bb -= 1
    rows = bb * S

    x2d = x.reshape(B * S, E)
    st2d = state.reshape(B * S, E)

    data_spec = pl.BlockSpec((rows, E), lambda i: (i, 0))

    def full(a):
        return pl.BlockSpec(a.shape, lambda i, n=a.ndim: (0,) * n)

    out_shape = (jax.ShapeDtypeStruct((B * S, E), x.dtype),
                 jax.ShapeDtypeStruct((B * S, E), state.dtype))

    fn = pl.pallas_call(
        make_kernel(S, HEADS),
        out_shape=out_shape,
        grid_spec=pltpu.PrefetchScalarGridSpec(
            num_scalar_prefetch=0,
            grid=(B // bb,),
            in_specs=[data_spec, data_spec,
                      full(su_w), full(mat), full(w2), full(vec)],
            out_specs=[data_spec, data_spec],
        ),
        # x -> x_out, state -> new_state reuse the input HBM buffers.
        input_output_aliases={0: 0, 1: 1},
        compiler_params=pltpu.CompilerParams(
            dimension_semantics=("parallel",),
            # Explicit scoped-VMEM budget (well below v7x's 64 MiB physical);
            # re-derive from the live set when scaling rows/S tiles up.
            vmem_limit_bytes=48 * 1024 * 1024,
        ),
    )
    out_x, out_state = fn(x2d, st2d, su_w, mat, w2, vec)
    return out_x.reshape(B, S, E), out_state.reshape(B, S, E)


def init_params(key, emb=EMB, mlp=MLP):
    keys = jax.random.split(key, 12)

    def w(k, shape, scale=0.05):
        return (scale * jax.random.normal(k, shape)).astype(jnp.float32)

    p = {}
    # state_update: nn.Linear(E, E) weight (E, E) -> stored transposed (in, out)
    p["su_w"] = w(keys[0], (emb, emb)).T
    p["su_b"] = w(keys[1], (1, emb))
    p["n1_g"] = jnp.ones((1, emb), jnp.float32)
    p["n1_b"] = jnp.zeros((1, emb), jnp.float32)
    # MHA in_proj_weight (3E, E), in_proj_bias (3E,)
    in_proj_w = w(keys[2], (3 * emb, emb))
    in_proj_b = w(keys[3], (3 * emb,))
    p["wq"] = in_proj_w[0:emb].T
    p["wk"] = in_proj_w[emb:2 * emb].T
    p["wv"] = in_proj_w[2 * emb:].T
    p["bq"] = in_proj_b[0:emb].reshape(1, emb)
    p["bk"] = in_proj_b[emb:2 * emb].reshape(1, emb)
    p["bv"] = in_proj_b[2 * emb:].reshape(1, emb)
    # MHA out_proj: weight (E, E), bias (E,)
    p["wo"] = w(keys[4], (emb, emb)).T
    p["bo"] = w(keys[5], (1, emb))
    # depthwise Conv1d: weight (E, 1, 3) -> (3, E) taps, bias (E,)
    conv_w = w(keys[6], (emb, 1, 3))
    p["cw"] = jnp.transpose(conv_w[:, 0, :], (1, 0))
    p["cb"] = w(keys[7], (1, emb))
    p["n2_g"] = jnp.ones((1, emb), jnp.float32)
    p["n2_b"] = jnp.zeros((1, emb), jnp.float32)
    # MLP: Linear(E, mlp) weight (mlp, E); Linear(mlp, E) weight (E, mlp)
    p["w1"] = w(keys[8], (mlp, emb)).T
    p["b1"] = w(keys[9], (1, mlp))
    p["w2"] = w(keys[10], (emb, mlp)).T
    p["b2"] = w(keys[11], (1, emb))
    return p


def reference(x, state, p):
    """Pure-JAX f32 reference matching the PyTorch forward (eval mode)."""
    hi = jax.lax.Precision.HIGHEST
    B, S, E = x.shape
    dh = E // HEADS

    def ln(v, g, b):
        mu = v.mean(-1, keepdims=True)
        var = ((v - mu) ** 2).mean(-1, keepdims=True)
        return (v - mu) / jnp.sqrt(var + EPS) * g + b

    new_state = jnp.einsum("bse,ef->bsf", state, p["su_w"], precision=hi) \
        + p["su_b"] + x
    nx = ln(x, p["n1_g"], p["n1_b"])
    q = (jnp.einsum("bse,ef->bsf", nx, p["wq"], precision=hi) + p["bq"]
         ).reshape(B, S, HEADS, dh)
    k = (jnp.einsum("bse,ef->bsf", nx, p["wk"], precision=hi) + p["bk"]
         ).reshape(B, S, HEADS, dh)
    v = (jnp.einsum("bse,ef->bsf", nx, p["wv"], precision=hi) + p["bv"]
         ).reshape(B, S, HEADS, dh)
    sc = jnp.einsum("bqhd,bkhd->bhqk", q, k, precision=hi) / math.sqrt(dh)
    pw = jax.nn.softmax(sc, axis=-1)
    attn = jnp.einsum("bhqk,bkhd->bqhd", pw, v, precision=hi).reshape(B, S, E)
    attn = jnp.einsum("bse,ef->bsf", attn, p["wo"], precision=hi) + p["bo"]
    x1 = x + attn
    xp = jnp.pad(x1, ((0, 0), (1, 1), (0, 0)))
    conv = (xp[:, :-2] * p["cw"][0] + xp[:, 1:-1] * p["cw"][1]
            + xp[:, 2:] * p["cw"][2] + p["cb"])
    conv = conv * jax.nn.sigmoid(conv)
    x2 = x1 + conv + new_state
    n2 = ln(x2, p["n2_g"], p["n2_b"])
    h1 = jnp.einsum("bse,em->bsm", n2, p["w1"], precision=hi) + p["b1"]
    h1 = 0.5 * h1 * (1.0 + jax.lax.erf(h1 / math.sqrt(2.0)))
    h2 = jnp.einsum("bsm,me->bse", h1, p["w2"], precision=hi) + p["b2"]
    return x2 + h2, new_state


if __name__ == "__main__":
    key = jax.random.PRNGKey(0)
    kx, ks, kp = jax.random.split(key, 3)
    B, S = 2, 8
    x = jax.random.normal(kx, (B, S, EMB), jnp.float32)
    state = jax.random.normal(ks, (B, S, EMB), jnp.float32)
    params = init_params(kp)

    # Reference first (kernel aliases its flattened inputs to the outputs).
    ref_x, ref_state = reference(x, state, params)
    jax.block_until_ready((ref_x, ref_state))

    out_x, out_state = state_space_block(x, state, params)
    jax.block_until_ready((out_x, out_state))

    # bf16 MXU matmuls + approx reciprocal softmax + tanh-GELU vs. the f32
    # exact-erf reference: tolerances set accordingly.
    err_x = float(jnp.max(jnp.abs(out_x - ref_x)))
    err_s = float(jnp.max(jnp.abs(out_state - ref_state)))
    assert jnp.allclose(out_x, ref_x, atol=3e-2, rtol=3e-2), err_x
    assert jnp.allclose(out_state, ref_state, atol=3e-2, rtol=3e-2), err_s
    print("KERNEL_OK")
</pallas_src>

<mosaic_0001>
module attributes {stable_mosaic.version = 11 : i64} {
  func.func @ssb_kernel(%arg0: i32, %arg1: memref<16x256xf32, #tpu.memory_space<vmem>>, %arg2: memref<16x256xf32, #tpu.memory_space<vmem>>, %arg3: memref<256x256xf32, #tpu.memory_space<vmem>>, %arg4: memref<256x1536xbf16, #tpu.memory_space<vmem>>, %arg5: memref<512x256xbf16, #tpu.memory_space<vmem>>, %arg6: memref<13x768xf32, #tpu.memory_space<vmem>>, %arg7: memref<16x256xf32, #tpu.memory_space<vmem>>, %arg8: memref<16x256xf32, #tpu.memory_space<vmem>>) attributes {dimension_semantics = [#tpu.dimension_semantics<parallel>], iteration_bounds = array<i64: 1>, scalar_prefetch = 0 : i64, scratch_operands = 0 : i64, tpu.core_type = #tpu.core_type<tc>, window_params = [{transform_indices = @transform_0, window_bounds = array<i64: 16, 256>}, {transform_indices = @transform_1, window_bounds = array<i64: 16, 256>}, {pipeline_mode = #tpu.pipeline_mode<synchronous>, transform_indices = @transform_2, window_bounds = array<i64: 256, 256>}, {pipeline_mode = #tpu.pipeline_mode<synchronous>, transform_indices = @transform_3, window_bounds = array<i64: 256, 1536>}, {pipeline_mode = #tpu.pipeline_mode<synchronous>, transform_indices = @transform_4, window_bounds = array<i64: 512, 256>}, {pipeline_mode = #tpu.pipeline_mode<synchronous>, transform_indices = @transform_5, window_bounds = array<i64: 13, 768>}, {transform_indices = @transform_6, window_bounds = array<i64: 16, 256>}, {transform_indices = @transform_7, window_bounds = array<i64: 16, 256>}]} {
    %c0 = arith.constant 0 : index
    %c0_0 = arith.constant 0 : index
    %0 = vector.load %arg1[%c0, %c0_0] : memref<16x256xf32, #tpu.memory_space<vmem>>, vector<16x256xf32>
    %c0_1 = arith.constant 0 : index
    %c0_2 = arith.constant 0 : index
    %1 = vector.load %arg2[%c0_1, %c0_2] : memref<16x256xf32, #tpu.memory_space<vmem>>, vector<16x256xf32>
    %c0_3 = arith.constant 0 : index
    %c0_4 = arith.constant 0 : index
    %2 = vector.load %arg3[%c0_3, %c0_4] : memref<256x256xf32, #tpu.memory_space<vmem>>, vector<256x256xf32>
    %cst = arith.constant dense<0.000000e+00> : vector<16x256xf32>
    %3 = tpu.matmul %1, %2, %cst {dimension_numbers = #tpu.dot_dimension_numbers<[1], [0], [0], [1], [0, 0, 1, 1], [], []>, precision = #tpu.contract_precision<fp32>} : vector<16x256xf32>, vector<256x256xf32>, vector<16x256xf32> -> vector<16x256xf32>
    %c0_5 = arith.constant 0 : index
    %c0_6 = arith.constant 0 : index
    %4 = vector.load %arg6[%c0_5, %c0_6] : memref<13x768xf32, #tpu.memory_space<vmem>>, vector<1x256xf32>
    %5 = vector.broadcast %4 : vector<1x256xf32> to vector<16x256xf32>
    %6 = arith.addf %3, %5 : vector<16x256xf32>
    %7 = arith.addf %6, %0 : vector<16x256xf32>
    %c1 = arith.constant 1 : index
    %c0_7 = arith.constant 0 : index
    %8 = vector.load %arg6[%c1, %c0_7] : memref<13x768xf32, #tpu.memory_space<vmem>>, vector<1x256xf32>
    %c2 = arith.constant 2 : index
    %c0_8 = arith.constant 0 : index
    %9 = vector.load %arg6[%c2, %c0_8] : memref<13x768xf32, #tpu.memory_space<vmem>>, vector<1x256xf32>
    %cst_9 = arith.constant dense<0.000000e+00> : vector<16xf32>
    %10 = vector.multi_reduction <add>, %0, %cst_9 [1] : vector<16x256xf32> to vector<16xf32>
    %11 = vector.shape_cast %10 : vector<16xf32> to vector<16x1xf32>
    %cst_10 = arith.constant 2.560000e+02 : f32
    %12 = vector.broadcast %cst_10 : f32 to vector<16x1xf32>
    %13 = arith.divf %11, %12 : vector<16x1xf32>
    %14 = vector.broadcast %13 : vector<16x1xf32> to vector<16x256xf32>
    %15 = arith.subf %0, %14 : vector<16x256xf32>
    %16 = arith.mulf %15, %15 : vector<16x256xf32>
    %cst_11 = arith.constant dense<0.000000e+00> : vector<16xf32>
    %17 = vector.multi_reduction <add>, %16, %cst_11 [1] : vector<16x256xf32> to vector<16xf32>
    %18 = vector.shape_cast %17 : vector<16xf32> to vector<16x1xf32>
    %cst_12 = arith.constant 2.560000e+02 : f32
    %19 = vector.broadcast %cst_12 : f32 to vector<16x1xf32>
    %20 = arith.divf %18, %19 : vector<16x1xf32>
    %21 = vector.broadcast %13 : vector<16x1xf32> to vector<16x256xf32>
    %22 = arith.subf %0, %21 : vector<16x256xf32>
    %cst_13 = arith.constant 9.99999974E-6 : f32
    %23 = vector.broadcast %cst_13 : f32 to vector<16x1xf32>
    %24 = arith.addf %20, %23 : vector<16x1xf32>
    %25 = math.rsqrt %24 : vector<16x1xf32>
    %26 = vector.broadcast %25 : vector<16x1xf32> to vector<16x256xf32>
    %27 = arith.mulf %22, %26 : vector<16x256xf32>
    %28 = vector.broadcast %8 : vector<1x256xf32> to vector<16x256xf32>
    %29 = arith.mulf %27, %28 : vector<16x256xf32>
    %30 = vector.broadcast %9 : vector<1x256xf32> to vector<16x256xf32>
    %31 = arith.addf %29, %30 : vector<16x256xf32>
    %32 = arith.truncf %31 : vector<16x256xf32> to vector<16x256xbf16>
    %c0_14 = arith.constant 0 : index
    %c0_15 = arith.constant 0 : index
    %33 = vector.load %arg4[%c0_14, %c0_15] : memref<256x1536xbf16, #tpu.memory_space<vmem>>, vector<256x768xbf16>
    %cst_16 = arith.constant dense<0.000000e+00> : vector<16x768xf32>
    %34 = tpu.matmul %32, %33, %cst_16 {dimension_numbers = #tpu.dot_dimension_numbers<[1], [0], [0], [1], [0, 0, 1, 1], [], []>} : vector<16x256xbf16>, vector<256x768xbf16>, vector<16x768xf32> -> vector<16x768xf32>
    %c3 = arith.constant 3 : index
    %c0_17 = arith.constant 0 : index
    %35 = vector.load %arg6[%c3, %c0_17] : memref<13x768xf32, #tpu.memory_space<vmem>>, vector<1x768xf32>
    %36 = vector.broadcast %35 : vector<1x768xf32> to vector<16x768xf32>
    %37 = arith.addf %34, %36 : vector<16x768xf32>
    %38 = arith.truncf %37 : vector<16x768xf32> to vector<16x768xbf16>
    %39 = vector.extract_strided_slice %38 {offsets = [0, 0], sizes = [8, 64], strides = [1, 1]} : vector<16x768xbf16> to vector<8x64xbf16>
    %40 = vector.extract_strided_slice %38 {offsets = [0, 256], sizes = [8, 64], strides = [1, 1]} : vector<16x768xbf16> to vector<8x64xbf16>
    %41 = vector.extract_strided_slice %38 {offsets = [0, 512], sizes = [8, 64], strides = [1, 1]} : vector<16x768xbf16> to vector<8x64xbf16>
    %cst_18 = arith.constant dense<0.000000e+00> : vector<8x8xf32>
    %42 = tpu.matmul %39, %40, %cst_18 {dimension_numbers = #tpu.dot_dimension_numbers<[1], [1], [0], [0], [0, 0, 1, 0], [], []>} : vector<8x64xbf16>, vector<8x64xbf16>, vector<8x8xf32> -> vector<8x8xf32>
    %cst_19 = arith.constant dense<0xFF800000> : vector<8xf32>
    %43 = vector.multi_reduction <maximumf>, %42, %cst_19 [1] : vector<8x8xf32> to vector<8xf32>
    %44 = vector.shape_cast %43 : vector<8xf32> to vector<8x1xf32>
    %45 = vector.broadcast %44 : vector<8x1xf32> to vector<8x8xf32>
    %46 = arith.subf %42, %45 : vector<8x8xf32>
    %47 = math.exp %46 : vector<8x8xf32>
    %cst_20 = arith.constant dense<0.000000e+00> : vector<8xf32>
    %48 = vector.multi_reduction <add>, %47, %cst_20 [1] : vector<8x8xf32> to vector<8xf32>
    %49 = vector.shape_cast %48 : vector<8xf32> to vector<8x1xf32>
    %50 = arith.truncf %47 : vector<8x8xf32> to vector<8x8xbf16>
    %cst_21 = arith.constant dense<0.000000e+00> : vector<8x64xf32>
    %51 = tpu.matmul %50, %41, %cst_21 {dimension_numbers = #tpu.dot_dimension_numbers<[1], [0], [0], [1], [0, 0, 1, 1], [], []>} : vector<8x8xbf16>, vector<8x64xbf16>, vector<8x64xf32> -> vector<8x64xf32>
    %52 = tpu.reciprocal %49 {approx = true} : vector<8x1xf32> -> vector<8x1xf32>
    %53 = vector.broadcast %52 : vector<8x1xf32> to vector<8x64xf32>
    %54 = arith.mulf %51, %53 : vector<8x64xf32>
    %55 = vector.extract_strided_slice %38 {offsets = [0, 64], sizes = [8, 64], strides = [1, 1]} : vector<16x768xbf16> to vector<8x64xbf16>
    %56 = vector.extract_strided_slice %38 {offsets = [0, 320], sizes = [8, 64], strides = [1, 1]} : vector<16x768xbf16> to vector<8x64xbf16>
    %57 = vector.extract_strided_slice %38 {offsets = [0, 576], sizes = [8, 64], strides = [1, 1]} : vector<16x768xbf16> to vector<8x64xbf16>
    %cst_22 = arith.constant dense<0.000000e+00> : vector<8x8xf32>
    %58 = tpu.matmul %55, %56, %cst_22 {dimension_numbers = #tpu.dot_dimension_numbers<[1], [1], [0], [0], [0, 0, 1, 0], [], []>} : vector<8x64xbf16>, vector<8x64xbf16>, vector<8x8xf32> -> vector<8x8xf32>
    %cst_23 = arith.constant dense<0xFF800000> : vector<8xf32>
    %59 = vector.multi_reduction <maximumf>, %58, %cst_23 [1] : vector<8x8xf32> to vector<8xf32>
    %60 = vector.shape_cast %59 : vector<8xf32> to vector<8x1xf32>
    %61 = vector.broadcast %60 : vector<8x1xf32> to vector<8x8xf32>
    %62 = arith.subf %58, %61 : vector<8x8xf32>
    %63 = math.exp %62 : vector<8x8xf32>
    %cst_24 = arith.constant dense<0.000000e+00> : vector<8xf32>
    %64 = vector.multi_reduction <add>, %63, %cst_24 [1] : vector<8x8xf32> to vector<8xf32>
    %65 = vector.shape_cast %64 : vector<8xf32> to vector<8x1xf32>
    %66 = arith.truncf %63 : vector<8x8xf32> to vector<8x8xbf16>
    %cst_25 = arith.constant dense<0.000000e+00> : vector<8x64xf32>
    %67 = tpu.matmul %66, %57, %cst_25 {dimension_numbers = #tpu.dot_dimension_numbers<[1], [0], [0], [1], [0, 0, 1, 1], [], []>} : vector<8x8xbf16>, vector<8x64xbf16>, vector<8x64xf32> -> vector<8x64xf32>
    %68 = tpu.reciprocal %65 {approx = true} : vector<8x1xf32> -> vector<8x1xf32>
    %69 = vector.broadcast %68 : vector<8x1xf32> to vector<8x64xf32>
    %70 = arith.mulf %67, %69 : vector<8x64xf32>
    %71 = vector.extract_strided_slice %38 {offsets = [0, 128], sizes = [8, 64], strides = [1, 1]} : vector<16x768xbf16> to vector<8x64xbf16>
    %72 = vector.extract_strided_slice %38 {offsets = [0, 384], sizes = [8, 64], strides = [1, 1]} : vector<16x768xbf16> to vector<8x64xbf16>
    %73 = vector.extract_strided_slice %38 {offsets = [0, 640], sizes = [8, 64], strides = [1, 1]} : vector<16x768xbf16> to vector<8x64xbf16>
    %cst_26 = arith.constant dense<0.000000e+00> : vector<8x8xf32>
    %74 = tpu.matmul %71, %72, %cst_26 {dimension_numbers = #tpu.dot_dimension_numbers<[1], [1], [0], [0], [0, 0, 1, 0], [], []>} : vector<8x64xbf16>, vector<8x64xbf16>, vector<8x8xf32> -> vector<8x8xf32>
    %cst_27 = arith.constant dense<0xFF800000> : vector<8xf32>
    %75 = vector.multi_reduction <maximumf>, %74, %cst_27 [1] : vector<8x8xf32> to vector<8xf32>
    %76 = vector.shape_cast %75 : vector<8xf32> to vector<8x1xf32>
    %77 = vector.broadcast %76 : vector<8x1xf32> to vector<8x8xf32>
    %78 = arith.subf %74, %77 : vector<8x8xf32>
    %79 = math.exp %78 : vector<8x8xf32>
    %cst_28 = arith.constant dense<0.000000e+00> : vector<8xf32>
    %80 = vector.multi_reduction <add>, %79, %cst_28 [1] : vector<8x8xf32> to vector<8xf32>
    %81 = vector.shape_cast %80 : vector<8xf32> to vector<8x1xf32>
    %82 = arith.truncf %79 : vector<8x8xf32> to vector<8x8xbf16>
    %cst_29 = arith.constant dense<0.000000e+00> : vector<8x64xf32>
    %83 = tpu.matmul %82, %73, %cst_29 {dimension_numbers = #tpu.dot_dimension_numbers<[1], [0], [0], [1], [0, 0, 1, 1], [], []>} : vector<8x8xbf16>, vector<8x64xbf16>, vector<8x64xf32> -> vector<8x64xf32>
    %84 = tpu.reciprocal %81 {approx = true} : vector<8x1xf32> -> vector<8x1xf32>
    %85 = vector.broadcast %84 : vector<8x1xf32> to vector<8x64xf32>
    %86 = arith.mulf %83, %85 : vector<8x64xf32>
    %87 = vector.extract_strided_slice %38 {offsets = [0, 192], sizes = [8, 64], strides = [1, 1]} : vector<16x768xbf16> to vector<8x64xbf16>
    %88 = vector.extract_strided_slice %38 {offsets = [0, 448], sizes = [8, 64], strides = [1, 1]} : vector<16x768xbf16> to vector<8x64xbf16>
    %89 = vector.extract_strided_slice %38 {offsets = [0, 704], sizes = [8, 64], strides = [1, 1]} : vector<16x768xbf16> to vector<8x64xbf16>
    %cst_30 = arith.constant dense<0.000000e+00> : vector<8x8xf32>
    %90 = tpu.matmul %87, %88, %cst_30 {dimension_numbers = #tpu.dot_dimension_numbers<[1], [1], [0], [0], [0, 0, 1, 0], [], []>} : vector<8x64xbf16>, vector<8x64xbf16>, vector<8x8xf32> -> vector<8x8xf32>
    %cst_31 = arith.constant dense<0xFF800000> : vector<8xf32>
    %91 = vector.multi_reduction <maximumf>, %90, %cst_31 [1] : vector<8x8xf32> to vector<8xf32>
    %92 = vector.shape_cast %91 : vector<8xf32> to vector<8x1xf32>
    %93 = vector.broadcast %92 : vector<8x1xf32> to vector<8x8xf32>
    %94 = arith.subf %90, %93 : vector<8x8xf32>
    %95 = math.exp %94 : vector<8x8xf32>
    %cst_32 = arith.constant dense<0.000000e+00> : vector<8xf32>
    %96 = vector.multi_reduction <add>, %95, %cst_32 [1] : vector<8x8xf32> to vector<8xf32>
    %97 = vector.shape_cast %96 : vector<8xf32> to vector<8x1xf32>
    %98 = arith.truncf %95 : vector<8x8xf32> to vector<8x8xbf16>
    %cst_33 = arith.constant dense<0.000000e+00> : vector<8x64xf32>
    %99 = tpu.matmul %98, %89, %cst_33 {dimension_numbers = #tpu.dot_dimension_numbers<[1], [0], [0], [1], [0, 0, 1, 1], [], []>} : vector<8x8xbf16>, vector<8x64xbf16>, vector<8x64xf32> -> vector<8x64xf32>
    %100 = tpu.reciprocal %97 {approx = true} : vector<8x1xf32> -> vector<8x1xf32>
    %101 = vector.broadcast %100 : vector<8x1xf32> to vector<8x64xf32>
    %102 = arith.mulf %99, %101 : vector<8x64xf32>
    %103 = tpu.concatenate %54, %70, %86, %102 in 1 : vector<8x64xf32>, vector<8x64xf32>, vector<8x64xf32>, vector<8x64xf32> -> vector<8x256xf32>
    %104 = vector.extract_strided_slice %38 {offsets = [8, 0], sizes = [8, 64], strides = [1, 1]} : vector<16x768xbf16> to vector<8x64xbf16>
    %105 = vector.extract_strided_slice %38 {offsets = [8, 256], sizes = [8, 64], strides = [1, 1]} : vector<16x768xbf16> to vector<8x64xbf16>
    %106 = vector.extract_strided_slice %38 {offsets = [8, 512], sizes = [8, 64], strides = [1, 1]} : vector<16x768xbf16> to vector<8x64xbf16>
    %cst_34 = arith.constant dense<0.000000e+00> : vector<8x8xf32>
    %107 = tpu.matmul %104, %105, %cst_34 {dimension_numbers = #tpu.dot_dimension_numbers<[1], [1], [0], [0], [0, 0, 1, 0], [], []>} : vector<8x64xbf16>, vector<8x64xbf16>, vector<8x8xf32> -> vector<8x8xf32>
    %cst_35 = arith.constant dense<0xFF800000> : vector<8xf32>
    %108 = vector.multi_reduction <maximumf>, %107, %cst_35 [1] : vector<8x8xf32> to vector<8xf32>
    %109 = vector.shape_cast %108 : vector<8xf32> to vector<8x1xf32>
    %110 = vector.broadcast %109 : vector<8x1xf32> to vector<8x8xf32>
    %111 = arith.subf %107, %110 : vector<8x8xf32>
    %112 = math.exp %111 : vector<8x8xf32>
    %cst_36 = arith.constant dense<0.000000e+00> : vector<8xf32>
    %113 = vector.multi_reduction <add>, %112, %cst_36 [1] : vector<8x8xf32> to vector<8xf32>
    %114 = vector.shape_cast %113 : vector<8xf32> to vector<8x1xf32>
    %115 = arith.truncf %112 : vector<8x8xf32> to vector<8x8xbf16>
    %cst_37 = arith.constant dense<0.000000e+00> : vector<8x64xf32>
    %116 = tpu.matmul %115, %106, %cst_37 {dimension_numbers = #tpu.dot_dimension_numbers<[1], [0], [0], [1], [0, 0, 1, 1], [], []>} : vector<8x8xbf16>, vector<8x64xbf16>, vector<8x64xf32> -> vector<8x64xf32>
    %117 = tpu.reciprocal %114 {approx = true} : vector<8x1xf32> -> vector<8x1xf32>
    %118 = vector.broadcast %117 : vector<8x1xf32> to vector<8x64xf32>
    %119 = arith.mulf %116, %118 : vector<8x64xf32>
    %120 = vector.extract_strided_slice %38 {offsets = [8, 64], sizes = [8, 64], strides = [1, 1]} : vector<16x768xbf16> to vector<8x64xbf16>
    %121 = vector.extract_strided_slice %38 {offsets = [8, 320], sizes = [8, 64], strides = [1, 1]} : vector<16x768xbf16> to vector<8x64xbf16>
    %122 = vector.extract_strided_slice %38 {offsets = [8, 576], sizes = [8, 64], strides = [1, 1]} : vector<16x768xbf16> to vector<8x64xbf16>
    %cst_38 = arith.constant dense<0.000000e+00> : vector<8x8xf32>
    %123 = tpu.matmul %120, %121, %cst_38 {dimension_numbers = #tpu.dot_dimension_numbers<[1], [1], [0], [0], [0, 0, 1, 0], [], []>} : vector<8x64xbf16>, vector<8x64xbf16>, vector<8x8xf32> -> vector<8x8xf32>
    %cst_39 = arith.constant dense<0xFF800000> : vector<8xf32>
    %124 = vector.multi_reduction <maximumf>, %123, %cst_39 [1] : vector<8x8xf32> to vector<8xf32>
    %125 = vector.shape_cast %124 : vector<8xf32> to vector<8x1xf32>
    %126 = vector.broadcast %125 : vector<8x1xf32> to vector<8x8xf32>
    %127 = arith.subf %123, %126 : vector<8x8xf32>
    %128 = math.exp %127 : vector<8x8xf32>
    %cst_40 = arith.constant dense<0.000000e+00> : vector<8xf32>
    %129 = vector.multi_reduction <add>, %128, %cst_40 [1] : vector<8x8xf32> to vector<8xf32>
    %130 = vector.shape_cast %129 : vector<8xf32> to vector<8x1xf32>
    %131 = arith.truncf %128 : vector<8x8xf32> to vector<8x8xbf16>
    %cst_41 = arith.constant dense<0.000000e+00> : vector<8x64xf32>
    %132 = tpu.matmul %131, %122, %cst_41 {dimension_numbers = #tpu.dot_dimension_numbers<[1], [0], [0], [1], [0, 0, 1, 1], [], []>} : vector<8x8xbf16>, vector<8x64xbf16>, vector<8x64xf32> -> vector<8x64xf32>
    %133 = tpu.reciprocal %130 {approx = true} : vector<8x1xf32> -> vector<8x1xf32>
    %134 = vector.broadcast %133 : vector<8x1xf32> to vector<8x64xf32>
    %135 = arith.mulf %132, %134 : vector<8x64xf32>
    %136 = vector.extract_strided_slice %38 {offsets = [8, 128], sizes = [8, 64], strides = [1, 1]} : vector<16x768xbf16> to vector<8x64xbf16>
    %137 = vector.extract_strided_slice %38 {offsets = [8, 384], sizes = [8, 64], strides = [1, 1]} : vector<16x768xbf16> to vector<8x64xbf16>
    %138 = vector.extract_strided_slice %38 {offsets = [8, 640], sizes = [8, 64], strides = [1, 1]} : vector<16x768xbf16> to vector<8x64xbf16>
    %cst_42 = arith.constant dense<0.000000e+00> : vector<8x8xf32>
    %139 = tpu.matmul %136, %137, %cst_42 {dimension_numbers = #tpu.dot_dimension_numbers<[1], [1], [0], [0], [0, 0, 1, 0], [], []>} : vector<8x64xbf16>, vector<8x64xbf16>, vector<8x8xf32> -> vector<8x8xf32>
    %cst_43 = arith.constant dense<0xFF800000> : vector<8xf32>
    %140 = vector.multi_reduction <maximumf>, %139, %cst_43 [1] : vector<8x8xf32> to vector<8xf32>
    %141 = vector.shape_cast %140 : vector<8xf32> to vector<8x1xf32>
    %142 = vector.broadcast %141 : vector<8x1xf32> to vector<8x8xf32>
    %143 = arith.subf %139, %142 : vector<8x8xf32>
    %144 = math.exp %143 : vector<8x8xf32>
    %cst_44 = arith.constant dense<0.000000e+00> : vector<8xf32>
    %145 = vector.multi_reduction <add>, %144, %cst_44 [1] : vector<8x8xf32> to vector<8xf32>
    %146 = vector.shape_cast %145 : vector<8xf32> to vector<8x1xf32>
    %147 = arith.truncf %144 : vector<8x8xf32> to vector<8x8xbf16>
    %cst_45 = arith.constant dense<0.000000e+00> : vector<8x64xf32>
    %148 = tpu.matmul %147, %138, %cst_45 {dimension_numbers = #tpu.dot_dimension_numbers<[1], [0], [0], [1], [0, 0, 1, 1], [], []>} : vector<8x8xbf16>, vector<8x64xbf16>, vector<8x64xf32> -> vector<8x64xf32>
    %149 = tpu.reciprocal %146 {approx = true} : vector<8x1xf32> -> vector<8x1xf32>
    %150 = vector.broadcast %149 : vector<8x1xf32> to vector<8x64xf32>
    %151 = arith.mulf %148, %150 : vector<8x64xf32>
    %152 = vector.extract_strided_slice %38 {offsets = [8, 192], sizes = [8, 64], strides = [1, 1]} : vector<16x768xbf16> to vector<8x64xbf16>
    %153 = vector.extract_strided_slice %38 {offsets = [8, 448], sizes = [8, 64], strides = [1, 1]} : vector<16x768xbf16> to vector<8x64xbf16>
    %154 = vector.extract_strided_slice %38 {offsets = [8, 704], sizes = [8, 64], strides = [1, 1]} : vector<16x768xbf16> to vector<8x64xbf16>
    %cst_46 = arith.constant dense<0.000000e+00> : vector<8x8xf32>
    %155 = tpu.matmul %152, %153, %cst_46 {dimension_numbers = #tpu.dot_dimension_numbers<[1], [1], [0], [0], [0, 0, 1, 0], [], []>} : vector<8x64xbf16>, vector<8x64xbf16>, vector<8x8xf32> -> vector<8x8xf32>
    %cst_47 = arith.constant dense<0xFF800000> : vector<8xf32>
    %156 = vector.multi_reduction <maximumf>, %155, %cst_47 [1] : vector<8x8xf32> to vector<8xf32>
    %157 = vector.shape_cast %156 : vector<8xf32> to vector<8x1xf32>
    %158 = vector.broadcast %157 : vector<8x1xf32> to vector<8x8xf32>
    %159 = arith.subf %155, %158 : vector<8x8xf32>
    %160 = math.exp %159 : vector<8x8xf32>
    %cst_48 = arith.constant dense<0.000000e+00> : vector<8xf32>
    %161 = vector.multi_reduction <add>, %160, %cst_48 [1] : vector<8x8xf32> to vector<8xf32>
    %162 = vector.shape_cast %161 : vector<8xf32> to vector<8x1xf32>
    %163 = arith.truncf %160 : vector<8x8xf32> to vector<8x8xbf16>
    %cst_49 = arith.constant dense<0.000000e+00> : vector<8x64xf32>
    %164 = tpu.matmul %163, %154, %cst_49 {dimension_numbers = #tpu.dot_dimension_numbers<[1], [0], [0], [1], [0, 0, 1, 1], [], []>} : vector<8x8xbf16>, vector<8x64xbf16>, vector<8x64xf32> -> vector<8x64xf32>
    %165 = tpu.reciprocal %162 {approx = true} : vector<8x1xf32> -> vector<8x1xf32>
    %166 = vector.broadcast %165 : vector<8x1xf32> to vector<8x64xf32>
    %167 = arith.mulf %164, %166 : vector<8x64xf32>
    %168 = tpu.concatenate %119, %135, %151, %167 in 1 : vector<8x64xf32>, vector<8x64xf32>, vector<8x64xf32>, vector<8x64xf32> -> vector<8x256xf32>
    %169 = tpu.concatenate %103, %168 in 0 : vector<8x256xf32>, vector<8x256xf32> -> vector<16x256xf32>
    %170 = arith.truncf %169 : vector<16x256xf32> to vector<16x256xbf16>
    %c0_50 = arith.constant 0 : index
    %c768 = arith.constant 768 : index
    %171 = vector.load %arg4[%c0_50, %c768] : memref<256x1536xbf16, #tpu.memory_space<vmem>>, vector<256x256xbf16>
    %cst_51 = arith.constant dense<0.000000e+00> : vector<16x256xf32>
    %172 = tpu.matmul %170, %171, %cst_51 {dimension_numbers = #tpu.dot_dimension_numbers<[1], [0], [0], [1], [0, 0, 1, 1], [], []>} : vector<16x256xbf16>, vector<256x256xbf16>, vector<16x256xf32> -> vector<16x256xf32>
    %173 = arith.addf %0, %172 : vector<16x256xf32>
    %c4 = arith.constant 4 : index
    %c0_52 = arith.constant 0 : index
    %174 = vector.load %arg6[%c4, %c0_52] : memref<13x768xf32, #tpu.memory_space<vmem>>, vector<1x256xf32>
    %175 = vector.broadcast %174 : vector<1x256xf32> to vector<16x256xf32>
    %176 = arith.addf %173, %175 : vector<16x256xf32>
    %177 = tpu.iota {dimensions = array<i32: 0>} : vector<16x1xi32>
    %c8_i32 = arith.constant 8 : i32
    %c0_i32 = arith.constant 0 : i32
    %178 = arith.cmpi eq, %c8_i32, %c0_i32 : i32
    %c1_i32 = arith.constant 1 : i32
    %179 = arith.select %178, %c1_i32, %c8_i32 : i32
    %180 = vector.broadcast %179 : i32 to vector<16x1xi32>
    %181 = arith.remsi %177, %180 : vector<16x1xi32>
    %c0_i32_53 = arith.constant 0 : i32
    %182 = vector.broadcast %c0_i32_53 : i32 to vector<16x1xi32>
    %183 = arith.cmpi ne, %181, %182 : vector<16x1xi32>
    %c0_i32_54 = arith.constant 0 : i32
    %184 = vector.broadcast %c0_i32_54 : i32 to vector<16x1xi32>
    %185 = arith.cmpi slt, %181, %184 : vector<16x1xi32>
    %c0_i32_55 = arith.constant 0 : i32
    %186 = arith.cmpi slt, %179, %c0_i32_55 : i32
    %187 = vector.broadcast %186 : i1 to vector<16x1xi1>
    %188 = vector.broadcast %187 : vector<16x1xi1> to vector<16x1xi1>
    %189 = arith.xori %185, %188 : vector<16x1xi1>
    %190 = arith.andi %189, %183 : vector<16x1xi1>
    %191 = vector.broadcast %179 : i32 to vector<16x1xi32>
    %192 = arith.addi %181, %191 : vector<16x1xi32>
    %193 = arith.select %190, %192, %181 : vector<16x1xi1>, vector<16x1xi32>
    %c0_i32_56 = arith.constant 0 : i32
    %194 = vector.broadcast %c0_i32_56 : i32 to vector<16x1xi32>
    %195 = arith.cmpi eq, %193, %194 : vector<16x1xi32>
    %c1_i32_57 = arith.constant 1 : i32
    %196 = tpu.dynamic_rotate %176 by %c1_i32_57 dim 0 : vector<16x256xf32>, i32 -> vector<16x256xf32>
    %cst_58 = arith.constant 0.000000e+00 : f32
    %197 = vector.shape_cast %195 : vector<16x1xi1> to vector<16x1xi1>
    %198 = vector.broadcast %197 : vector<16x1xi1> to vector<16x256xi1>
    %199 = vector.broadcast %cst_58 : f32 to vector<16x256xf32>
    %200 = arith.select %198, %199, %196 : vector<16x256xi1>, vector<16x256xf32>
    %c7_i32 = arith.constant 7 : i32
    %201 = vector.broadcast %c7_i32 : i32 to vector<16x1xi32>
    %202 = arith.cmpi eq, %193, %201 : vector<16x1xi32>
    %c15_i32 = arith.constant 15 : i32
    %203 = tpu.dynamic_rotate %176 by %c15_i32 dim 0 : vector<16x256xf32>, i32 -> vector<16x256xf32>
    %cst_59 = arith.constant 0.000000e+00 : f32
    %204 = vector.shape_cast %202 : vector<16x1xi1> to vector<16x1xi1>
    %205 = vector.broadcast %204 : vector<16x1xi1> to vector<16x256xi1>
    %206 = vector.broadcast %cst_59 : f32 to vector<16x256xf32>
    %207 = arith.select %205, %206, %203 : vector<16x256xi1>, vector<16x256xf32>
    %c5 = arith.constant 5 : index
    %c0_60 = arith.constant 0 : index
    %208 = vector.load %arg6[%c5, %c0_60] : memref<13x768xf32, #tpu.memory_space<vmem>>, vector<1x256xf32>
    %209 = vector.broadcast %208 : vector<1x256xf32> to vector<16x256xf32>
    %210 = arith.mulf %200, %209 : vector<16x256xf32>
    %c6 = arith.constant 6 : index
    %c0_61 = arith.constant 0 : index
    %211 = vector.load %arg6[%c6, %c0_61] : memref<13x768xf32, #tpu.memory_space<vmem>>, vector<1x256xf32>
    %212 = vector.broadcast %211 : vector<1x256xf32> to vector<16x256xf32>
    %213 = arith.mulf %176, %212 : vector<16x256xf32>
    %214 = arith.addf %210, %213 : vector<16x256xf32>
    %c7 = arith.constant 7 : index
    %c0_62 = arith.constant 0 : index
    %215 = vector.load %arg6[%c7, %c0_62] : memref<13x768xf32, #tpu.memory_space<vmem>>, vector<1x256xf32>
    %216 = vector.broadcast %215 : vector<1x256xf32> to vector<16x256xf32>
    %217 = arith.mulf %207, %216 : vector<16x256xf32>
    %218 = arith.addf %214, %217 : vector<16x256xf32>
    %c8 = arith.constant 8 : index
    %c0_63 = arith.constant 0 : index
    %219 = vector.load %arg6[%c8, %c0_63] : memref<13x768xf32, #tpu.memory_space<vmem>>, vector<1x256xf32>
    %220 = vector.broadcast %219 : vector<1x256xf32> to vector<16x256xf32>
    %221 = arith.addf %218, %220 : vector<16x256xf32>
    %222 = arith.negf %221 : vector<16x256xf32>
    %223 = math.exp %222 : vector<16x256xf32>
    %cst_64 = arith.constant 1.000000e+00 : f32
    %224 = vector.broadcast %cst_64 : f32 to vector<16x256xf32>
    %225 = arith.addf %224, %223 : vector<16x256xf32>
    %226 = arith.divf %224, %225 : vector<16x256xf32>
    %227 = arith.mulf %221, %226 : vector<16x256xf32>
    %228 = arith.addf %176, %227 : vector<16x256xf32>
    %229 = arith.addf %228, %7 : vector<16x256xf32>
    %c9 = arith.constant 9 : index
    %c0_65 = arith.constant 0 : index
    %230 = vector.load %arg6[%c9, %c0_65] : memref<13x768xf32, #tpu.memory_space<vmem>>, vector<1x256xf32>
    %c10 = arith.constant 10 : index
    %c0_66 = arith.constant 0 : index
    %231 = vector.load %arg6[%c10, %c0_66] : memref<13x768xf32, #tpu.memory_space<vmem>>, vector<1x256xf32>
    %cst_67 = arith.constant dense<0.000000e+00> : vector<16xf32>
    %232 = vector.multi_reduction <add>, %229, %cst_67 [1] : vector<16x256xf32> to vector<16xf32>
    %233 = vector.shape_cast %232 : vector<16xf32> to vector<16x1xf32>
    %cst_68 = arith.constant 2.560000e+02 : f32
    %234 = vector.broadcast %cst_68 : f32 to vector<16x1xf32>
    %235 = arith.divf %233, %234 : vector<16x1xf32>
    %236 = vector.broadcast %235 : vector<16x1xf32> to vector<16x256xf32>
    %237 = arith.subf %229, %236 : vector<16x256xf32>
    %238 = arith.mulf %237, %237 : vector<16x256xf32>
    %cst_69 = arith.constant dense<0.000000e+00> : vector<16xf32>
    %239 = vector.multi_reduction <add>, %238, %cst_69 [1] : vector<16x256xf32> to vector<16xf32>
    %240 = vector.shape_cast %239 : vector<16xf32> to vector<16x1xf32>
    %cst_70 = arith.constant 2.560000e+02 : f32
    %241 = vector.broadcast %cst_70 : f32 to vector<16x1xf32>
    %242 = arith.divf %240, %241 : vector<16x1xf32>
    %243 = vector.broadcast %235 : vector<16x1xf32> to vector<16x256xf32>
    %244 = arith.subf %229, %243 : vector<16x256xf32>
    %cst_71 = arith.constant 9.99999974E-6 : f32
    %245 = vector.broadcast %cst_71 : f32 to vector<16x1xf32>
    %246 = arith.addf %242, %245 : vector<16x1xf32>
    %247 = math.rsqrt %246 : vector<16x1xf32>
    %248 = vector.broadcast %247 : vector<16x1xf32> to vector<16x256xf32>
    %249 = arith.mulf %244, %248 : vector<16x256xf32>
    %250 = vector.broadcast %230 : vector<1x256xf32> to vector<16x256xf32>
    %251 = arith.mulf %249, %250 : vector<16x256xf32>
    %252 = vector.broadcast %231 : vector<1x256xf32> to vector<16x256xf32>
    %253 = arith.addf %251, %252 : vector<16x256xf32>
    %254 = arith.truncf %253 : vector<16x256xf32> to vector<16x256xbf16>
    %c0_72 = arith.constant 0 : index
    %c1024 = arith.constant 1024 : index
    %255 = vector.load %arg4[%c0_72, %c1024] : memref<256x1536xbf16, #tpu.memory_space<vmem>>, vector<256x512xbf16>
    %cst_73 = arith.constant dense<0.000000e+00> : vector<16x512xf32>
    %256 = tpu.matmul %254, %255, %cst_73 {dimension_numbers = #tpu.dot_dimension_numbers<[1], [0], [0], [1], [0, 0, 1, 1], [], []>} : vector<16x256xbf16>, vector<256x512xbf16>, vector<16x512xf32> -> vector<16x512xf32>
    %c11 = arith.constant 11 : index
    %c0_74 = arith.constant 0 : index
    %257 = vector.load %arg6[%c11, %c0_74] : memref<13x768xf32, #tpu.memory_space<vmem>>, vector<1x512xf32>
    %258 = vector.broadcast %257 : vector<1x512xf32> to vector<16x512xf32>
    %259 = arith.addf %256, %258 : vector<16x512xf32>
    %cst_75 = arith.constant 5.000000e-01 : f32
    %260 = vector.broadcast %cst_75 : f32 to vector<16x512xf32>
    %261 = arith.mulf %260, %259 : vector<16x512xf32>
    %cst_76 = arith.constant 4.471500e-02 : f32
    %262 = vector.broadcast %cst_76 : f32 to vector<16x512xf32>
    %263 = arith.mulf %262, %259 : vector<16x512xf32>
    %264 = arith.mulf %263, %259 : vector<16x512xf32>
    %265 = arith.mulf %264, %259 : vector<16x512xf32>
    %266 = arith.addf %259, %265 : vector<16x512xf32>
    %cst_77 = arith.constant 0.797884583 : f32
    %267 = vector.broadcast %cst_77 : f32 to vector<16x512xf32>
    %268 = arith.mulf %267, %266 : vector<16x512xf32>
    %269 = math.tanh %268 : vector<16x512xf32>
    %cst_78 = arith.constant 1.000000e+00 : f32
    %270 = vector.broadcast %cst_78 : f32 to vector<16x512xf32>
    %271 = arith.addf %270, %269 : vector<16x512xf32>
    %272 = arith.mulf %261, %271 : vector<16x512xf32>
    %273 = arith.truncf %272 : vector<16x512xf32> to vector<16x512xbf16>
    %c0_79 = arith.constant 0 : index
    %c0_80 = arith.constant 0 : index
    %274 = vector.load %arg5[%c0_79, %c0_80] : memref<512x256xbf16, #tpu.memory_space<vmem>>, vector<512x256xbf16>
    %cst_81 = arith.constant dense<0.000000e+00> : vector<16x256xf32>
    %275 = tpu.matmul %273, %274, %cst_81 {dimension_numbers = #tpu.dot_dimension_numbers<[1], [0], [0], [1], [0, 0, 1, 1], [], []>} : vector<16x512xbf16>, vector<512x256xbf16>, vector<16x256xf32> -> vector<16x256xf32>
    %c12 = arith.constant 12 : index
    %c0_82 = arith.constant 0 : index
    %276 = vector.load %arg6[%c12, %c0_82] : memref<13x768xf32, #tpu.memory_space<vmem>>, vector<1x256xf32>
    %277 = vector.broadcast %276 : vector<1x256xf32> to vector<16x256xf32>
    %278 = arith.addf %275, %277 : vector<16x256xf32>
    %279 = arith.addf %229, %278 : vector<16x256xf32>
    %c0_83 = arith.constant 0 : index
    %c0_84 = arith.constant 0 : index
    %280 = vector.load %arg7[%c0_83, %c0_84] : memref<16x256xf32, #tpu.memory_space<vmem>>, vector<16x256xf32>
    tpu.vector_store %arg7[%c0_83, %c0_84], %279 {strides = array<i32>} : memref<16x256xf32, #tpu.memory_space<vmem>>, vector<16x256xf32>,
    %c0_85 = arith.constant 0 : index
    %c0_86 = arith.constant 0 : index
    %281 = vector.load %arg8[%c0_85, %c0_86] : memref<16x256xf32, #tpu.memory_space<vmem>>, vector<16x256xf32>
    tpu.vector_store %arg8[%c0_85, %c0_86], %7 {strides = array<i32>} : memref<16x256xf32, #tpu.memory_space<vmem>>, vector<16x256xf32>,
    return
  }
  func.func @transform_0(%arg0: i32) -> (i32, i32) {
    %c0_i32 = arith.constant 0 : i32
    %c0_i32_0 = arith.constant 0 : i32
    return %arg0, %c0_i32 : i32, i32
  }
  func.func @transform_1(%arg0: i32) -> (i32, i32) {
    %c0_i32 = arith.constant 0 : i32
    %c0_i32_0 = arith.constant 0 : i32
    return %arg0, %c0_i32 : i32, i32
  }
  func.func @transform_2(%arg0: i32) -> (i32, i32) {
    %c0_i32 = arith.constant 0 : i32
    %c0_i32_0 = arith.constant 0 : i32
    %c0_i32_1 = arith.constant 0 : i32
    return %c0_i32, %c0_i32_0 : i32, i32
  }
  func.func @transform_3(%arg0: i32) -> (i32, i32) {
    %c0_i32 = arith.constant 0 : i32
    %c0_i32_0 = arith.constant 0 : i32
    %c0_i32_1 = arith.constant 0 : i32
    return %c0_i32, %c0_i32_0 : i32, i32
  }
  func.func @transform_4(%arg0: i32) -> (i32, i32) {
    %c0_i32 = arith.constant 0 : i32
    %c0_i32_0 = arith.constant 0 : i32
    %c0_i32_1 = arith.constant 0 : i32
    return %c0_i32, %c0_i32_0 : i32, i32
  }
  func.func @transform_5(%arg0: i32) -> (i32, i32) {
    %c0_i32 = arith.constant 0 : i32
    %c0_i32_0 = arith.constant 0 : i32
    %c0_i32_1 = arith.constant 0 : i32
    return %c0_i32, %c0_i32_0 : i32, i32
  }
  func.func @transform_6(%arg0: i32) -> (i32, i32) {
    %c0_i32 = arith.constant 0 : i32
    %c0_i32_0 = arith.constant 0 : i32
    return %arg0, %c0_i32 : i32, i32
  }
  func.func @transform_7(%arg0: i32) -> (i32, i32) {
    %c0_i32 = arith.constant 0 : i32
    %c0_i32_0 = arith.constant 0 : i32
    return %arg0, %c0_i32 : i32, i32
  }
}

</mosaic_0001>

<llo_original>
// kernel: tpu_custom_call.1
$region0: #{tpu_custom_call.1}
  #allocation0 [shape = 'u32[]', space=smem, size = 0x4, offset = 0x4, fixed_abs, tag = 'smem constant byte address 0x4 - core index']
  #allocation1 [shape = 'u32[144,128]{1,0:T(1,128)}', space=vmem, size = 0x12000, scoped, tag = 'internal scratch']
  %s0 = inlined_call_operand.hbm [shape: f32[16,256], index: 0, kind: input, shape index: {}, may-alias: {0,6}]
  %s1 = inlined_call_operand.hbm [shape: f32[16,256], index: 1, kind: input, shape index: {}, may-alias: {1,7}]
  %s2 = inlined_call_operand.hbm [shape: f32[256,256], index: 2, kind: input, shape index: {}]
  %s3 = inlined_call_operand.hbm [shape: bf16[256,1536], index: 3, kind: input, shape index: {}]
  %s4 = inlined_call_operand.hbm [shape: bf16[512,256], index: 4, kind: input, shape index: {}]
  %s5 = inlined_call_operand.vmem [shape: f32[13,768], index: 5, kind: input, shape index: {}]
  %s6 = inlined_call_operand.hbm [shape: f32[16,256], index: 6, kind: output, shape index: {0}, may-alias: {0,6}]
  %s7 = inlined_call_operand.hbm [shape: f32[16,256], index: 7, kind: output, shape index: {1}, may-alias: {1,7}]
  %8 = xla_tuple %s6, %s7
  %s9 = sld [smem:[#allocation0]]
  $region62: #{tpu_custom_call.1} parent=0
    _
  %s11 = ssub.s32 1, %s9
  %s12 = scalar_select 0, %s11, %s9
  $region1: #{tpu_custom_call.1} parent=0
    #allocation2 [shape = 'u8[16384]{0}', space=vmem, size = 0x4000, scoped, tag = 'input window, operand 0, single buffered']
    #allocation3 [shape = 's32[1]{0}', space=sflag, size = 0x4, scoped, tag = 'scoped memory for tpu_custom_call.1']
    #allocation4 [shape = 's32[1]{0}', space=sflag, size = 0x4, scoped, tag = 'scoped memory for tpu_custom_call.1']
    #allocation5 [shape = 'u8[16384]{0}', space=vmem, size = 0x4000, scoped, tag = 'input window, operand 1, single buffered']
    #allocation6 [shape = 's32[1]{0}', space=sflag, size = 0x4, scoped, tag = 'scoped memory for tpu_custom_call.1']
    #allocation7 [shape = 'u8[262144]{0}', space=vmem, size = 0x40000, scoped, tag = 'input window, operand 2, single buffered']
    #allocation8 [shape = 'u8[786432]{0}', space=vmem, size = 0xc0000, scoped, tag = 'input window, operand 3, single buffered']
    #allocation9 [shape = 's32[1]{0}', space=sflag, size = 0x4, scoped, tag = 'scoped memory for tpu_custom_call.1']
    #allocation10 [shape = 'u8[262144]{0}', space=vmem, size = 0x40000, scoped, tag = 'input window, operand 4, single buffered']
    #allocation11 [shape = 'u8[16384]{0}', space=vmem, size = 0x4000, scoped, tag = 'output window, operand 0, single buffered']
    #allocation12 [shape = 'u8[16384]{0}', space=vmem, size = 0x4000, scoped, tag = 'output window, operand 1, single buffered']
    #allocation13 [shape = 's32[1]{0}', space=sflag, size = 0x4, scoped, tag = 'scoped memory for tpu_custom_call.1']
    %13 = vsyncpa [#allocation3], 0
    %14 = vsyncpa [#allocation6], 0
    %15 = vsyncpa [#allocation9], 0
    %16 = vsyncpa [#allocation4], 0
    %17 = vsyncpa [#allocation13], 0
    // Predicated region
    $region2: #{tpu_custom_call.1} parent=1 // pred_check
      _
    $region3: #{tpu_custom_call.1} parent=1 // pred_check_branch
      %19 = sbr.rel (0) target = $region5
    $region4: #{tpu_custom_call.1} parent=1 // pred_region
      %s21 = ssub.s32 512, 512
      %22 = vsyncadd [#allocation3], %s21
      %s23 = sshll.u32 [#allocation2], 4
      %s24 = int_to_ptr.vmem [resolvable:$true] %s23
      %29 = dma.hbm_to_vmem [thread:$0]  %s0, 512, %s24, [#allocation3], 256, 256, 16
    $region5: #{tpu_custom_call.1} parent=1 // pred_fallthru
      _
    // Predicated region
    $region6: #{tpu_custom_call.1} parent=1 // pred_check
      _
    $region7: #{tpu_custom_call.1} parent=1 // pred_check_branch
      %31 = sbr.rel (0) target = $region9
    $region8: #{tpu_custom_call.1} parent=1 // pred_region
      %s33 = ssub.s32 512, 512
      %34 = vsyncadd [#allocation6], %s33
      %s35 = sshll.u32 [#allocation5], 4
      %s36 = int_to_ptr.vmem [resolvable:$true] %s35
      %41 = dma.hbm_to_vmem [thread:$0]  %s1, 512, %s36, [#allocation6], 256, 256, 16
    $region9: #{tpu_custom_call.1} parent=1 // pred_fallthru
      _
    // Predicated region
    $region10: #{tpu_custom_call.1} parent=1 // pred_check
      _
    $region11: #{tpu_custom_call.1} parent=1 // pred_check_branch
      %43 = sbr.rel (0) target = $region13
    $region12: #{tpu_custom_call.1} parent=1 // pred_region
      %s45 = ssub.s32 8192, 8192
      %46 = vsyncadd [#allocation6], %s45
      %s47 = sshll.u32 [#allocation7], 4
      %s48 = int_to_ptr.vmem [resolvable:$true] %s47
      %53 = dma.hbm_to_vmem [thread:$0]  %s2, 8192, %s48, [#allocation6], 256, 256, 16
    $region13: #{tpu_custom_call.1} parent=1 // pred_fallthru
      _
    // Predicated region
    $region14: #{tpu_custom_call.1} parent=1 // pred_check
      _
    $region15: #{tpu_custom_call.1} parent=1 // pred_check_branch
      %55 = sbr.rel (0) target = $region17
    $region16: #{tpu_custom_call.1} parent=1 // pred_region
      %s57 = ssub.s32 24576, 24576
      %58 = vsyncadd [#allocation9], %s57
      %s59 = sshll.u32 [#allocation8], 4
      %s60 = int_to_ptr.vmem [resolvable:$true] %s59
      %65 = dma.hbm_to_vmem [thread:$0]  %s3, 24576, %s60, [#allocation9], 768, 768, 48
    $region17: #{tpu_custom_call.1} parent=1 // pred_fallthru
      _
    // Predicated region
    $region18: #{tpu_custom_call.1} parent=1 // pred_check
      _
    $region19: #{tpu_custom_call.1} parent=1 // pred_check_branch
      %67 = sbr.rel (0) target = $region21
    $region20: #{tpu_custom_call.1} parent=1 // pred_region
      %s69 = ssub.s32 8192, 8192
      %70 = vsyncadd [#allocation9], %s69
      %s71 = sshll.u32 [#allocation10], 4
      %s72 = int_to_ptr.vmem [resolvable:$true] %s71
      %77 = dma.hbm_to_vmem [thread:$0]  %s4, 8192, %s72, [#allocation9], 128, 128, 8
    $region21: #{tpu_custom_call.1} parent=1 // pred_fallthru
      _
    // Predicated region
    $region22: #{tpu_custom_call.1} parent=1 // pred_check
      _
    $region23: #{tpu_custom_call.1} parent=1 // pred_check_branch
      %79 = sbr.rel (0) target = $region25
    $region24: #{tpu_custom_call.1} parent=1 // pred_region
      _
    $region25: #{tpu_custom_call.1} parent=1 // pred_fallthru
      _
    // Predicated region
    $region26: #{tpu_custom_call.1} parent=1 // pred_check
      _
    $region27: #{tpu_custom_call.1} parent=1 // pred_check_branch
      %81 = sbr.rel (0) target = $region29
    $region28: #{tpu_custom_call.1} parent=1 // pred_region
      %82 = dma.done [#allocation3], 512
    $region29: #{tpu_custom_call.1} parent=1 // pred_fallthru
      _
    // Predicated region
    $region30: #{tpu_custom_call.1} parent=1 // pred_check
      _
    $region31: #{tpu_custom_call.1} parent=1 // pred_check_branch
      %84 = sbr.rel (0) target = $region33
    $region32: #{tpu_custom_call.1} parent=1 // pred_region
      %85 = dma.done [#allocation6], 512
    $region33: #{tpu_custom_call.1} parent=1 // pred_fallthru
      _
    // Predicated region
    $region34: #{tpu_custom_call.1} parent=1 // pred_check
      _
    $region35: #{tpu_custom_call.1} parent=1 // pred_check_branch
      %87 = sbr.rel (0) target = $region37
    $region36: #{tpu_custom_call.1} parent=1 // pred_region
      %88 = dma.done [#allocation6], 8192
    $region37: #{tpu_custom_call.1} parent=1 // pred_fallthru
      _
    // Predicated region
    $region38: #{tpu_custom_call.1} parent=1 // pred_check
      _
    $region39: #{tpu_custom_call.1} parent=1 // pred_check_branch
      %90 = sbr.rel (0) target = $region41
    $region40: #{tpu_custom_call.1} parent=1 // pred_region
      %91 = dma.done [#allocation9], 24576
    $region41: #{tpu_custom_call.1} parent=1 // pred_fallthru
      _
    // Predicated region
    $region42: #{tpu_custom_call.1} parent=1 // pred_check
      _
    $region43: #{tpu_custom_call.1} parent=1 // pred_check_branch
      %93 = sbr.rel (0) target = $region45
    $region44: #{tpu_custom_call.1} parent=1 // pred_region
      %94 = dma.done [#allocation9], 8192
    $region45: #{tpu_custom_call.1} parent=1 // pred_fallthru
      _
    %v96 = vld [vmem:[#allocation2] sm:$0xff]
    %v97 = vld [vmem:[#allocation2 + $0x8] sm:$0xff]
    %v98 = vld [vmem:[#allocation2 + $0x10] sm:$0xff]
    %v99 = vld [vmem:[#allocation2 + $0x18] sm:$0xff]
    %v100 = vld [vmem:[#allocation5] sm:$0xff]
    %v101 = vld [vmem:[#allocation5 + $0x8] sm:$0xff]
    %v102 = vld [vmem:[#allocation5 + $0x10] sm:$0xff]
    %v103 = vld [vmem:[#allocation5 + $0x18] sm:$0xff]
    %v104 = vld [vmem:[#allocation7] sm:$0xff]
    %v105 = vld [vmem:[#allocation7 + $0x8] sm:$0xff]
    %v106 = vld [vmem:[#allocation7 + $0x10] sm:$0xff]
    %v107 = vld [vmem:[#allocation7 + $0x18] sm:$0xff]
    %v108 = vld [vmem:[#allocation7 + $0x20] sm:$0xff]
    %v109 = vld [vmem:[#allocation7 + $0x28] sm:$0xff]
    %v110 = vld [vmem:[#allocation7 + $0x30] sm:$0xff]
    %v111 = vld [vmem:[#allocation7 + $0x38] sm:$0xff]
    %v112 = vld [vmem:[#allocation7 + $0x40] sm:$0xff]
    %v113 = vld [vmem:[#allocation7 + $0x48] sm:$0xff]
    %v114 = vld [vmem:[#allocation7 + $0x50] sm:$0xff]
    %v115 = vld [vmem:[#allocation7 + $0x58] sm:$0xff]
    %v116 = vld [vmem:[#allocation7 + $0x60] sm:$0xff]
    %v117 = vld [vmem:[#allocation7 + $0x68] sm:$0xff]
    %v118 = vld [vmem:[#allocation7 + $0x70] sm:$0xff]
    %v119 = vld [vmem:[#allocation7 + $0x78] sm:$0xff]
    %v120 = vld [vmem:[#allocation7 + $0x80] sm:$0xff]
    %v121 = vld [vmem:[#allocation7 + $0x88] sm:$0xff]
    %v122 = vld [vmem:[#allocation7 + $0x90] sm:$0xff]
    %v123 = vld [vmem:[#allocation7 + $0x98] sm:$0xff]
    %v124 = vld [vmem:[#allocation7 + $0xa0] sm:$0xff]
    %v125 = vld [vmem:[#allocation7 + $0xa8] sm:$0xff]
    %v126 = vld [vmem:[#allocation7 + $0xb0] sm:$0xff]
    %v127 = vld [vmem:[#allocation7 + $0xb8] sm:$0xff]
    %v128 = vld [vmem:[#allocation7 + $0xc0] sm:$0xff]
    %v129 = vld [vmem:[#allocation7 + $0xc8] sm:$0xff]
    %v130 = vld [vmem:[#allocation7 + $0xd0] sm:$0xff]
    %v131 = vld [vmem:[#allocation7 + $0xd8] sm:$0xff]
    %v132 = vld [vmem:[#allocation7 + $0xe0] sm:$0xff]
    %v133 = vld [vmem:[#allocation7 + $0xe8] sm:$0xff]
    %v134 = vld [vmem:[#allocation7 + $0xf0] sm:$0xff]
    %v135 = vld [vmem:[#allocation7 + $0xf8] sm:$0xff]
    %v136 = vld [vmem:[#allocation7 + $0x100] sm:$0xff]
    %v137 = vld [vmem:[#allocation7 + $0x108] sm:$0xff]
    %v138 = vld [vmem:[#allocation7 + $0x110] sm:$0xff]
    %v139 = vld [vmem:[#allocation7 + $0x118] sm:$0xff]
    %v140 = vld [vmem:[#allocation7 + $0x120] sm:$0xff]
    %v141 = vld [vmem:[#allocation7 + $0x128] sm:$0xff]
    %v142 = vld [vmem:[#allocation7 + $0x130] sm:$0xff]
    %v143 = vld [vmem:[#allocation7 + $0x138] sm:$0xff]
    %v144 = vld [vmem:[#allocation7 + $0x140] sm:$0xff]
    %v145 = vld [vmem:[#allocation7 + $0x148] sm:$0xff]
    %v146 = vld [vmem:[#allocation7 + $0x150] sm:$0xff]
    %v147 = vld [vmem:[#allocation7 + $0x158] sm:$0xff]
    %v148 = vld [vmem:[#allocation7 + $0x160] sm:$0xff]
    %v149 = vld [vmem:[#allocation7 + $0x168] sm:$0xff]
    %v150 = vld [vmem:[#allocation7 + $0x170] sm:$0xff]
    %v151 = vld [vmem:[#allocation7 + $0x178] sm:$0xff]
    %v152 = vld [vmem:[#allocation7 + $0x180] sm:$0xff]
    %v153 = vld [vmem:[#allocation7 + $0x188] sm:$0xff]
    %v154 = vld [vmem:[#allocation7 + $0x190] sm:$0xff]
    %v155 = vld [vmem:[#allocation7 + $0x198] sm:$0xff]
    %v156 = vld [vmem:[#allocation7 + $0x1a0] sm:$0xff]
    %v157 = vld [vmem:[#allocation7 + $0x1a8] sm:$0xff]
    %v158 = vld [vmem:[#allocation7 + $0x1b0] sm:$0xff]
    %v159 = vld [vmem:[#allocation7 + $0x1b8] sm:$0xff]
    %v160 = vld [vmem:[#allocation7 + $0x1c0] sm:$0xff]
    %v161 = vld [vmem:[#allocation7 + $0x1c8] sm:$0xff]
    %v162 = vld [vmem:[#allocation7 + $0x1d0] sm:$0xff]
    %v163 = vld [vmem:[#allocation7 + $0x1d8] sm:$0xff]
    %v164 = vld [vmem:[#allocation7 + $0x1e0] sm:$0xff]
    %v165 = vld [vmem:[#allocation7 + $0x1e8] sm:$0xff]
    %v166 = vld [vmem:[#allocation7 + $0x1f0] sm:$0xff]
    %v167 = vld [vmem:[#allocation7 + $0x1f8] sm:$0xff]
    %v168 = vld [vmem:[%s5] ss:$8 sm:$0x3]
    %v170 = vlaneseq
    %v171 = vshrl.u32 %v170, 7
    %v172 = vsub.s32 0, %v171
    %v173 = vrot.slane %v168, %v172
    %v174 = vlaneseq
    %v175 = vshrl.u32 %v174, 7
    %v176 = vsub.s32 1, %v175
    %v177 = vrot.slane %v168, %v176
    %v180 = vand.u32 %v105, 4294901760
    %181 = vmatprep.subr.mxu0 %v180
    %v182 = vand.u32 %v104, 4294901760
    %183 = vmatpush1.msra.mxu0 %v182
    %v184 = vand.u32 %v107, 4294901760
    %185 = vmatprep.subr.mxu0 %v184
    %v186 = vand.u32 %v106, 4294901760
    %187 = vmatpush1.msra.mxu0 %v186
    %v188 = vand.u32 %v109, 4294901760
    %189 = vmatprep.subr.mxu0 %v188
    %v190 = vand.u32 %v108, 4294901760
    %191 = vmatpush1.msra.mxu0 %v190
    %v192 = vand.u32 %v111, 4294901760
    %193 = vmatprep.subr.mxu0 %v192
    %v194 = vand.u32 %v110, 4294901760
    %195 = vmatpush1.msra.mxu0 %v194
    %v196 = vand.u32 %v113, 4294901760
    %197 = vmatprep.subr.mxu0 %v196
    %v198 = vand.u32 %v112, 4294901760
    %199 = vmatpush1.msra.mxu0 %v198
    %v200 = vand.u32 %v115, 4294901760
    %201 = vmatprep.subr.mxu0 %v200
    %v202 = vand.u32 %v114, 4294901760
    %203 = vmatpush1.msra.mxu0 %v202
    %v204 = vand.u32 %v117, 4294901760
    %205 = vmatprep.subr.mxu0 %v204
    %v206 = vand.u32 %v116, 4294901760
    %207 = vmatpush1.msra.mxu0 %v206
    %v208 = vand.u32 %v119, 4294901760
    %209 = vmatprep.subr.mxu0 %v208
    %v210 = vand.u32 %v118, 4294901760
    %211 = vmatpush1.msra.mxu0 %v210
    %v212 = vand.u32 %v121, 4294901760
    %213 = vmatprep.subr.mxu0 %v212
    %v214 = vand.u32 %v120, 4294901760
    %215 = vmatpush1.msra.mxu0 %v214
    %v216 = vand.u32 %v123, 4294901760
    %217 = vmatprep.subr.mxu0 %v216
    %v218 = vand.u32 %v122, 4294901760
    %219 = vmatpush1.msra.mxu0 %v218
    %v220 = vand.u32 %v125, 4294901760
    %221 = vmatprep.subr.mxu0 %v220
    %v222 = vand.u32 %v124, 4294901760
    %223 = vmatpush1.msra.mxu0 %v222
    %v224 = vand.u32 %v127, 4294901760
    %225 = vmatprep.subr.mxu0 %v224
    %v226 = vand.u32 %v126, 4294901760
    %227 = vmatpush1.msra.mxu0 %v226
    %v228 = vand.u32 %v129, 4294901760
    %229 = vmatprep.subr.mxu0 %v228
    %v230 = vand.u32 %v128, 4294901760
    %231 = vmatpush1.msra.mxu0 %v230
    %v232 = vand.u32 %v131, 4294901760
    %233 = vmatprep.subr.mxu0 %v232
    %v234 = vand.u32 %v130, 4294901760
    %235 = vmatpush1.msra.mxu0 %v234
    %v236 = vand.u32 %v133, 4294901760
    %237 = vmatprep.subr.mxu0 %v236
    %v238 = vand.u32 %v132, 4294901760
    %239 = vmatpush1.msra.mxu0 %v238
    %v240 = vand.u32 %v135, 4294901760
    %241 = vmatprep.subr.mxu0 %v240
    %v242 = vand.u32 %v134, 4294901760
    %243 = vmatpush1.msra.mxu0 %v242
    %v244 = vand.u32 %v137, 4294901760
    %245 = vmatprep.subr.mxu0 %v244
    %v246 = vand.u32 %v136, 4294901760
    %247 = vmatpush1.msra.mxu0 %v246
    %v248 = vand.u32 %v139, 4294901760
    %249 = vmatprep.subr.mxu0 %v248
    %v250 = vand.u32 %v138, 4294901760
    %251 = vmatpush1.msra.mxu0 %v250
    %v252 = vand.u32 %v141, 4294901760
    %253 = vmatprep.subr.mxu0 %v252
    %v254 = vand.u32 %v140, 4294901760
    %255 = vmatpush1.msra.mxu0 %v254
    %v256 = vand.u32 %v143, 4294901760
    %257 = vmatprep.subr.mxu0 %v256
    %v258 = vand.u32 %v142, 4294901760
    %259 = vmatpush1.msra.mxu0 %v258
    %v260 = vand.u32 %v145, 4294901760
    %261 = vmatprep.subr.mxu0 %v260
    %v262 = vand.u32 %v144, 4294901760
    %263 = vmatpush1.msra.mxu0 %v262
    %v264 = vand.u32 %v147, 4294901760
    %265 = vmatprep.subr.mxu0 %v264
    %v266 = vand.u32 %v146, 4294901760
    %267 = vmatpush1.msra.mxu0 %v266
    %v268 = vand.u32 %v149, 4294901760
    %269 = vmatprep.subr.mxu0 %v268
    %v270 = vand.u32 %v148, 4294901760
    %271 = vmatpush1.msra.mxu0 %v270
    %v272 = vand.u32 %v151, 4294901760
    %273 = vmatprep.subr.mxu0 %v272
    %v274 = vand.u32 %v150, 4294901760
    %275 = vmatpush1.msra.mxu0 %v274
    %v276 = vand.u32 %v153, 4294901760
    %277 = vmatprep.subr.mxu0 %v276
    %v278 = vand.u32 %v152, 4294901760
    %279 = vmatpush1.msra.mxu0 %v278
    %v280 = vand.u32 %v155, 4294901760
    %281 = vmatprep.subr.mxu0 %v280
    %v282 = vand.u32 %v154, 4294901760
    %283 = vmatpush1.msra.mxu0 %v282
    %v284 = vand.u32 %v157, 4294901760
    %285 = vmatprep.subr.mxu0 %v284
    %v286 = vand.u32 %v156, 4294901760
    %287 = vmatpush1.msra.mxu0 %v286
    %v288 = vand.u32 %v159, 4294901760
    %289 = vmatprep.subr.mxu0 %v288
    %v290 = vand.u32 %v158, 4294901760
    %291 = vmatpush1.msra.mxu0 %v290
    %v292 = vand.u32 %v161, 4294901760
    %293 = vmatprep.subr.mxu0 %v292
    %v294 = vand.u32 %v160, 4294901760
    %295 = vmatpush1.msra.mxu0 %v294
    %v296 = vand.u32 %v163, 4294901760
    %297 = vmatprep.subr.mxu0 %v296
    %v298 = vand.u32 %v162, 4294901760
    %299 = vmatpush1.msra.mxu0 %v298
    %v300 = vand.u32 %v165, 4294901760
    %301 = vmatprep.subr.mxu0 %v300
    %v302 = vand.u32 %v164, 4294901760
    %303 = vmatpush1.msra.mxu0 %v302
    %v304 = vand.u32 %v167, 4294901760
    %305 = vmatprep.subr.mxu0 %v304
    %v306 = vand.u32 %v166, 4294901760
    %307 = vmatpush1.msra.mxu0 %v306
    %v308 = vand.u32 %v101, 4294901760
    %v309 = vsub.f32 %v101, %v308
    %v310 = vand.u32 %v309, 4294901760
    %v311 = vsub.f32 %v309, %v310
    %v312 = vand.u32 %v311, 4294901760
    %313 = vmatprep.mubr.f32.mxu0 %v312
    %v314 = vand.u32 %v100, 4294901760
    %v315 = vsub.f32 %v100, %v314
    %v316 = vand.u32 %v315, 4294901760
    %v317 = vsub.f32 %v315, %v316
    %v318 = vand.u32 %v317, 4294901760
    %319 = vmatmul.mubr.f32.gmra.mrb[0].mxu0 %v318
    %v320 = vpop.f32.mrb[0].mxu0
    %v321 = vadd.f32 %v173, %v320
    %v322 = vpop.f32.mrb[0].mxu0
    %v323 = vadd.f32 %v177, %v322
    %v324 = vand.u32 %v103, 4294901760
    %v325 = vsub.f32 %v103, %v324
    %v326 = vand.u32 %v325, 4294901760
    %v327 = vsub.f32 %v325, %v326
    %v328 = vand.u32 %v327, 4294901760
    %329 = vmatprep.mubr.f32.mxu0 %v328
    %v330 = vand.u32 %v102, 4294901760
    %v331 = vsub.f32 %v102, %v330
    %v332 = vand.u32 %v331, 4294901760
    %v333 = vsub.f32 %v331, %v332
    %v334 = vand.u32 %v333, 4294901760
    %335 = vmatmul.mubr.f32.gmra.mrb[0].mxu0 %v334
    %v336 = vpop.f32.mrb[0].mxu0
    %v337 = vadd.f32 %v173, %v336
    %v338 = vpop.f32.mrb[0].mxu0
    %v339 = vadd.f32 %v177, %v338
    %340 = vdwg.mxu0
    %v341 = vand.u32 %v105, 4294901760
    %v342 = vsub.f32 %v105, %v341
    %v343 = vand.u32 %v342, 4294901760
    %v344 = vsub.f32 %v342, %v343
    %v345 = vand.u32 %v344, 4294901760
    %346 = vmatprep.subr.mxu0 %v345
    %v347 = vand.u32 %v104, 4294901760
    %v348 = vsub.f32 %v104, %v347
    %v349 = vand.u32 %v348, 4294901760
    %v350 = vsub.f32 %v348, %v349
    %v351 = vand.u32 %v350, 4294901760
    %352 = vmatpush1.msra.mxu0 %v351
    %v353 = vand.u32 %v107, 4294901760
    %v354 = vsub.f32 %v107, %v353
    %v355 = vand.u32 %v354, 4294901760
    %v356 = vsub.f32 %v354, %v355
    %v357 = vand.u32 %v356, 4294901760
    %358 = vmatprep.subr.mxu0 %v357
    %v359 = vand.u32 %v106, 4294901760
    %v360 = vsub.f32 %v106, %v359
    %v361 = vand.u32 %v360, 4294901760
    %v362 = vsub.f32 %v360, %v361
    %v363 = vand.u32 %v362, 4294901760
    %364 = vmatpush1.msra.mxu0 %v363
    %v365 = vand.u32 %v109, 4294901760
    %v366 = vsub.f32 %v109, %v365
    %v367 = vand.u32 %v366, 4294901760
    %v368 = vsub.f32 %v366, %v367
    %v369 = vand.u32 %v368, 4294901760
    %370 = vmatprep.subr.mxu0 %v369
    %v371 = vand.u32 %v108, 4294901760
    %v372 = vsub.f32 %v108, %v371
    %v373 = vand.u32 %v372, 4294901760
    %v374 = vsub.f32 %v372, %v373
    %v375 = vand.u32 %v374, 4294901760
    %376 = vmatpush1.msra.mxu0 %v375
    %v377 = vand.u32 %v111, 4294901760
    %v378 = vsub.f32 %v111, %v377
    %v379 = vand.u32 %v378, 4294901760
    %v380 = vsub.f32 %v378, %v379
    %v381 = vand.u32 %v380, 4294901760
    %382 = vmatprep.subr.mxu0 %v381
    %v383 = vand.u32 %v110, 4294901760
    %v384 = vsub.f32 %v110, %v383
    %v385 = vand.u32 %v384, 4294901760
    %v386 = vsub.f32 %v384, %v385
    %v387 = vand.u32 %v386, 4294901760
    %388 = vmatpush1.msra.mxu0 %v387
    %v389 = vand.u32 %v113, 4294901760
    %v390 = vsub.f32 %v113, %v389
    %v391 = vand.u32 %v390, 4294901760
    %v392 = vsub.f32 %v390, %v391
    %v393 = vand.u32 %v392, 4294901760
    %394 = vmatprep.subr.mxu0 %v393
    %v395 = vand.u32 %v112, 4294901760
    %v396 = vsub.f32 %v112, %v395
    %v397 = vand.u32 %v396, 4294901760
    %v398 = vsub.f32 %v396, %v397
    %v399 = vand.u32 %v398, 4294901760
    %400 = vmatpush1.msra.mxu0 %v399
    %v401 = vand.u32 %v115, 4294901760
    %v402 = vsub.f32 %v115, %v401
    %v403 = vand.u32 %v402, 4294901760
    %v404 = vsub.f32 %v402, %v403
    %v405 = vand.u32 %v404, 4294901760
    %406 = vmatprep.subr.mxu0 %v405
    %v407 = vand.u32 %v114, 4294901760
    %v408 = vsub.f32 %v114, %v407
    %v409 = vand.u32 %v408, 4294901760
    %v410 = vsub.f32 %v408, %v409
    %v411 = vand.u32 %v410, 4294901760
    %412 = vmatpush1.msra.mxu0 %v411
    %v413 = vand.u32 %v117, 4294901760
    %v414 = vsub.f32 %v117, %v413
    %v415 = vand.u32 %v414, 4294901760
    %v416 = vsub.f32 %v414, %v415
    %v417 = vand.u32 %v416, 4294901760
    %418 = vmatprep.subr.mxu0 %v417
    %v419 = vand.u32 %v116, 4294901760
    %v420 = vsub.f32 %v116, %v419
    %v421 = vand.u32 %v420, 4294901760
    %v422 = vsub.f32 %v420, %v421
    %v423 = vand.u32 %v422, 4294901760
    %424 = vmatpush1.msra.mxu0 %v423
    %v425 = vand.u32 %v119, 4294901760
    %v426 = vsub.f32 %v119, %v425
    %v427 = vand.u32 %v426, 4294901760
    %v428 = vsub.f32 %v426, %v427
    %v429 = vand.u32 %v428, 4294901760
    %430 = vmatprep.subr.mxu0 %v429
    %v431 = vand.u32 %v118, 4294901760
    %v432 = vsub.f32 %v118, %v431
    %v433 = vand.u32 %v432, 4294901760
    %v434 = vsub.f32 %v432, %v433
    %v435 = vand.u32 %v434, 4294901760
    %436 = vmatpush1.msra.mxu0 %v435
    %v437 = vand.u32 %v121, 4294901760
    %v438 = vsub.f32 %v121, %v437
    %v439 = vand.u32 %v438, 4294901760
    %v440 = vsub.f32 %v438, %v439
    %v441 = vand.u32 %v440, 4294901760
    %442 = vmatprep.subr.mxu0 %v441
    %v443 = vand.u32 %v120, 4294901760
    %v444 = vsub.f32 %v120, %v443
    %v445 = vand.u32 %v444, 4294901760
    %v446 = vsub.f32 %v444, %v445
    %v447 = vand.u32 %v446, 4294901760
    %448 = vmatpush1.msra.mxu0 %v447
    %v449 = vand.u32 %v123, 4294901760
    %v450 = vsub.f32 %v123, %v449
    %v451 = vand.u32 %v450, 4294901760
    %v452 = vsub.f32 %v450, %v451
    %v453 = vand.u32 %v452, 4294901760
    %454 = vmatprep.subr.mxu0 %v453
    %v455 = vand.u32 %v122, 4294901760
    %v456 = vsub.f32 %v122, %v455
    %v457 = vand.u32 %v456, 4294901760
    %v458 = vsub.f32 %v456, %v457
    %v459 = vand.u32 %v458, 4294901760
    %460 = vmatpush1.msra.mxu0 %v459
    %v461 = vand.u32 %v125, 4294901760
    %v462 = vsub.f32 %v125, %v461
    %v463 = vand.u32 %v462, 4294901760
    %v464 = vsub.f32 %v462, %v463
    %v465 = vand.u32 %v464, 4294901760
    %466 = vmatprep.subr.mxu0 %v465
    %v467 = vand.u32 %v124, 4294901760
    %v468 = vsub.f32 %v124, %v467
    %v469 = vand.u32 %v468, 4294901760
    %v470 = vsub.f32 %v468, %v469
    %v471 = vand.u32 %v470, 4294901760
    %472 = vmatpush1.msra.mxu0 %v471
    %v473 = vand.u32 %v127, 4294901760
    %v474 = vsub.f32 %v127, %v473
    %v475 = vand.u32 %v474, 4294901760
    %v476 = vsub.f32 %v474, %v475
    %v477 = vand.u32 %v476, 4294901760
    %478 = vmatprep.subr.mxu0 %v477
    %v479 = vand.u32 %v126, 4294901760
    %v480 = vsub.f32 %v126, %v479
    %v481 = vand.u32 %v480, 4294901760
    %v482 = vsub.f32 %v480, %v481
    %v483 = vand.u32 %v482, 4294901760
    %484 = vmatpush1.msra.mxu0 %v483
    %v485 = vand.u32 %v129, 4294901760
    %v486 = vsub.f32 %v129, %v485
    %v487 = vand.u32 %v486, 4294901760
    %v488 = vsub.f32 %v486, %v487
    %v489 = vand.u32 %v488, 4294901760
    %490 = vmatprep.subr.mxu0 %v489
    %v491 = vand.u32 %v128, 4294901760
    %v492 = vsub.f32 %v128, %v491
    %v493 = vand.u32 %v492, 4294901760
    %v494 = vsub.f32 %v492, %v493
    %v495 = vand.u32 %v494, 4294901760
    %496 = vmatpush1.msra.mxu0 %v495
    %v497 = vand.u32 %v131, 4294901760
    %v498 = vsub.f32 %v131, %v497
    %v499 = vand.u32 %v498, 4294901760
    %v500 = vsub.f32 %v498, %v499
    %v501 = vand.u32 %v500, 4294901760
    %502 = vmatprep.subr.mxu0 %v501
    %v503 = vand.u32 %v130, 4294901760
    %v504 = vsub.f32 %v130, %v503
    %v505 = vand.u32 %v504, 4294901760
    %v506 = vsub.f32 %v504, %v505
    %v507 = vand.u32 %v506, 4294901760
    %508 = vmatpush1.msra.mxu0 %v507
    %v509 = vand.u32 %v133, 4294901760
    %v510 = vsub.f32 %v133, %v509
    %v511 = vand.u32 %v510, 4294901760
    %v512 = vsub.f32 %v510, %v511
    %v513 = vand.u32 %v512, 4294901760
    %514 = vmatprep.subr.mxu0 %v513
    %v515 = vand.u32 %v132, 4294901760
    %v516 = vsub.f32 %v132, %v515
    %v517 = vand.u32 %v516, 4294901760
    %v518 = vsub.f32 %v516, %v517
    %v519 = vand.u32 %v518, 4294901760
    %520 = vmatpush1.msra.mxu0 %v519
    %v521 = vand.u32 %v135, 4294901760
    %v522 = vsub.f32 %v135, %v521
    %v523 = vand.u32 %v522, 4294901760
    %v524 = vsub.f32 %v522, %v523
    %v525 = vand.u32 %v524, 4294901760
    %526 = vmatprep.subr.mxu0 %v525
    %v527 = vand.u32 %v134, 4294901760
    %v528 = vsub.f32 %v134, %v527
    %v529 = vand.u32 %v528, 4294901760
    %v530 = vsub.f32 %v528, %v529
    %v531 = vand.u32 %v530, 4294901760
    %532 = vmatpush1.msra.mxu0 %v531
    %v533 = vand.u32 %v137, 4294901760
    %v534 = vsub.f32 %v137, %v533
    %v535 = vand.u32 %v534, 4294901760
    %v536 = vsub.f32 %v534, %v535
    %v537 = vand.u32 %v536, 4294901760
    %538 = vmatprep.subr.mxu0 %v537
    %v539 = vand.u32 %v136, 4294901760
    %v540 = vsub.f32 %v136, %v539
    %v541 = vand.u32 %v540, 4294901760
    %v542 = vsub.f32 %v540, %v541
    %v543 = vand.u32 %v542, 4294901760
    %544 = vmatpush1.msra.mxu0 %v543
    %v545 = vand.u32 %v139, 4294901760
    %v546 = vsub.f32 %v139, %v545
    %v547 = vand.u32 %v546, 4294901760
    %v548 = vsub.f32 %v546, %v547
    %v549 = vand.u32 %v548, 4294901760
    %550 = vmatprep.subr.mxu0 %v549
    %v551 = vand.u32 %v138, 4294901760
    %v552 = vsub.f32 %v138, %v551
    %v553 = vand.u32 %v552, 4294901760
    %v554 = vsub.f32 %v552, %v553
    %v555 = vand.u32 %v554, 4294901760
    %556 = vmatpush1.msra.mxu0 %v555
    %v557 = vand.u32 %v141, 4294901760
    %v558 = vsub.f32 %v141, %v557
    %v559 = vand.u32 %v558, 4294901760
    %v560 = vsub.f32 %v558, %v559
    %v561 = vand.u32 %v560, 4294901760
    %562 = vmatprep.subr.mxu0 %v561
    %v563 = vand.u32 %v140, 4294901760
    %v564 = vsub.f32 %v140, %v563
    %v565 = vand.u32 %v564, 4294901760
    %v566 = vsub.f32 %v564, %v565
    %v567 = vand.u32 %v566, 4294901760
    %568 = vmatpush1.msra.mxu0 %v567
    %v569 = vand.u32 %v143, 4294901760
    %v570 = vsub.f32 %v143, %v569
    %v571 = vand.u32 %v570, 4294901760
    %v572 = vsub.f32 %v570, %v571
    %v573 = vand.u32 %v572, 4294901760
    %574 = vmatprep.subr.mxu0 %v573
    %v575 = vand.u32 %v142, 4294901760
    %v576 = vsub.f32 %v142, %v575
    %v577 = vand.u32 %v576, 4294901760
    %v578 = vsub.f32 %v576, %v577
    %v579 = vand.u32 %v578, 4294901760
    %580 = vmatpush1.msra.mxu0 %v579
    %v581 = vand.u32 %v145, 4294901760
    %v582 = vsub.f32 %v145, %v581
    %v583 = vand.u32 %v582, 4294901760
    %v584 = vsub.f32 %v582, %v583
    %v585 = vand.u32 %v584, 4294901760
    %586 = vmatprep.subr.mxu0 %v585
    %v587 = vand.u32 %v144, 4294901760
    %v588 = vsub.f32 %v144, %v587
    %v589 = vand.u32 %v588, 4294901760
    %v590 = vsub.f32 %v588, %v589
    %v591 = vand.u32 %v590, 4294901760
    %592 = vmatpush1.msra.mxu0 %v591
    %v593 = vand.u32 %v147, 4294901760
    %v594 = vsub.f32 %v147, %v593
    %v595 = vand.u32 %v594, 4294901760
    %v596 = vsub.f32 %v594, %v595
    %v597 = vand.u32 %v596, 4294901760
    %598 = vmatprep.subr.mxu0 %v597
    %v599 = vand.u32 %v146, 4294901760
    %v600 = vsub.f32 %v146, %v599
    %v601 = vand.u32 %v600, 4294901760
    %v602 = vsub.f32 %v600, %v601
    %v603 = vand.u32 %v602, 4294901760
    %604 = vmatpush1.msra.mxu0 %v603
    %v605 = vand.u32 %v149, 4294901760
    %v606 = vsub.f32 %v149, %v605
    %v607 = vand.u32 %v606, 4294901760
    %v608 = vsub.f32 %v606, %v607
    %v609 = vand.u32 %v608, 4294901760
    %610 = vmatprep.subr.mxu0 %v609
    %v611 = vand.u32 %v148, 4294901760
    %v612 = vsub.f32 %v148, %v611
    %v613 = vand.u32 %v612, 4294901760
    %v614 = vsub.f32 %v612, %v613
    %v615 = vand.u32 %v614, 4294901760
    %616 = vmatpush1.msra.mxu0 %v615
    %v617 = vand.u32 %v151, 4294901760
    %v618 = vsub.f32 %v151, %v617
    %v619 = vand.u32 %v618, 4294901760
    %v620 = vsub.f32 %v618, %v619
    %v621 = vand.u32 %v620, 4294901760
    %622 = vmatprep.subr.mxu0 %v621
    %v623 = vand.u32 %v150, 4294901760
    %v624 = vsub.f32 %v150, %v623
    %v625 = vand.u32 %v624, 4294901760
    %v626 = vsub.f32 %v624, %v625
    %v627 = vand.u32 %v626, 4294901760
    %628 = vmatpush1.msra.mxu0 %v627
    %v629 = vand.u32 %v153, 4294901760
    %v630 = vsub.f32 %v153, %v629
    %v631 = vand.u32 %v630, 4294901760
    %v632 = vsub.f32 %v630, %v631
    %v633 = vand.u32 %v632, 4294901760
    %634 = vmatprep.subr.mxu0 %v633
    %v635 = vand.u32 %v152, 4294901760
    %v636 = vsub.f32 %v152, %v635
    %v637 = vand.u32 %v636, 4294901760
    %v638 = vsub.f32 %v636, %v637
    %v639 = vand.u32 %v638, 4294901760
    %640 = vmatpush1.msra.mxu0 %v639
    %v641 = vand.u32 %v155, 4294901760
    %v642 = vsub.f32 %v155, %v641
    %v643 = vand.u32 %v642, 4294901760
    %v644 = vsub.f32 %v642, %v643
    %v645 = vand.u32 %v644, 4294901760
    %646 = vmatprep.subr.mxu0 %v645
    %v647 = vand.u32 %v154, 4294901760
    %v648 = vsub.f32 %v154, %v647
    %v649 = vand.u32 %v648, 4294901760
    %v650 = vsub.f32 %v648, %v649
    %v651 = vand.u32 %v650, 4294901760
    %652 = vmatpush1.msra.mxu0 %v651
    %v653 = vand.u32 %v157, 4294901760
    %v654 = vsub.f32 %v157, %v653
    %v655 = vand.u32 %v654, 4294901760
    %v656 = vsub.f32 %v654, %v655
    %v657 = vand.u32 %v656, 4294901760
    %658 = vmatprep.subr.mxu0 %v657
    %v659 = vand.u32 %v156, 4294901760
    %v660 = vsub.f32 %v156, %v659
    %v661 = vand.u32 %v660, 4294901760
    %v662 = vsub.f32 %v660, %v661
    %v663 = vand.u32 %v662, 4294901760
    %664 = vmatpush1.msra.mxu0 %v663
    %v665 = vand.u32 %v159, 4294901760
    %v666 = vsub.f32 %v159, %v665
    %v667 = vand.u32 %v666, 4294901760
    %v668 = vsub.f32 %v666, %v667
    %v669 = vand.u32 %v668, 4294901760
    %670 = vmatprep.subr.mxu0 %v669
    %v671 = vand.u32 %v158, 4294901760
    %v672 = vsub.f32 %v158, %v671
    %v673 = vand.u32 %v672, 4294901760
    %v674 = vsub.f32 %v672, %v673
    %v675 = vand.u32 %v674, 4294901760
    %676 = vmatpush1.msra.mxu0 %v675
    %v677 = vand.u32 %v161, 4294901760
    %v678 = vsub.f32 %v161, %v677
    %v679 = vand.u32 %v678, 4294901760
    %v680 = vsub.f32 %v678, %v679
    %v681 = vand.u32 %v680, 4294901760
    %682 = vmatprep.subr.mxu0 %v681
    %v683 = vand.u32 %v160, 4294901760
    %v684 = vsub.f32 %v160, %v683
    %v685 = vand.u32 %v684, 4294901760
    %v686 = vsub.f32 %v684, %v685
    %v687 = vand.u32 %v686, 4294901760
    %688 = vmatpush1.msra.mxu0 %v687
    %v689 = vand.u32 %v163, 4294901760
    %v690 = vsub.f32 %v163, %v689
    %v691 = vand.u32 %v690, 4294901760
    %v692 = vsub.f32 %v690, %v691
    %v693 = vand.u32 %v692, 4294901760
    %694 = vmatprep.subr.mxu0 %v693
    %v695 = vand.u32 %v162, 4294901760
    %v696 = vsub.f32 %v162, %v695
    %v697 = vand.u32 %v696, 4294901760
    %v698 = vsub.f32 %v696, %v697
    %v699 = vand.u32 %v698, 4294901760
    %700 = vmatpush1.msra.mxu0 %v699
    %v701 = vand.u32 %v165, 4294901760
    %v702 = vsub.f32 %v165, %v701
    %v703 = vand.u32 %v702, 4294901760
    %v704 = vsub.f32 %v702, %v703
    %v705 = vand.u32 %v704, 4294901760
    %706 = vmatprep.subr.mxu0 %v705
    %v707 = vand.u32 %v164, 4294901760
    %v708 = vsub.f32 %v164, %v707
    %v709 = vand.u32 %v708, 4294901760
    %v710 = vsub.f32 %v708, %v709
    %v711 = vand.u32 %v710, 4294901760
    %712 = vmatpush1.msra.mxu0 %v711
    %v713 = vand.u32 %v167, 4294901760
    %v714 = vsub.f32 %v167, %v713
    %v715 = vand.u32 %v714, 4294901760
    %v716 = vsub.f32 %v714, %v715
    %v717 = vand.u32 %v716, 4294901760
    %718 = vmatprep.subr.mxu0 %v717
    %v719 = vand.u32 %v166, 4294901760
    %v720 = vsub.f32 %v166, %v719
    %v721 = vand.u32 %v720, 4294901760
    %v722 = vsub.f32 %v720, %v721
    %v723 = vand.u32 %v722, 4294901760
    %724 = vmatpush1.msra.mxu0 %v723
    %v725 = vand.u32 %v101, 4294901760
    %726 = vmatprep.mubr.f32.mxu0 %v725
    %v727 = vand.u32 %v100, 4294901760
    %728 = vmatmul.mubr.f32.gmra.mrb[0].mxu0 %v727
    %v729 = vpop.f32.mrb[0].mxu0
    %v730 = vadd.f32 %v321, %v729
    %v731 = vpop.f32.mrb[0].mxu0
    %v732 = vadd.f32 %v323, %v731
    %v733 = vand.u32 %v103, 4294901760
    %734 = vmatprep.mubr.f32.mxu0 %v733
    %v735 = vand.u32 %v102, 4294901760
    %736 = vmatmul.mubr.f32.gmra.mrb[0].mxu0 %v735
    %v737 = vpop.f32.mrb[0].mxu0
    %v738 = vadd.f32 %v337, %v737
    %v739 = vpop.f32.mrb[0].mxu0
    %v740 = vadd.f32 %v339, %v739
    %741 = vdwg.mxu0
    %v742 = vand.u32 %v105, 4294901760
    %v743 = vsub.f32 %v105, %v742
    %744 = vmatprep.subr.mxu0 %v743
    %v745 = vand.u32 %v104, 4294901760
    %v746 = vsub.f32 %v104, %v745
    %747 = vmatpush1.msra.mxu0 %v746
    %v748 = vand.u32 %v107, 4294901760
    %v749 = vsub.f32 %v107, %v748
    %750 = vmatprep.subr.mxu0 %v749
    %v751 = vand.u32 %v106, 4294901760
    %v752 = vsub.f32 %v106, %v751
    %753 = vmatpush1.msra.mxu0 %v752
    %v754 = vand.u32 %v109, 4294901760
    %v755 = vsub.f32 %v109, %v754
    %756 = vmatprep.subr.mxu0 %v755
    %v757 = vand.u32 %v108, 4294901760
    %v758 = vsub.f32 %v108, %v757
    %759 = vmatpush1.msra.mxu0 %v758
    %v760 = vand.u32 %v111, 4294901760
    %v761 = vsub.f32 %v111, %v760
    %762 = vmatprep.subr.mxu0 %v761
    %v763 = vand.u32 %v110, 4294901760
    %v764 = vsub.f32 %v110, %v763
    %765 = vmatpush1.msra.mxu0 %v764
    %v766 = vand.u32 %v113, 4294901760
    %v767 = vsub.f32 %v113, %v766
    %768 = vmatprep.subr.mxu0 %v767
    %v769 = vand.u32 %v112, 4294901760
    %v770 = vsub.f32 %v112, %v769
    %771 = vmatpush1.msra.mxu0 %v770
    %v772 = vand.u32 %v115, 4294901760
    %v773 = vsub.f32 %v115, %v772
    %774 = vmatprep.subr.mxu0 %v773
    %v775 = vand.u32 %v114, 4294901760
    %v776 = vsub.f32 %v114, %v775
    %777 = vmatpush1.msra.mxu0 %v776
    %v778 = vand.u32 %v117, 4294901760
    %v779 = vsub.f32 %v117, %v778
    %780 = vmatprep.subr.mxu0 %v779
    %v781 = vand.u32 %v116, 4294901760
    %v782 = vsub.f32 %v116, %v781
    %783 = vmatpush1.msra.mxu0 %v782
    %v784 = vand.u32 %v119, 4294901760
    %v785 = vsub.f32 %v119, %v784
    %786 = vmatprep.subr.mxu0 %v785
    %v787 = vand.u32 %v118, 4294901760
    %v788 = vsub.f32 %v118, %v787
    %789 = vmatpush1.msra.mxu0 %v788
    %v790 = vand.u32 %v121, 4294901760
    %v791 = vsub.f32 %v121, %v790
    %792 = vmatprep.subr.mxu0 %v791
    %v793 = vand.u32 %v120, 4294901760
    %v794 = vsub.f32 %v120, %v793
    %795 = vmatpush1.msra.mxu0 %v794
    %v796 = vand.u32 %v123, 4294901760
    %v797 = vsub.f32 %v123, %v796
    %798 = vmatprep.subr.mxu0 %v797
    %v799 = vand.u32 %v122, 4294901760
    %v800 = vsub.f32 %v122, %v799
    %801 = vmatpush1.msra.mxu0 %v800
    %v802 = vand.u32 %v125, 4294901760
    %v803 = vsub.f32 %v125, %v802
    %804 = vmatprep.subr.mxu0 %v803
    %v805 = vand.u32 %v124, 4294901760
    %v806 = vsub.f32 %v124, %v805
    %807 = vmatpush1.msra.mxu0 %v806
    %v808 = vand.u32 %v127, 4294901760
    %v809 = vsub.f32 %v127, %v808
    %810 = vmatprep.subr.mxu0 %v809
    %v811 = vand.u32 %v126, 4294901760
    %v812 = vsub.f32 %v126, %v811
    %813 = vmatpush1.msra.mxu0 %v812
    %v814 = vand.u32 %v129, 4294901760
    %v815 = vsub.f32 %v129, %v814
    %816 = vmatprep.subr.mxu0 %v815
    %v817 = vand.u32 %v128, 4294901760
    %v818 = vsub.f32 %v128, %v817
    %819 = vmatpush1.msra.mxu0 %v818
    %v820 = vand.u32 %v131, 4294901760
    %v821 = vsub.f32 %v131, %v820
    %822 = vmatprep.subr.mxu0 %v821
    %v823 = vand.u32 %v130, 4294901760
    %v824 = vsub.f32 %v130, %v823
    %825 = vmatpush1.msra.mxu0 %v824
    %v826 = vand.u32 %v133, 4294901760
    %v827 = vsub.f32 %v133, %v826
    %828 = vmatprep.subr.mxu0 %v827
    %v829 = vand.u32 %v132, 4294901760
    %v830 = vsub.f32 %v132, %v829
    %831 = vmatpush1.msra.mxu0 %v830
    %v832 = vand.u32 %v135, 4294901760
    %v833 = vsub.f32 %v135, %v832
    %834 = vmatprep.subr.mxu0 %v833
    %v835 = vand.u32 %v134, 4294901760
    %v836 = vsub.f32 %v134, %v835
    %837 = vmatpush1.msra.mxu0 %v836
    %v838 = vand.u32 %v137, 4294901760
    %v839 = vsub.f32 %v137, %v838
    %840 = vmatprep.subr.mxu0 %v839
    %v841 = vand.u32 %v136, 4294901760
    %v842 = vsub.f32 %v136, %v841
    %843 = vmatpush1.msra.mxu0 %v842
    %v844 = vand.u32 %v139, 4294901760
    %v845 = vsub.f32 %v139, %v844
    %846 = vmatprep.subr.mxu0 %v845
    %v847 = vand.u32 %v138, 4294901760
    %v848 = vsub.f32 %v138, %v847
    %849 = vmatpush1.msra.mxu0 %v848
    %v850 = vand.u32 %v141, 4294901760
    %v851 = vsub.f32 %v141, %v850
    %852 = vmatprep.subr.mxu0 %v851
    %v853 = vand.u32 %v140, 4294901760
    %v854 = vsub.f32 %v140, %v853
    %855 = vmatpush1.msra.mxu0 %v854
    %v856 = vand.u32 %v143, 4294901760
    %v857 = vsub.f32 %v143, %v856
    %858 = vmatprep.subr.mxu0 %v857
    %v859 = vand.u32 %v142, 4294901760
    %v860 = vsub.f32 %v142, %v859
    %861 = vmatpush1.msra.mxu0 %v860
    %v862 = vand.u32 %v145, 4294901760
    %v863 = vsub.f32 %v145, %v862
    %864 = vmatprep.subr.mxu0 %v863
    %v865 = vand.u32 %v144, 4294901760
    %v866 = vsub.f32 %v144, %v865
    %867 = vmatpush1.msra.mxu0 %v866
    %v868 = vand.u32 %v147, 4294901760
    %v869 = vsub.f32 %v147, %v868
    %870 = vmatprep.subr.mxu0 %v869
    %v871 = vand.u32 %v146, 4294901760
    %v872 = vsub.f32 %v146, %v871
    %873 = vmatpush1.msra.mxu0 %v872
    %v874 = vand.u32 %v149, 4294901760
    %v875 = vsub.f32 %v149, %v874
    %876 = vmatprep.subr.mxu0 %v875
    %v877 = vand.u32 %v148, 4294901760
    %v878 = vsub.f32 %v148, %v877
    %879 = vmatpush1.msra.mxu0 %v878
    %v880 = vand.u32 %v151, 4294901760
    %v881 = vsub.f32 %v151, %v880
    %882 = vmatprep.subr.mxu0 %v881
    %v883 = vand.u32 %v150, 4294901760
    %v884 = vsub.f32 %v150, %v883
    %885 = vmatpush1.msra.mxu0 %v884
    %v886 = vand.u32 %v153, 4294901760
    %v887 = vsub.f32 %v153, %v886
    %888 = vmatprep.subr.mxu0 %v887
    %v889 = vand.u32 %v152, 4294901760
    %v890 = vsub.f32 %v152, %v889
    %891 = vmatpush1.msra.mxu0 %v890
    %v892 = vand.u32 %v155, 4294901760
    %v893 = vsub.f32 %v155, %v892
    %894 = vmatprep.subr.mxu0 %v893
    %v895 = vand.u32 %v154, 4294901760
    %v896 = vsub.f32 %v154, %v895
    %897 = vmatpush1.msra.mxu0 %v896
    %v898 = vand.u32 %v157, 4294901760
    %v899 = vsub.f32 %v157, %v898
    %900 = vmatprep.subr.mxu0 %v899
    %v901 = vand.u32 %v156, 4294901760
    %v902 = vsub.f32 %v156, %v901
    %903 = vmatpush1.msra.mxu0 %v902
    %v904 = vand.u32 %v159, 4294901760
    %v905 = vsub.f32 %v159, %v904
    %906 = vmatprep.subr.mxu0 %v905
    %v907 = vand.u32 %v158, 4294901760
    %v908 = vsub.f32 %v158, %v907
    %909 = vmatpush1.msra.mxu0 %v908
    %v910 = vand.u32 %v161, 4294901760
    %v911 = vsub.f32 %v161, %v910
    %912 = vmatprep.subr.mxu0 %v911
    %v913 = vand.u32 %v160, 4294901760
    %v914 = vsub.f32 %v160, %v913
    %915 = vmatpush1.msra.mxu0 %v914
    %v916 = vand.u32 %v163, 4294901760
    %v917 = vsub.f32 %v163, %v916
    %918 = vmatprep.subr.mxu0 %v917
    %v919 = vand.u32 %v162, 4294901760
    %v920 = vsub.f32 %v162, %v919
    %921 = vmatpush1.msra.mxu0 %v920
    %v922 = vand.u32 %v165, 4294901760
    %v923 = vsub.f32 %v165, %v922
    %924 = vmatprep.subr.mxu0 %v923
    %v925 = vand.u32 %v164, 4294901760
    %v926 = vsub.f32 %v164, %v925
    %927 = vmatpush1.msra.mxu0 %v926
    %v928 = vand.u32 %v167, 4294901760
    %v929 = vsub.f32 %v167, %v928
    %930 = vmatprep.subr.mxu0 %v929
    %v931 = vand.u32 %v166, 4294901760
    %v932 = vsub.f32 %v166, %v931
    %933 = vmatpush1.msra.mxu0 %v932
    %v934 = vand.u32 %v101, 4294901760
    %v935 = vsub.f32 %v101, %v934
    %936 = vmatprep.mubr.f32.mxu0 %v935
    %v937 = vand.u32 %v100, 4294901760
    %v938 = vsub.f32 %v100, %v937
    %939 = vmatmul.mubr.f32.gmra.mrb[0].mxu0 %v938
    %v940 = vpop.f32.mrb[0].mxu0
    %v941 = vadd.f32 %v730, %v940
    %v942 = vpop.f32.mrb[0].mxu0
    %v943 = vadd.f32 %v732, %v942
    %v944 = vand.u32 %v103, 4294901760
    %v945 = vsub.f32 %v103, %v944
    %946 = vmatprep.mubr.f32.mxu0 %v945
    %v947 = vand.u32 %v102, 4294901760
    %v948 = vsub.f32 %v102, %v947
    %949 = vmatmul.mubr.f32.gmra.mrb[0].mxu0 %v948
    %v950 = vpop.f32.mrb[0].mxu0
    %v951 = vadd.f32 %v738, %v950
    %v952 = vpop.f32.mrb[0].mxu0
    %v953 = vadd.f32 %v740, %v952
    %954 = vdwg.mxu0
    %v955 = vand.u32 %v105, 4294901760
    %956 = vmatprep.subr.mxu0 %v955
    %v957 = vand.u32 %v104, 4294901760
    %958 = vmatpush1.msra.mxu0 %v957
    %v959 = vand.u32 %v107, 4294901760
    %960 = vmatprep.subr.mxu0 %v959
    %v961 = vand.u32 %v106, 4294901760
    %962 = vmatpush1.msra.mxu0 %v961
    %v963 = vand.u32 %v109, 4294901760
    %964 = vmatprep.subr.mxu0 %v963
    %v965 = vand.u32 %v108, 4294901760
    %966 = vmatpush1.msra.mxu0 %v965
    %v967 = vand.u32 %v111, 4294901760
    %968 = vmatprep.subr.mxu0 %v967
    %v969 = vand.u32 %v110, 4294901760
    %970 = vmatpush1.msra.mxu0 %v969
    %v971 = vand.u32 %v113, 4294901760
    %972 = vmatprep.subr.mxu0 %v971
    %v973 = vand.u32 %v112, 4294901760
    %974 = vmatpush1.msra.mxu0 %v973
    %v975 = vand.u32 %v115, 4294901760
    %976 = vmatprep.subr.mxu0 %v975
    %v977 = vand.u32 %v114, 4294901760
    %978 = vmatpush1.msra.mxu0 %v977
    %v979 = vand.u32 %v117, 4294901760
    %980 = vmatprep.subr.mxu0 %v979
    %v981 = vand.u32 %v116, 4294901760
    %982 = vmatpush1.msra.mxu0 %v981
    %v983 = vand.u32 %v119, 4294901760
    %984 = vmatprep.subr.mxu0 %v983
    %v985 = vand.u32 %v118, 4294901760
    %986 = vmatpush1.msra.mxu0 %v985
    %v987 = vand.u32 %v121, 4294901760
    %988 = vmatprep.subr.mxu0 %v987
    %v989 = vand.u32 %v120, 4294901760
    %990 = vmatpush1.msra.mxu0 %v989
    %v991 = vand.u32 %v123, 4294901760
    %992 = vmatprep.subr.mxu0 %v991
    %v993 = vand.u32 %v122, 4294901760
    %994 = vmatpush1.msra.mxu0 %v993
    %v995 = vand.u32 %v125, 4294901760
    %996 = vmatprep.subr.mxu0 %v995
    %v997 = vand.u32 %v124, 4294901760
    %998 = vmatpush1.msra.mxu0 %v997
    %v999 = vand.u32 %v127, 4294901760
    %1000 = vmatprep.subr.mxu0 %v999
    %v1001 = vand.u32 %v126, 4294901760
    %1002 = vmatpush1.msra.mxu0 %v1001
    %v1003 = vand.u32 %v129, 4294901760
    %1004 = vmatprep.subr.mxu0 %v1003
    %v1005 = vand.u32 %v128, 4294901760
    %1006 = vmatpush1.msra.mxu0 %v1005
    %v1007 = vand.u32 %v131, 4294901760
    %1008 = vmatprep.subr.mxu0 %v1007
    %v1009 = vand.u32 %v130, 4294901760
    %1010 = vmatpush1.msra.mxu0 %v1009
    %v1011 = vand.u32 %v133, 4294901760
    %1012 = vmatprep.subr.mxu0 %v1011
    %v1013 = vand.u32 %v132, 4294901760
    %1014 = vmatpush1.msra.mxu0 %v1013
    %v1015 = vand.u32 %v135, 4294901760
    %1016 = vmatprep.subr.mxu0 %v1015
    %v1017 = vand.u32 %v134, 4294901760
    %1018 = vmatpush1.msra.mxu0 %v1017
    %v1019 = vand.u32 %v137, 4294901760
    %1020 = vmatprep.subr.mxu0 %v1019
    %v1021 = vand.u32 %v136, 4294901760
    %1022 = vmatpush1.msra.mxu0 %v1021
    %v1023 = vand.u32 %v139, 4294901760
    %1024 = vmatprep.subr.mxu0 %v1023
    %v1025 = vand.u32 %v138, 4294901760
    %1026 = vmatpush1.msra.mxu0 %v1025
    %v1027 = vand.u32 %v141, 4294901760
    %1028 = vmatprep.subr.mxu0 %v1027
    %v1029 = vand.u32 %v140, 4294901760
    %1030 = vmatpush1.msra.mxu0 %v1029
    %v1031 = vand.u32 %v143, 4294901760
    %1032 = vmatprep.subr.mxu0 %v1031
    %v1033 = vand.u32 %v142, 4294901760
    %1034 = vmatpush1.msra.mxu0 %v1033
    %v1035 = vand.u32 %v145, 4294901760
    %1036 = vmatprep.subr.mxu0 %v1035
    %v1037 = vand.u32 %v144, 4294901760
    %1038 = vmatpush1.msra.mxu0 %v1037
    %v1039 = vand.u32 %v147, 4294901760
    %1040 = vmatprep.subr.mxu0 %v1039
    %v1041 = vand.u32 %v146, 4294901760
    %1042 = vmatpush1.msra.mxu0 %v1041
    %v1043 = vand.u32 %v149, 4294901760
    %1044 = vmatprep.subr.mxu0 %v1043
    %v1045 = vand.u32 %v148, 4294901760
    %1046 = vmatpush1.msra.mxu0 %v1045
    %v1047 = vand.u32 %v151, 4294901760
    %1048 = vmatprep.subr.mxu0 %v1047
    %v1049 = vand.u32 %v150, 4294901760
    %1050 = vmatpush1.msra.mxu0 %v1049
    %v1051 = vand.u32 %v153, 4294901760
    %1052 = vmatprep.subr.mxu0 %v1051
    %v1053 = vand.u32 %v152, 4294901760
    %1054 = vmatpush1.msra.mxu0 %v1053
    %v1055 = vand.u32 %v155, 4294901760
    %1056 = vmatprep.subr.mxu0 %v1055
    %v1057 = vand.u32 %v154, 4294901760
    %1058 = vmatpush1.msra.mxu0 %v1057
    %v1059 = vand.u32 %v157, 4294901760
    %1060 = vmatprep.subr.mxu0 %v1059
    %v1061 = vand.u32 %v156, 4294901760
    %1062 = vmatpush1.msra.mxu0 %v1061
    %v1063 = vand.u32 %v159, 4294901760
    %1064 = vmatprep.subr.mxu0 %v1063
    %v1065 = vand.u32 %v158, 4294901760
    %1066 = vmatpush1.msra.mxu0 %v1065
    %v1067 = vand.u32 %v161, 4294901760
    %1068 = vmatprep.subr.mxu0 %v1067
    %v1069 = vand.u32 %v160, 4294901760
    %1070 = vmatpush1.msra.mxu0 %v1069
    %v1071 = vand.u32 %v163, 4294901760
    %1072 = vmatprep.subr.mxu0 %v1071
    %v1073 = vand.u32 %v162, 4294901760
    %1074 = vmatpush1.msra.mxu0 %v1073
    %v1075 = vand.u32 %v165, 4294901760
    %1076 = vmatprep.subr.mxu0 %v1075
    %v1077 = vand.u32 %v164, 4294901760
    %1078 = vmatpush1.msra.mxu0 %v1077
    %v1079 = vand.u32 %v167, 4294901760
    %1080 = vmatprep.subr.mxu0 %v1079
    %v1081 = vand.u32 %v166, 4294901760
    %1082 = vmatpush1.msra.mxu0 %v1081
    %v1083 = vand.u32 %v101, 4294901760
    %v1084 = vsub.f32 %v101, %v1083
    %v1085 = vand.u32 %v1084, 4294901760
    %1086 = vmatprep.mubr.f32.mxu0 %v1085
    %v1087 = vand.u32 %v100, 4294901760
    %v1088 = vsub.f32 %v100, %v1087
    %v1089 = vand.u32 %v1088, 4294901760
    %1090 = vmatmul.mubr.f32.gmra.mrb[0].mxu0 %v1089
    %v1091 = vpop.f32.mrb[0].mxu0
    %v1092 = vadd.f32 %v941, %v1091
    %v1093 = vpop.f32.mrb[0].mxu0
    %v1094 = vadd.f32 %v943, %v1093
    %v1095 = vand.u32 %v103, 4294901760
    %v1096 = vsub.f32 %v103, %v1095
    %v1097 = vand.u32 %v1096, 4294901760
    %1098 = vmatprep.mubr.f32.mxu0 %v1097
    %v1099 = vand.u32 %v102, 4294901760
    %v1100 = vsub.f32 %v102, %v1099
    %v1101 = vand.u32 %v1100, 4294901760
    %1102 = vmatmul.mubr.f32.gmra.mrb[0].mxu0 %v1101
    %v1103 = vpop.f32.mrb[0].mxu0
    %v1104 = vadd.f32 %v951, %v1103
    %v1105 = vpop.f32.mrb[0].mxu0
    %v1106 = vadd.f32 %v953, %v1105
    %1107 = vdwg.mxu0
    %v1108 = vand.u32 %v105, 4294901760
    %v1109 = vsub.f32 %v105, %v1108
    %v1110 = vand.u32 %v1109, 4294901760
    %1111 = vmatprep.subr.mxu0 %v1110
    %v1112 = vand.u32 %v104, 4294901760
    %v1113 = vsub.f32 %v104, %v1112
    %v1114 = vand.u32 %v1113, 4294901760
    %1115 = vmatpush1.msra.mxu0 %v1114
    %v1116 = vand.u32 %v107, 4294901760
    %v1117 = vsub.f32 %v107, %v1116
    %v1118 = vand.u32 %v1117, 4294901760
    %1119 = vmatprep.subr.mxu0 %v1118
    %v1120 = vand.u32 %v106, 4294901760
    %v1121 = vsub.f32 %v106, %v1120
    %v1122 = vand.u32 %v1121, 4294901760
    %1123 = vmatpush1.msra.mxu0 %v1122
    %v1124 = vand.u32 %v109, 4294901760
    %v1125 = vsub.f32 %v109, %v1124
    %v1126 = vand.u32 %v1125, 4294901760
    %1127 = vmatprep.subr.mxu0 %v1126
    %v1128 = vand.u32 %v108, 4294901760
    %v1129 = vsub.f32 %v108, %v1128
    %v1130 = vand.u32 %v1129, 4294901760
    %1131 = vmatpush1.msra.mxu0 %v1130
    %v1132 = vand.u32 %v111, 4294901760
    %v1133 = vsub.f32 %v111, %v1132
    %v1134 = vand.u32 %v1133, 4294901760
    %1135 = vmatprep.subr.mxu0 %v1134
    %v1136 = vand.u32 %v110, 4294901760
    %v1137 = vsub.f32 %v110, %v1136
    %v1138 = vand.u32 %v1137, 4294901760
    %1139 = vmatpush1.msra.mxu0 %v1138
    %v1140 = vand.u32 %v113, 4294901760
    %v1141 = vsub.f32 %v113, %v1140
    %v1142 = vand.u32 %v1141, 4294901760
    %1143 = vmatprep.subr.mxu0 %v1142
    %v1144 = vand.u32 %v112, 4294901760
    %v1145 = vsub.f32 %v112, %v1144
    %v1146 = vand.u32 %v1145, 4294901760
    %1147 = vmatpush1.msra.mxu0 %v1146
    %v1148 = vand.u32 %v115, 4294901760
    %v1149 = vsub.f32 %v115, %v1148
    %v1150 = vand.u32 %v1149, 4294901760
    %1151 = vmatprep.subr.mxu0 %v1150
    %v1152 = vand.u32 %v114, 4294901760
    %v1153 = vsub.f32 %v114, %v1152
    %v1154 = vand.u32 %v1153, 4294901760
    %1155 = vmatpush1.msra.mxu0 %v1154
    %v1156 = vand.u32 %v117, 4294901760
    %v1157 = vsub.f32 %v117, %v1156
    %v1158 = vand.u32 %v1157, 4294901760
    %1159 = vmatprep.subr.mxu0 %v1158
    %v1160 = vand.u32 %v116, 4294901760
    %v1161 = vsub.f32 %v116, %v1160
    %v1162 = vand.u32 %v1161, 4294901760
    %1163 = vmatpush1.msra.mxu0 %v1162
    %v1164 = vand.u32 %v119, 4294901760
    %v1165 = vsub.f32 %v119, %v1164
    %v1166 = vand.u32 %v1165, 4294901760
    %1167 = vmatprep.subr.mxu0 %v1166
    %v1168 = vand.u32 %v118, 4294901760
    %v1169 = vsub.f32 %v118, %v1168
    %v1170 = vand.u32 %v1169, 4294901760
    %1171 = vmatpush1.msra.mxu0 %v1170
    %v1172 = vand.u32 %v121, 4294901760
    %v1173 = vsub.f32 %v121, %v1172
    %v1174 = vand.u32 %v1173, 4294901760
    %1175 = vmatprep.subr.mxu0 %v1174
    %v1176 = vand.u32 %v120, 4294901760
    %v1177 = vsub.f32 %v120, %v1176
    %v1178 = vand.u32 %v1177, 4294901760
    %1179 = vmatpush1.msra.mxu0 %v1178
    %v1180 = vand.u32 %v123, 4294901760
    %v1181 = vsub.f32 %v123, %v1180
    %v1182 = vand.u32 %v1181, 4294901760
    %1183 = vmatprep.subr.mxu0 %v1182
    %v1184 = vand.u32 %v122, 4294901760
    %v1185 = vsub.f32 %v122, %v1184
    %v1186 = vand.u32 %v1185, 4294901760
    %1187 = vmatpush1.msra.mxu0 %v1186
    %v1188 = vand.u32 %v125, 4294901760
    %v1189 = vsub.f32 %v125, %v1188
    %v1190 = vand.u32 %v1189, 4294901760
    %1191 = vmatprep.subr.mxu0 %v1190
    %v1192 = vand.u32 %v124, 4294901760
    %v1193 = vsub.f32 %v124, %v1192
    %v1194 = vand.u32 %v1193, 4294901760
    %1195 = vmatpush1.msra.mxu0 %v1194
    %v1196 = vand.u32 %v127, 4294901760
    %v1197 = vsub.f32 %v127, %v1196
    %v1198 = vand.u32 %v1197, 4294901760
    %1199 = vmatprep.subr.mxu0 %v1198
    %v1200 = vand.u32 %v126, 4294901760
    %v1201 = vsub.f32 %v126, %v1200
    %v1202 = vand.u32 %v1201, 4294901760
    %1203 = vmatpush1.msra.mxu0 %v1202
    %v1204 = vand.u32 %v129, 4294901760
    %v1205 = vsub.f32 %v129, %v1204
    %v1206 = vand.u32 %v1205, 4294901760
    %1207 = vmatprep.subr.mxu0 %v1206
    %v1208 = vand.u32 %v128, 4294901760
    %v1209 = vsub.f32 %v128, %v1208
    %v1210 = vand.u32 %v1209, 4294901760
    %1211 = vmatpush1.msra.mxu0 %v1210
    %v1212 = vand.u32 %v131, 4294901760
    %v1213 = vsub.f32 %v131, %v1212
    %v1214 = vand.u32 %v1213, 4294901760
    %1215 = vmatprep.subr.mxu0 %v1214
    %v1216 = vand.u32 %v130, 4294901760
    %v1217 = vsub.f32 %v130, %v1216
    %v1218 = vand.u32 %v1217, 4294901760
    %1219 = vmatpush1.msra.mxu0 %v1218
    %v1220 = vand.u32 %v133, 4294901760
    %v1221 = vsub.f32 %v133, %v1220
    %v1222 = vand.u32 %v1221, 4294901760
    %1223 = vmatprep.subr.mxu0 %v1222
    %v1224 = vand.u32 %v132, 4294901760
    %v1225 = vsub.f32 %v132, %v1224
    %v1226 = vand.u32 %v1225, 4294901760
    %1227 = vmatpush1.msra.mxu0 %v1226
    %v1228 = vand.u32 %v135, 4294901760
    %v1229 = vsub.f32 %v135, %v1228
    %v1230 = vand.u32 %v1229, 4294901760
    %1231 = vmatprep.subr.mxu0 %v1230
    %v1232 = vand.u32 %v134, 4294901760
    %v1233 = vsub.f32 %v134, %v1232
    %v1234 = vand.u32 %v1233, 4294901760
    %1235 = vmatpush1.msra.mxu0 %v1234
    %v1236 = vand.u32 %v137, 4294901760
    %v1237 = vsub.f32 %v137, %v1236
    %v1238 = vand.u32 %v1237, 4294901760
    %1239 = vmatprep.subr.mxu0 %v1238
    %v1240 = vand.u32 %v136, 4294901760
    %v1241 = vsub.f32 %v136, %v1240
    %v1242 = vand.u32 %v1241, 4294901760
    %1243 = vmatpush1.msra.mxu0 %v1242
    %v1244 = vand.u32 %v139, 4294901760
    %v1245 = vsub.f32 %v139, %v1244
    %v1246 = vand.u32 %v1245, 4294901760
    %1247 = vmatprep.subr.mxu0 %v1246
    %v1248 = vand.u32 %v138, 4294901760
    %v1249 = vsub.f32 %v138, %v1248
    %v1250 = vand.u32 %v1249, 4294901760
    %1251 = vmatpush1.msra.mxu0 %v1250
    %v1252 = vand.u32 %v141, 4294901760
    %v1253 = vsub.f32 %v141, %v1252
    %v1254 = vand.u32 %v1253, 4294901760
    %1255 = vmatprep.subr.mxu0 %v1254
    %v1256 = vand.u32 %v140, 4294901760
    %v1257 = vsub.f32 %v140, %v1256
    %v1258 = vand.u32 %v1257, 4294901760
    %1259 = vmatpush1.msra.mxu0 %v1258
    %v1260 = vand.u32 %v143, 4294901760
    %v1261 = vsub.f32 %v143, %v1260
    %v1262 = vand.u32 %v1261, 4294901760
    %1263 = vmatprep.subr.mxu0 %v1262
    %v1264 = vand.u32 %v142, 4294901760
    %v1265 = vsub.f32 %v142, %v1264
    %v1266 = vand.u32 %v1265, 4294901760
    %1267 = vmatpush1.msra.mxu0 %v1266
    %v1268 = vand.u32 %v145, 4294901760
    %v1269 = vsub.f32 %v145, %v1268
    %v1270 = vand.u32 %v1269, 4294901760
    %1271 = vmatprep.subr.mxu0 %v1270
    %v1272 = vand.u32 %v144, 4294901760
    %v1273 = vsub.f32 %v144, %v1272
    %v1274 = vand.u32 %v1273, 4294901760
    %1275 = vmatpush1.msra.mxu0 %v1274
    %v1276 = vand.u32 %v147, 4294901760
    %v1277 = vsub.f32 %v147, %v1276
    %v1278 = vand.u32 %v1277, 4294901760
    %1279 = vmatprep.subr.mxu0 %v1278
    %v1280 = vand.u32 %v146, 4294901760
    %v1281 = vsub.f32 %v146, %v1280
    %v1282 = vand.u32 %v1281, 4294901760
    %1283 = vmatpush1.msra.mxu0 %v1282
    %v1284 = vand.u32 %v149, 4294901760
    %v1285 = vsub.f32 %v149, %v1284
    %v1286 = vand.u32 %v1285, 4294901760
    %1287 = vmatprep.subr.mxu0 %v1286
    %v1288 = vand.u32 %v148, 4294901760
    %v1289 = vsub.f32 %v148, %v1288
    %v1290 = vand.u32 %v1289, 4294901760
    %1291 = vmatpush1.msra.mxu0 %v1290
    %v1292 = vand.u32 %v151, 4294901760
    %v1293 = vsub.f32 %v151, %v1292
    %v1294 = vand.u32 %v1293, 4294901760
    %1295 = vmatprep.subr.mxu0 %v1294
    %v1296 = vand.u32 %v150, 4294901760
    %v1297 = vsub.f32 %v150, %v1296
    %v1298 = vand.u32 %v1297, 4294901760
    %1299 = vmatpush1.msra.mxu0 %v1298
    %v1300 = vand.u32 %v153, 4294901760
    %v1301 = vsub.f32 %v153, %v1300
    %v1302 = vand.u32 %v1301, 4294901760
    %1303 = vmatprep.subr.mxu0 %v1302
    %v1304 = vand.u32 %v152, 4294901760
    %v1305 = vsub.f32 %v152, %v1304
    %v1306 = vand.u32 %v1305, 4294901760
    %1307 = vmatpush1.msra.mxu0 %v1306
    %v1308 = vand.u32 %v155, 4294901760
    %v1309 = vsub.f32 %v155, %v1308
    %v1310 = vand.u32 %v1309, 4294901760
    %1311 = vmatprep.subr.mxu0 %v1310
    %v1312 = vand.u32 %v154, 4294901760
    %v1313 = vsub.f32 %v154, %v1312
    %v1314 = vand.u32 %v1313, 4294901760
    %1315 = vmatpush1.msra.mxu0 %v1314
    %v1316 = vand.u32 %v157, 4294901760
    %v1317 = vsub.f32 %v157, %v1316
    %v1318 = vand.u32 %v1317, 4294901760
    %1319 = vmatprep.subr.mxu0 %v1318
    %v1320 = vand.u32 %v156, 4294901760
    %v1321 = vsub.f32 %v156, %v1320
    %v1322 = vand.u32 %v1321, 4294901760
    %1323 = vmatpush1.msra.mxu0 %v1322
    %v1324 = vand.u32 %v159, 4294901760
    %v1325 = vsub.f32 %v159, %v1324
    %v1326 = vand.u32 %v1325, 4294901760
    %1327 = vmatprep.subr.mxu0 %v1326
    %v1328 = vand.u32 %v158, 4294901760
    %v1329 = vsub.f32 %v158, %v1328
    %v1330 = vand.u32 %v1329, 4294901760
    %1331 = vmatpush1.msra.mxu0 %v1330
    %v1332 = vand.u32 %v161, 4294901760
    %v1333 = vsub.f32 %v161, %v1332
    %v1334 = vand.u32 %v1333, 4294901760
    %1335 = vmatprep.subr.mxu0 %v1334
    %v1336 = vand.u32 %v160, 4294901760
    %v1337 = vsub.f32 %v160, %v1336
    %v1338 = vand.u32 %v1337, 4294901760
    %1339 = vmatpush1.msra.mxu0 %v1338
    %v1340 = vand.u32 %v163, 4294901760
    %v1341 = vsub.f32 %v163, %v1340
    %v1342 = vand.u32 %v1341, 4294901760
    %1343 = vmatprep.subr.mxu0 %v1342
    %v1344 = vand.u32 %v162, 4294901760
    %v1345 = vsub.f32 %v162, %v1344
    %v1346 = vand.u32 %v1345, 4294901760
    %1347 = vmatpush1.msra.mxu0 %v1346
    %v1348 = vand.u32 %v165, 4294901760
    %v1349 = vsub.f32 %v165, %v1348
    %v1350 = vand.u32 %v1349, 4294901760
    %1351 = vmatprep.subr.mxu0 %v1350
    %v1352 = vand.u32 %v164, 4294901760
    %v1353 = vsub.f32 %v164, %v1352
    %v1354 = vand.u32 %v1353, 4294901760
    %1355 = vmatpush1.msra.mxu0 %v1354
    %v1356 = vand.u32 %v167, 4294901760
    %v1357 = vsub.f32 %v167, %v1356
    %v1358 = vand.u32 %v1357, 4294901760
    %1359 = vmatprep.subr.mxu0 %v1358
    %v1360 = vand.u32 %v166, 4294901760
    %v1361 = vsub.f32 %v166, %v1360
    %v1362 = vand.u32 %v1361, 4294901760
    %1363 = vmatpush1.msra.mxu0 %v1362
    %v1364 = vand.u32 %v101, 4294901760
    %1365 = vmatprep.mubr.f32.mxu0 %v1364
    %v1366 = vand.u32 %v100, 4294901760
    %1367 = vmatmul.mubr.f32.gmra.mrb[0].mxu0 %v1366
    %v1368 = vpop.f32.mrb[0].mxu0
    %v1369 = vadd.f32 %v1092, %v1368
    %v1370 = vpop.f32.mrb[0].mxu0
    %v1371 = vadd.f32 %v1094, %v1370
    %v1372 = vand.u32 %v103, 4294901760
    %1373 = vmatprep.mubr.f32.mxu0 %v1372
    %v1374 = vand.u32 %v102, 4294901760
    %1375 = vmatmul.mubr.f32.gmra.mrb[0].mxu0 %v1374
    %v1376 = vpop.f32.mrb[0].mxu0
    %v1377 = vadd.f32 %v1104, %v1376
    %v1378 = vpop.f32.mrb[0].mxu0
    %v1379 = vadd.f32 %v1106, %v1378
    %1380 = vdwg.mxu0
    %v1381 = vand.u32 %v105, 4294901760
    %1382 = vmatprep.subr.mxu0 %v1381
    %v1383 = vand.u32 %v104, 4294901760
    %1384 = vmatpush1.msra.mxu0 %v1383
    %v1385 = vand.u32 %v107, 4294901760
    %1386 = vmatprep.subr.mxu0 %v1385
    %v1387 = vand.u32 %v106, 4294901760
    %1388 = vmatpush1.msra.mxu0 %v1387
    %v1389 = vand.u32 %v109, 4294901760
    %1390 = vmatprep.subr.mxu0 %v1389
    %v1391 = vand.u32 %v108, 4294901760
    %1392 = vmatpush1.msra.mxu0 %v1391
    %v1393 = vand.u32 %v111, 4294901760
    %1394 = vmatprep.subr.mxu0 %v1393
    %v1395 = vand.u32 %v110, 4294901760
    %1396 = vmatpush1.msra.mxu0 %v1395
    %v1397 = vand.u32 %v113, 4294901760
    %1398 = vmatprep.subr.mxu0 %v1397
    %v1399 = vand.u32 %v112, 4294901760
    %1400 = vmatpush1.msra.mxu0 %v1399
    %v1401 = vand.u32 %v115, 4294901760
    %1402 = vmatprep.subr.mxu0 %v1401
    %v1403 = vand.u32 %v114, 4294901760
    %1404 = vmatpush1.msra.mxu0 %v1403
    %v1405 = vand.u32 %v117, 4294901760
    %1406 = vmatprep.subr.mxu0 %v1405
    %v1407 = vand.u32 %v116, 4294901760
    %1408 = vmatpush1.msra.mxu0 %v1407
    %v1409 = vand.u32 %v119, 4294901760
    %1410 = vmatprep.subr.mxu0 %v1409
    %v1411 = vand.u32 %v118, 4294901760
    %1412 = vmatpush1.msra.mxu0 %v1411
    %v1413 = vand.u32 %v121, 4294901760
    %1414 = vmatprep.subr.mxu0 %v1413
    %v1415 = vand.u32 %v120, 4294901760
    %1416 = vmatpush1.msra.mxu0 %v1415
    %v1417 = vand.u32 %v123, 4294901760
    %1418 = vmatprep.subr.mxu0 %v1417
    %v1419 = vand.u32 %v122, 4294901760
    %1420 = vmatpush1.msra.mxu0 %v1419
    %v1421 = vand.u32 %v125, 4294901760
    %1422 = vmatprep.subr.mxu0 %v1421
    %v1423 = vand.u32 %v124, 4294901760
    %1424 = vmatpush1.msra.mxu0 %v1423
    %v1425 = vand.u32 %v127, 4294901760
    %1426 = vmatprep.subr.mxu0 %v1425
    %v1427 = vand.u32 %v126, 4294901760
    %1428 = vmatpush1.msra.mxu0 %v1427
    %v1429 = vand.u32 %v129, 4294901760
    %1430 = vmatprep.subr.mxu0 %v1429
    %v1431 = vand.u32 %v128, 4294901760
    %1432 = vmatpush1.msra.mxu0 %v1431
    %v1433 = vand.u32 %v131, 4294901760
    %1434 = vmatprep.subr.mxu0 %v1433
    %v1435 = vand.u32 %v130, 4294901760
    %1436 = vmatpush1.msra.mxu0 %v1435
    %v1437 = vand.u32 %v133, 4294901760
    %1438 = vmatprep.subr.mxu0 %v1437
    %v1439 = vand.u32 %v132, 4294901760
    %1440 = vmatpush1.msra.mxu0 %v1439
    %v1441 = vand.u32 %v135, 4294901760
    %1442 = vmatprep.subr.mxu0 %v1441
    %v1443 = vand.u32 %v134, 4294901760
    %1444 = vmatpush1.msra.mxu0 %v1443
    %v1445 = vand.u32 %v137, 4294901760
    %1446 = vmatprep.subr.mxu0 %v1445
    %v1447 = vand.u32 %v136, 4294901760
    %1448 = vmatpush1.msra.mxu0 %v1447
    %v1449 = vand.u32 %v139, 4294901760
    %1450 = vmatprep.subr.mxu0 %v1449
    %v1451 = vand.u32 %v138, 4294901760
    %1452 = vmatpush1.msra.mxu0 %v1451
    %v1453 = vand.u32 %v141, 4294901760
    %1454 = vmatprep.subr.mxu0 %v1453
    %v1455 = vand.u32 %v140, 4294901760
    %1456 = vmatpush1.msra.mxu0 %v1455
    %v1457 = vand.u32 %v143, 4294901760
    %1458 = vmatprep.subr.mxu0 %v1457
    %v1459 = vand.u32 %v142, 4294901760
    %1460 = vmatpush1.msra.mxu0 %v1459
    %v1461 = vand.u32 %v145, 4294901760
    %1462 = vmatprep.subr.mxu0 %v1461
    %v1463 = vand.u32 %v144, 4294901760
    %1464 = vmatpush1.msra.mxu0 %v1463
    %v1465 = vand.u32 %v147, 4294901760
    %1466 = vmatprep.subr.mxu0 %v1465
    %v1467 = vand.u32 %v146, 4294901760
    %1468 = vmatpush1.msra.mxu0 %v1467
    %v1469 = vand.u32 %v149, 4294901760
    %1470 = vmatprep.subr.mxu0 %v1469
    %v1471 = vand.u32 %v148, 4294901760
    %1472 = vmatpush1.msra.mxu0 %v1471
    %v1473 = vand.u32 %v151, 4294901760
    %1474 = vmatprep.subr.mxu0 %v1473
    %v1475 = vand.u32 %v150, 4294901760
    %1476 = vmatpush1.msra.mxu0 %v1475
    %v1477 = vand.u32 %v153, 4294901760
    %1478 = vmatprep.subr.mxu0 %v1477
    %v1479 = vand.u32 %v152, 4294901760
    %1480 = vmatpush1.msra.mxu0 %v1479
    %v1481 = vand.u32 %v155, 4294901760
    %1482 = vmatprep.subr.mxu0 %v1481
    %v1483 = vand.u32 %v154, 4294901760
    %1484 = vmatpush1.msra.mxu0 %v1483
    %v1485 = vand.u32 %v157, 4294901760
    %1486 = vmatprep.subr.mxu0 %v1485
    %v1487 = vand.u32 %v156, 4294901760
    %1488 = vmatpush1.msra.mxu0 %v1487
    %v1489 = vand.u32 %v159, 4294901760
    %1490 = vmatprep.subr.mxu0 %v1489
    %v1491 = vand.u32 %v158, 4294901760
    %1492 = vmatpush1.msra.mxu0 %v1491
    %v1493 = vand.u32 %v161, 4294901760
    %1494 = vmatprep.subr.mxu0 %v1493
    %v1495 = vand.u32 %v160, 4294901760
    %1496 = vmatpush1.msra.mxu0 %v1495
    %v1497 = vand.u32 %v163, 4294901760
    %1498 = vmatprep.subr.mxu0 %v1497
    %v1499 = vand.u32 %v162, 4294901760
    %1500 = vmatpush1.msra.mxu0 %v1499
    %v1501 = vand.u32 %v165, 4294901760
    %1502 = vmatprep.subr.mxu0 %v1501
    %v1503 = vand.u32 %v164, 4294901760
    %1504 = vmatpush1.msra.mxu0 %v1503
    %v1505 = vand.u32 %v167, 4294901760
    %1506 = vmatprep.subr.mxu0 %v1505
    %v1507 = vand.u32 %v166, 4294901760
    %1508 = vmatpush1.msra.mxu0 %v1507
    %v1509 = vand.u32 %v101, 4294901760
    %1510 = vmatprep.mubr.f32.mxu0 %v1509
    %v1511 = vand.u32 %v100, 4294901760
    %1512 = vmatmul.mubr.f32.gmra.mrb[0].mxu0 %v1511
    %v1513 = vpop.f32.mrb[0].mxu0
    %v1514 = vadd.f32 %v1369, %v1513
    %v1515 = vpop.f32.mrb[0].mxu0
    %v1516 = vadd.f32 %v1371, %v1515
    %v1517 = vand.u32 %v103, 4294901760
    %1518 = vmatprep.mubr.f32.mxu0 %v1517
    %v1519 = vand.u32 %v102, 4294901760
    %1520 = vmatmul.mubr.f32.gmra.mrb[0].mxu0 %v1519
    %v1521 = vpop.f32.mrb[0].mxu0
    %v1522 = vadd.f32 %v1377, %v1521
    %v1523 = vpop.f32.mrb[0].mxu0
    %v1524 = vadd.f32 %v1379, %v1523
    %1525 = vdwg.mxu0
    %v1526 = vadd.f32 %v1514, %v96
    %v1527 = vadd.f32 %v1516, %v97
    %v1528 = vadd.f32 %v1522, %v98
    %v1529 = vadd.f32 %v1524, %v99
    %s1530 = scalar_lea.vmem %s5, 1
    %v1531 = vld [vmem:[%s1530] ss:$8 sm:$0x3]
    %s1532 = scalar_lea.vmem %s5, 2
    %v1533 = vld [vmem:[%s1532] ss:$8 sm:$0x3]
    %v1534 = vadd.f32 %v96, %v97
    %1535 = vadd.xlane.f32.xlu0 %v1534
    %v1536 = vpop.xlane.xlu0 %1535
    %v1537 = vadd.f32 %v98, %v99
    %1538 = vadd.xlane.f32.xlu0 %v1537
    %v1539 = vpop.xlane.xlu0 %1538
    %v1540 = vrcp.pop 256.0
    %v1541 = vmul.f32 %v1536, %v1540
    %v1542 = vmul.f32 %v1539, %v1540
    %v1543 = vsub.f32 %v96, %v1541
    %v1544 = vsub.f32 %v97, %v1541
    %v1545 = vsub.f32 %v98, %v1542
    %v1546 = vsub.f32 %v99, %v1542
    %v1547 = vmul.f32 %v1543, %v1543
    %v1548 = vmul.f32 %v1544, %v1544
    %v1549 = vmul.f32 %v1545, %v1545
    %v1550 = vmul.f32 %v1546, %v1546
    %v1551 = vadd.f32 %v1547, %v1548
    %1552 = vadd.xlane.f32.xlu0 %v1551
    %v1553 = vpop.xlane.xlu0 %1552
    %v1554 = vadd.f32 %v1549, %v1550
    %1555 = vadd.xlane.f32.xlu0 %v1554
    %v1556 = vpop.xlane.xlu0 %1555
    %v1557 = vmul.f32 %v1553, %v1540
    %v1558 = vmul.f32 %v1556, %v1540
    %v1559 = vadd.f32 %v1557, 1e-05
    %v1560 = vadd.f32 %v1558, 1e-05
    %v1561 = vrsqrt.pop %v1559
    %v1562 = vrsqrt.pop %v1560
    %v1563 = vmul.f32 %v1543, %v1561
    %v1564 = vmul.f32 %v1544, %v1561
    %v1565 = vmul.f32 %v1545, %v1562
    %v1566 = vmul.f32 %v1546, %v1562
    %v1568 = vlaneseq
    %v1569 = vshrl.u32 %v1568, 7
    %v1570 = vsub.s32 0, %v1569
    %v1571 = vrot.slane %v1531, %v1570
    %v1572 = vlaneseq
    %v1573 = vshrl.u32 %v1572, 7
    %v1574 = vsub.s32 1, %v1573
    %v1575 = vrot.slane %v1531, %v1574
    %v1578 = vmul.f32 %v1563, %v1571
    %v1579 = vmul.f32 %v1564, %v1575
    %v1580 = vmul.f32 %v1565, %v1571
    %v1581 = vmul.f32 %v1566, %v1575
    %v1583 = vlaneseq
    %v1584 = vshrl.u32 %v1583, 7
    %v1585 = vsub.s32 0, %v1584
    %v1586 = vrot.slane %v1533, %v1585
    %v1587 = vlaneseq
    %v1588 = vshrl.u32 %v1587, 7
    %v1589 = vsub.s32 1, %v1588
    %v1590 = vrot.slane %v1533, %v1589
    %v1593 = vadd.f32 %v1578, %v1586
    %v1594 = vadd.f32 %v1579, %v1590
    %v1595 = vadd.f32 %v1580, %v1586
    %v1596 = vadd.f32 %v1581, %v1590
    %v1597 = vpack.c.bf16 %v1595, %v1593
    %v1598 = vpack.c.bf16 %v1596, %v1594
    %v1599 = vld [vmem:[#allocation8] sm:$0xff]
    %v1600 = vld [vmem:[#allocation8 + $0x8] sm:$0xff]
    %v1601 = vld [vmem:[#allocation8 + $0x10] sm:$0xff]
    %v1602 = vld [vmem:[#allocation8 + $0x30] sm:$0xff]
    %v1603 = vld [vmem:[#allocation8 + $0x38] sm:$0xff]
    %v1604 = vld [vmem:[#allocation8 + $0x40] sm:$0xff]
    %v1605 = vld [vmem:[#allocation8 + $0x60] sm:$0xff]
    %v1606 = vld [vmem:[#allocation8 + $0x68] sm:$0xff]
    %v1607 = vld [vmem:[#allocation8 + $0x70] sm:$0xff]
    %v1608 = vld [vmem:[#allocation8 + $0x90] sm:$0xff]
    %v1609 = vld [vmem:[#allocation8 + $0x98] sm:$0xff]
    %v1610 = vld [vmem:[#allocation8 + $0xa0] sm:$0xff]
    %v1611 = vld [vmem:[#allocation8 + $0xc0] sm:$0xff]
    %v1612 = vld [vmem:[#allocation8 + $0xc8] sm:$0xff]
    %v1613 = vld [vmem:[#allocation8 + $0xd0] sm:$0xff]
    %v1614 = vld [vmem:[#allocation8 + $0xf0] sm:$0xff]
    %v1615 = vld [vmem:[#allocation8 + $0xf8] sm:$0xff]
    %v1616 = vld [vmem:[#allocation8 + $0x100] sm:$0xff]
    %v1617 = vld [vmem:[#allocation8 + $0x120] sm:$0xff]
    %v1618 = vld [vmem:[#allocation8 + $0x128] sm:$0xff]
    %v1619 = vld [vmem:[#allocation8 + $0x130] sm:$0xff]
    %v1620 = vld [vmem:[#allocation8 + $0x150] sm:$0xff]
    %v1621 = vld [vmem:[#allocation8 + $0x158] sm:$0xff]
    %v1622 = vld [vmem:[#allocation8 + $0x160] sm:$0xff]
    %v1623 = vld [vmem:[#allocation8 + $0x180] sm:$0xff]
    %v1624 = vld [vmem:[#allocation8 + $0x188] sm:$0xff]
    %v1625 = vld [vmem:[#allocation8 + $0x190] sm:$0xff]
    %v1626 = vld [vmem:[#allocation8 + $0x1b0] sm:$0xff]
    %v1627 = vld [vmem:[#allocation8 + $0x1b8] sm:$0xff]
    %v1628 = vld [vmem:[#allocation8 + $0x1c0] sm:$0xff]
    %v1629 = vld [vmem:[#allocation8 + $0x1e0] sm:$0xff]
    %v1630 = vld [vmem:[#allocation8 + $0x1e8] sm:$0xff]
    %v1631 = vld [vmem:[#allocation8 + $0x1f0] sm:$0xff]
    %v1632 = vld [vmem:[#allocation8 + $0x210] sm:$0xff]
    %v1633 = vld [vmem:[#allocation8 + $0x218] sm:$0xff]
    %v1634 = vld [vmem:[#allocation8 + $0x220] sm:$0xff]
    %v1635 = vld [vmem:[#allocation8 + $0x240] sm:$0xff]
    %v1636 = vld [vmem:[#allocation8 + $0x248] sm:$0xff]
    %v1637 = vld [vmem:[#allocation8 + $0x250] sm:$0xff]
    %v1638 = vld [vmem:[#allocation8 + $0x270] sm:$0xff]
    %v1639 = vld [vmem:[#allocation8 + $0x278] sm:$0xff]
    %v1640 = vld [vmem:[#allocation8 + $0x280] sm:$0xff]
    %v1641 = vld [vmem:[#allocation8 + $0x2a0] sm:$0xff]
    %v1642 = vld [vmem:[#allocation8 + $0x2a8] sm:$0xff]
    %v1643 = vld [vmem:[#allocation8 + $0x2b0] sm:$0xff]
    %v1644 = vld [vmem:[#allocation8 + $0x2d0] sm:$0xff]
    %v1645 = vld [vmem:[#allocation8 + $0x2d8] sm:$0xff]
    %v1646 = vld [vmem:[#allocation8 + $0x2e0] sm:$0xff]
    %v1647 = vld [vmem:[#allocation8 + $0x300] sm:$0xff]
    %v1648 = vld [vmem:[#allocation8 + $0x308] sm:$0xff]
    %v1649 = vld [vmem:[#allocation8 + $0x310] sm:$0xff]
    %v1650 = vld [vmem:[#allocation8 + $0x330] sm:$0xff]
    %v1651 = vld [vmem:[#allocation8 + $0x338] sm:$0xff]
    %v1652 = vld [vmem:[#allocation8 + $0x340] sm:$0xff]
    %v1653 = vld [vmem:[#allocation8 + $0x360] sm:$0xff]
    %v1654 = vld [vmem:[#allocation8 + $0x368] sm:$0xff]
    %v1655 = vld [vmem:[#allocation8 + $0x370] sm:$0xff]
    %v1656 = vld [vmem:[#allocation8 + $0x390] sm:$0xff]
    %v1657 = vld [vmem:[#allocation8 + $0x398] sm:$0xff]
    %v1658 = vld [vmem:[#allocation8 + $0x3a0] sm:$0xff]
    %v1659 = vld [vmem:[#allocation8 + $0x3c0] sm:$0xff]
    %v1660 = vld [vmem:[#allocation8 + $0x3c8] sm:$0xff]
    %v1661 = vld [vmem:[#allocation8 + $0x3d0] sm:$0xff]
    %v1662 = vld [vmem:[#allocation8 + $0x3f0] sm:$0xff]
    %v1663 = vld [vmem:[#allocation8 + $0x3f8] sm:$0xff]
    %v1664 = vld [vmem:[#allocation8 + $0x400] sm:$0xff]
    %v1665 = vld [vmem:[#allocation8 + $0x420] sm:$0xff]
    %v1666 = vld [vmem:[#allocation8 + $0x428] sm:$0xff]
    %v1667 = vld [vmem:[#allocation8 + $0x430] sm:$0xff]
    %v1668 = vld [vmem:[#allocation8 + $0x450] sm:$0xff]
    %v1669 = vld [vmem:[#allocation8 + $0x458] sm:$0xff]
    %v1670 = vld [vmem:[#allocation8 + $0x460] sm:$0xff]
    %v1671 = vld [vmem:[#allocation8 + $0x480] sm:$0xff]
    %v1672 = vld [vmem:[#allocation8 + $0x488] sm:$0xff]
    %v1673 = vld [vmem:[#allocation8 + $0x490] sm:$0xff]
    %v1674 = vld [vmem:[#allocation8 + $0x4b0] sm:$0xff]
    %v1675 = vld [vmem:[#allocation8 + $0x4b8] sm:$0xff]
    %v1676 = vld [vmem:[#allocation8 + $0x4c0] sm:$0xff]
    %v1677 = vld [vmem:[#allocation8 + $0x4e0] sm:$0xff]
    %v1678 = vld [vmem:[#allocation8 + $0x4e8] sm:$0xff]
    %v1679 = vld [vmem:[#allocation8 + $0x4f0] sm:$0xff]
    %v1680 = vld [vmem:[#allocation8 + $0x510] sm:$0xff]
    %v1681 = vld [vmem:[#allocation8 + $0x518] sm:$0xff]
    %v1682 = vld [vmem:[#allocation8 + $0x520] sm:$0xff]
    %v1683 = vld [vmem:[#allocation8 + $0x540] sm:$0xff]
    %v1684 = vld [vmem:[#allocation8 + $0x548] sm:$0xff]
    %v1685 = vld [vmem:[#allocation8 + $0x550] sm:$0xff]
    %v1686 = vld [vmem:[#allocation8 + $0x570] sm:$0xff]
    %v1687 = vld [vmem:[#allocation8 + $0x578] sm:$0xff]
    %v1688 = vld [vmem:[#allocation8 + $0x580] sm:$0xff]
    %v1689 = vld [vmem:[#allocation8 + $0x5a0] sm:$0xff]
    %v1690 = vld [vmem:[#allocation8 + $0x5a8] sm:$0xff]
    %v1691 = vld [vmem:[#allocation8 + $0x5b0] sm:$0xff]
    %v1692 = vld [vmem:[#allocation8 + $0x5d0] sm:$0xff]
    %v1693 = vld [vmem:[#allocation8 + $0x5d8] sm:$0xff]
    %v1694 = vld [vmem:[#allocation8 + $0x5e0] sm:$0xff]
    %s1695 = scalar_lea.vmem %s5, 3
    %v1696 = vld [vmem:[%s1695] ss:$8 sm:$0xf]
    %v1697 = vld [vmem:[%s1695] ss:$8 sm:$0x30]
    %v1698 = vor.u32 %v1696, %v1697
    %v1700 = vlaneseq
    %v1701 = vshrl.u32 %v1700, 7
    %v1702 = vsub.s32 0, %v1701
    %v1703 = vrot.slane %v1698, %v1702
    %v1704 = vlaneseq
    %v1705 = vshrl.u32 %v1704, 7
    %v1706 = vsub.s32 1, %v1705
    %v1707 = vrot.slane %v1698, %v1706
    %v1708 = vlaneseq
    %v1709 = vshrl.u32 %v1708, 7
    %v1710 = vsub.s32 2, %v1709
    %v1711 = vrot.slane %v1698, %v1710
    %v1712 = vlaneseq
    %v1713 = vshrl.u32 %v1712, 7
    %v1714 = vsub.s32 3, %v1713
    %v1715 = vrot.slane %v1698, %v1714
    %v1716 = vlaneseq
    %v1717 = vshrl.u32 %v1716, 7
    %v1718 = vsub.s32 4, %v1717
    %v1719 = vrot.slane %v1698, %v1718
    %v1720 = vlaneseq
    %v1721 = vshrl.u32 %v1720, 7
    %v1722 = vsub.s32 5, %v1721
    %v1723 = vrot.slane %v1698, %v1722
    %v1826 = vunpack.c.l.b16 %v1599
    %v1827 = vunpack.c.h.b16 %v1599
    %v1828 = vunpack.c.l.b16 %v1600
    %v1829 = vunpack.c.h.b16 %v1600
    %v1830 = vunpack.c.l.b16 %v1601
    %v1831 = vunpack.c.h.b16 %v1601
    %v1832 = vunpack.c.l.b16 %v1602
    %v1833 = vunpack.c.h.b16 %v1602
    %v1834 = vunpack.c.l.b16 %v1603
    %v1835 = vunpack.c.h.b16 %v1603
    %v1836 = vunpack.c.l.b16 %v1604
    %v1837 = vunpack.c.h.b16 %v1604
    %v1838 = vunpack.c.l.b16 %v1605
    %v1839 = vunpack.c.h.b16 %v1605
    %v1840 = vunpack.c.l.b16 %v1606
    %v1841 = vunpack.c.h.b16 %v1606
    %v1842 = vunpack.c.l.b16 %v1607
    %v1843 = vunpack.c.h.b16 %v1607
    %v1844 = vunpack.c.l.b16 %v1608
    %v1845 = vunpack.c.h.b16 %v1608
    %v1846 = vunpack.c.l.b16 %v1609
    %v1847 = vunpack.c.h.b16 %v1609
    %v1848 = vunpack.c.l.b16 %v1610
    %v1849 = vunpack.c.h.b16 %v1610
    %v1850 = vunpack.c.l.b16 %v1611
    %v1851 = vunpack.c.h.b16 %v1611
    %v1852 = vunpack.c.l.b16 %v1612
    %v1853 = vunpack.c.h.b16 %v1612
    %v1854 = vunpack.c.l.b16 %v1613
    %v1855 = vunpack.c.h.b16 %v1613
    %v1856 = vunpack.c.l.b16 %v1614
    %v1857 = vunpack.c.h.b16 %v1614
    %v1858 = vunpack.c.l.b16 %v1615
    %v1859 = vunpack.c.h.b16 %v1615
    %v1860 = vunpack.c.l.b16 %v1616
    %v1861 = vunpack.c.h.b16 %v1616
    %v1862 = vunpack.c.l.b16 %v1617
    %v1863 = vunpack.c.h.b16 %v1617
    %v1864 = vunpack.c.l.b16 %v1618
    %v1865 = vunpack.c.h.b16 %v1618
    %v1866 = vunpack.c.l.b16 %v1619
    %v1867 = vunpack.c.h.b16 %v1619
    %v1868 = vunpack.c.l.b16 %v1620
    %v1869 = vunpack.c.h.b16 %v1620
    %v1870 = vunpack.c.l.b16 %v1621
    %v1871 = vunpack.c.h.b16 %v1621
    %v1872 = vunpack.c.l.b16 %v1622
    %v1873 = vunpack.c.h.b16 %v1622
    %v1874 = vunpack.c.l.b16 %v1623
    %v1875 = vunpack.c.h.b16 %v1623
    %v1876 = vunpack.c.l.b16 %v1624
    %v1877 = vunpack.c.h.b16 %v1624
    %v1878 = vunpack.c.l.b16 %v1625
    %v1879 = vunpack.c.h.b16 %v1625
    %v1880 = vunpack.c.l.b16 %v1626
    %v1881 = vunpack.c.h.b16 %v1626
    %v1882 = vunpack.c.l.b16 %v1627
    %v1883 = vunpack.c.h.b16 %v1627
    %v1884 = vunpack.c.l.b16 %v1628
    %v1885 = vunpack.c.h.b16 %v1628
    %v1886 = vunpack.c.l.b16 %v1629
    %v1887 = vunpack.c.h.b16 %v1629
    %v1888 = vunpack.c.l.b16 %v1630
    %v1889 = vunpack.c.h.b16 %v1630
    %v1890 = vunpack.c.l.b16 %v1631
    %v1891 = vunpack.c.h.b16 %v1631
    %v1892 = vunpack.c.l.b16 %v1632
    %v1893 = vunpack.c.h.b16 %v1632
    %v1894 = vunpack.c.l.b16 %v1633
    %v1895 = vunpack.c.h.b16 %v1633
    %v1896 = vunpack.c.l.b16 %v1634
    %v1897 = vunpack.c.h.b16 %v1634
    %v1898 = vunpack.c.l.b16 %v1635
    %v1899 = vunpack.c.h.b16 %v1635
    %v1900 = vunpack.c.l.b16 %v1636
    %v1901 = vunpack.c.h.b16 %v1636
    %v1902 = vunpack.c.l.b16 %v1637
    %v1903 = vunpack.c.h.b16 %v1637
    %v1904 = vunpack.c.l.b16 %v1638
    %v1905 = vunpack.c.h.b16 %v1638
    %v1906 = vunpack.c.l.b16 %v1639
    %v1907 = vunpack.c.h.b16 %v1639
    %v1908 = vunpack.c.l.b16 %v1640
    %v1909 = vunpack.c.h.b16 %v1640
    %v1910 = vunpack.c.l.b16 %v1641
    %v1911 = vunpack.c.h.b16 %v1641
    %v1912 = vunpack.c.l.b16 %v1642
    %v1913 = vunpack.c.h.b16 %v1642
    %v1914 = vunpack.c.l.b16 %v1643
    %v1915 = vunpack.c.h.b16 %v1643
    %v1916 = vunpack.c.l.b16 %v1644
    %v1917 = vunpack.c.h.b16 %v1644
    %v1918 = vunpack.c.l.b16 %v1645
    %v1919 = vunpack.c.h.b16 %v1645
    %v1920 = vunpack.c.l.b16 %v1646
    %v1921 = vunpack.c.h.b16 %v1646
    %v1922 = vunpack.c.l.b16 %v1647
    %v1923 = vunpack.c.h.b16 %v1647
    %v1924 = vunpack.c.l.b16 %v1648
    %v1925 = vunpack.c.h.b16 %v1648
    %v1926 = vunpack.c.l.b16 %v1649
    %v1927 = vunpack.c.h.b16 %v1649
    %v1928 = vunpack.c.l.b16 %v1650
    %v1929 = vunpack.c.h.b16 %v1650
    %v1930 = vunpack.c.l.b16 %v1651
    %v1931 = vunpack.c.h.b16 %v1651
    %v1932 = vunpack.c.l.b16 %v1652
    %v1933 = vunpack.c.h.b16 %v1652
    %v1934 = vunpack.c.l.b16 %v1653
    %v1935 = vunpack.c.h.b16 %v1653
    %v1936 = vunpack.c.l.b16 %v1654
    %v1937 = vunpack.c.h.b16 %v1654
    %v1938 = vunpack.c.l.b16 %v1655
    %v1939 = vunpack.c.h.b16 %v1655
    %v1940 = vunpack.c.l.b16 %v1656
    %v1941 = vunpack.c.h.b16 %v1656
    %v1942 = vunpack.c.l.b16 %v1657
    %v1943 = vunpack.c.h.b16 %v1657
    %v1944 = vunpack.c.l.b16 %v1658
    %v1945 = vunpack.c.h.b16 %v1658
    %v1946 = vunpack.c.l.b16 %v1659
    %v1947 = vunpack.c.h.b16 %v1659
    %v1948 = vunpack.c.l.b16 %v1660
    %v1949 = vunpack.c.h.b16 %v1660
    %v1950 = vunpack.c.l.b16 %v1661
    %v1951 = vunpack.c.h.b16 %v1661
    %v1952 = vunpack.c.l.b16 %v1662
    %v1953 = vunpack.c.h.b16 %v1662
    %v1954 = vunpack.c.l.b16 %v1663
    %v1955 = vunpack.c.h.b16 %v1663
    %v1956 = vunpack.c.l.b16 %v1664
    %v1957 = vunpack.c.h.b16 %v1664
    %v1958 = vunpack.c.l.b16 %v1665
    %v1959 = vunpack.c.h.b16 %v1665
    %v1960 = vunpack.c.l.b16 %v1666
    %v1961 = vunpack.c.h.b16 %v1666
    %v1962 = vunpack.c.l.b16 %v1667
    %v1963 = vunpack.c.h.b16 %v1667
    %v1964 = vunpack.c.l.b16 %v1668
    %v1965 = vunpack.c.h.b16 %v1668
    %v1966 = vunpack.c.l.b16 %v1669
    %v1967 = vunpack.c.h.b16 %v1669
    %v1968 = vunpack.c.l.b16 %v1670
    %v1969 = vunpack.c.h.b16 %v1670
    %v1970 = vunpack.c.l.b16 %v1671
    %v1971 = vunpack.c.h.b16 %v1671
    %v1972 = vunpack.c.l.b16 %v1672
    %v1973 = vunpack.c.h.b16 %v1672
    %v1974 = vunpack.c.l.b16 %v1673
    %v1975 = vunpack.c.h.b16 %v1673
    %v1976 = vunpack.c.l.b16 %v1674
    %v1977 = vunpack.c.h.b16 %v1674
    %v1978 = vunpack.c.l.b16 %v1675
    %v1979 = vunpack.c.h.b16 %v1675
    %v1980 = vunpack.c.l.b16 %v1676
    %v1981 = vunpack.c.h.b16 %v1676
    %v1982 = vunpack.c.l.b16 %v1677
    %v1983 = vunpack.c.h.b16 %v1677
    %v1984 = vunpack.c.l.b16 %v1678
    %v1985 = vunpack.c.h.b16 %v1678
    %v1986 = vunpack.c.l.b16 %v1679
    %v1987 = vunpack.c.h.b16 %v1679
    %v1988 = vunpack.c.l.b16 %v1680
    %v1989 = vunpack.c.h.b16 %v1680
    %v1990 = vunpack.c.l.b16 %v1681
    %v1991 = vunpack.c.h.b16 %v1681
    %v1992 = vunpack.c.l.b16 %v1682
    %v1993 = vunpack.c.h.b16 %v1682
    %v1994 = vunpack.c.l.b16 %v1683
    %v1995 = vunpack.c.h.b16 %v1683
    %v1996 = vunpack.c.l.b16 %v1684
    %v1997 = vunpack.c.h.b16 %v1684
    %v1998 = vunpack.c.l.b16 %v1685
    %v1999 = vunpack.c.h.b16 %v1685
    %v2000 = vunpack.c.l.b16 %v1686
    %v2001 = vunpack.c.h.b16 %v1686
    %v2002 = vunpack.c.l.b16 %v1687
    %v2003 = vunpack.c.h.b16 %v1687
    %v2004 = vunpack.c.l.b16 %v1688
    %v2005 = vunpack.c.h.b16 %v1688
    %v2006 = vunpack.c.l.b16 %v1689
    %v2007 = vunpack.c.h.b16 %v1689
    %v2008 = vunpack.c.l.b16 %v1690
    %v2009 = vunpack.c.h.b16 %v1690
    %v2010 = vunpack.c.l.b16 %v1691
    %v2011 = vunpack.c.h.b16 %v1691
    %v2012 = vunpack.c.l.b16 %v1692
    %v2013 = vunpack.c.h.b16 %v1692
    %v2014 = vunpack.c.l.b16 %v1693
    %v2015 = vunpack.c.h.b16 %v1693
    %v2016 = vunpack.c.l.b16 %v1694
    %v2017 = vunpack.c.h.b16 %v1694
    %v2018 = vpack.c.b16 %v1832, %v1826
    %v2019 = vpack.c.b16 %v1833, %v1827
    %v2020 = vpack.c.b16 %v1834, %v1828
    %v2021 = vpack.c.b16 %v1835, %v1829
    %v2022 = vpack.c.b16 %v1836, %v1830
    %v2023 = vpack.c.b16 %v1837, %v1831
    %v2024 = vpack.c.b16 %v1844, %v1838
    %v2025 = vpack.c.b16 %v1845, %v1839
    %v2026 = vpack.c.b16 %v1846, %v1840
    %v2027 = vpack.c.b16 %v1847, %v1841
    %v2028 = vpack.c.b16 %v1848, %v1842
    %v2029 = vpack.c.b16 %v1849, %v1843
    %v2030 = vpack.c.b16 %v1856, %v1850
    %v2031 = vpack.c.b16 %v1857, %v1851
    %v2032 = vpack.c.b16 %v1858, %v1852
    %v2033 = vpack.c.b16 %v1859, %v1853
    %v2034 = vpack.c.b16 %v1860, %v1854
    %v2035 = vpack.c.b16 %v1861, %v1855
    %v2036 = vpack.c.b16 %v1868, %v1862
    %v2037 = vpack.c.b16 %v1869, %v1863
    %v2038 = vpack.c.b16 %v1870, %v1864
    %v2039 = vpack.c.b16 %v1871, %v1865
    %v2040 = vpack.c.b16 %v1872, %v1866
    %v2041 = vpack.c.b16 %v1873, %v1867
    %v2042 = vpack.c.b16 %v1880, %v1874
    %v2043 = vpack.c.b16 %v1881, %v1875
    %v2044 = vpack.c.b16 %v1882, %v1876
    %v2045 = vpack.c.b16 %v1883, %v1877
    %v2046 = vpack.c.b16 %v1884, %v1878
    %v2047 = vpack.c.b16 %v1885, %v1879
    %v2048 = vpack.c.b16 %v1892, %v1886
    %v2049 = vpack.c.b16 %v1893, %v1887
    %v2050 = vpack.c.b16 %v1894, %v1888
    %v2051 = vpack.c.b16 %v1895, %v1889
    %v2052 = vpack.c.b16 %v1896, %v1890
    %v2053 = vpack.c.b16 %v1897, %v1891
    %v2054 = vpack.c.b16 %v1904, %v1898
    %v2055 = vpack.c.b16 %v1905, %v1899
    %v2056 = vpack.c.b16 %v1906, %v1900
    %v2057 = vpack.c.b16 %v1907, %v1901
    %v2058 = vpack.c.b16 %v1908, %v1902
    %v2059 = vpack.c.b16 %v1909, %v1903
    %v2060 = vpack.c.b16 %v1916, %v1910
    %v2061 = vpack.c.b16 %v1917, %v1911
    %v2062 = vpack.c.b16 %v1918, %v1912
    %v2063 = vpack.c.b16 %v1919, %v1913
    %v2064 = vpack.c.b16 %v1920, %v1914
    %v2065 = vpack.c.b16 %v1921, %v1915
    %v2066 = vpack.c.b16 %v1928, %v1922
    %v2067 = vpack.c.b16 %v1929, %v1923
    %v2068 = vpack.c.b16 %v1930, %v1924
    %v2069 = vpack.c.b16 %v1931, %v1925
    %v2070 = vpack.c.b16 %v1932, %v1926
    %v2071 = vpack.c.b16 %v1933, %v1927
    %v2072 = vpack.c.b16 %v1940, %v1934
    %v2073 = vpack.c.b16 %v1941, %v1935
    %v2074 = vpack.c.b16 %v1942, %v1936
    %v2075 = vpack.c.b16 %v1943, %v1937
    %v2076 = vpack.c.b16 %v1944, %v1938
    %v2077 = vpack.c.b16 %v1945, %v1939
    %v2078 = vpack.c.b16 %v1952, %v1946
    %v2079 = vpack.c.b16 %v1953, %v1947
    %v2080 = vpack.c.b16 %v1954, %v1948
    %v2081 = vpack.c.b16 %v1955, %v1949
    %v2082 = vpack.c.b16 %v1956, %v1950
    %v2083 = vpack.c.b16 %v1957, %v1951
    %v2084 = vpack.c.b16 %v1964, %v1958
    %v2085 = vpack.c.b16 %v1965, %v1959
    %v2086 = vpack.c.b16 %v1966, %v1960
    %v2087 = vpack.c.b16 %v1967, %v1961
    %v2088 = vpack.c.b16 %v1968, %v1962
    %v2089 = vpack.c.b16 %v1969, %v1963
    %v2090 = vpack.c.b16 %v1976, %v1970
    %v2091 = vpack.c.b16 %v1977, %v1971
    %v2092 = vpack.c.b16 %v1978, %v1972
    %v2093 = vpack.c.b16 %v1979, %v1973
    %v2094 = vpack.c.b16 %v1980, %v1974
    %v2095 = vpack.c.b16 %v1981, %v1975
    %v2096 = vpack.c.b16 %v1988, %v1982
    %v2097 = vpack.c.b16 %v1989, %v1983
    %v2098 = vpack.c.b16 %v1990, %v1984
    %v2099 = vpack.c.b16 %v1991, %v1985
    %v2100 = vpack.c.b16 %v1992, %v1986
    %v2101 = vpack.c.b16 %v1993, %v1987
    %v2102 = vpack.c.b16 %v2000, %v1994
    %v2103 = vpack.c.b16 %v2001, %v1995
    %v2104 = vpack.c.b16 %v2002, %v1996
    %v2105 = vpack.c.b16 %v2003, %v1997
    %v2106 = vpack.c.b16 %v2004, %v1998
    %v2107 = vpack.c.b16 %v2005, %v1999
    %v2108 = vpack.c.b16 %v2012, %v2006
    %v2109 = vpack.c.b16 %v2013, %v2007
    %v2110 = vpack.c.b16 %v2014, %v2008
    %v2111 = vpack.c.b16 %v2015, %v2009
    %v2112 = vpack.c.b16 %v2016, %v2010
    %v2113 = vpack.c.b16 %v2017, %v2011
    %2210 = vmatprep.subr.bf16.mxu0 %v2019
    %2211 = vmatpush1.bf16.msra.mxu0 %v2018
    %2212 = vmatprep.subr.bf16.mxu0 %v2025
    %2213 = vmatpush1.bf16.msra.mxu0 %v2024
    %2214 = vmatprep.subr.bf16.mxu0 %v2031
    %2215 = vmatpush1.bf16.msra.mxu0 %v2030
    %2216 = vmatprep.subr.bf16.mxu0 %v2037
    %2217 = vmatpush1.bf16.msra.mxu0 %v2036
    %2218 = vmatprep.subr.bf16.mxu0 %v2043
    %2219 = vmatpush1.bf16.msra.mxu0 %v2042
    %2220 = vmatprep.subr.bf16.mxu0 %v2049
    %2221 = vmatpush1.bf16.msra.mxu0 %v2048
    %2222 = vmatprep.subr.bf16.mxu0 %v2055
    %2223 = vmatpush1.bf16.msra.mxu0 %v2054
    %2224 = vmatprep.subr.bf16.mxu0 %v2061
    %2225 = vmatpush1.bf16.msra.mxu0 %v2060
    %2226 = vmatprep.subr.bf16.mxu0 %v2067
    %2227 = vmatpush1.bf16.msra.mxu0 %v2066
    %2228 = vmatprep.subr.bf16.mxu0 %v2073
    %2229 = vmatpush1.bf16.msra.mxu0 %v2072
    %2230 = vmatprep.subr.bf16.mxu0 %v2079
    %2231 = vmatpush1.bf16.msra.mxu0 %v2078
    %2232 = vmatprep.subr.bf16.mxu0 %v2085
    %2233 = vmatpush1.bf16.msra.mxu0 %v2084
    %2234 = vmatprep.subr.bf16.mxu0 %v2091
    %2235 = vmatpush1.bf16.msra.mxu0 %v2090
    %2236 = vmatprep.subr.bf16.mxu0 %v2097
    %2237 = vmatpush1.bf16.msra.mxu0 %v2096
    %2238 = vmatprep.subr.bf16.mxu0 %v2103
    %2239 = vmatpush1.bf16.msra.mxu0 %v2102
    %2240 = vmatprep.subr.bf16.mxu0 %v2109
    %2241 = vmatpush1.bf16.msra.mxu0 %v2108
    %2242 = vmatprep.mubr.bf16.mxu0 %v1598
    %2243 = vmatmul.mubr.bf16.gmra.mrb[0].mxu0 %v1597
    %v2244 = vpop.f32.mrb[0].mxu0
    %v2245 = vadd.f32 %v1703, %v2244
    %v2246 = vpop.f32.mrb[0].mxu0
    %v2247 = vadd.f32 %v1707, %v2246
    %v2248 = vpop.f32.mrb[0].mxu0
    %v2249 = vadd.f32 %v1703, %v2248
    %v2250 = vpop.f32.mrb[0].mxu0
    %v2251 = vadd.f32 %v1707, %v2250
    %2252 = vdwg.mxu0
    %2253 = vmatprep.subr.bf16.mxu0 %v2021
    %2254 = vmatpush1.bf16.msra.mxu0 %v2020
    %2255 = vmatprep.subr.bf16.mxu0 %v2027
    %2256 = vmatpush1.bf16.msra.mxu0 %v2026
    %2257 = vmatprep.subr.bf16.mxu0 %v2033
    %2258 = vmatpush1.bf16.msra.mxu0 %v2032
    %2259 = vmatprep.subr.bf16.mxu0 %v2039
    %2260 = vmatpush1.bf16.msra.mxu0 %v2038
    %2261 = vmatprep.subr.bf16.mxu0 %v2045
    %2262 = vmatpush1.bf16.msra.mxu0 %v2044
    %2263 = vmatprep.subr.bf16.mxu0 %v2051
    %2264 = vmatpush1.bf16.msra.mxu0 %v2050
    %2265 = vmatprep.subr.bf16.mxu0 %v2057
    %2266 = vmatpush1.bf16.msra.mxu0 %v2056
    %2267 = vmatprep.subr.bf16.mxu0 %v2063
    %2268 = vmatpush1.bf16.msra.mxu0 %v2062
    %2269 = vmatprep.subr.bf16.mxu0 %v2069
    %2270 = vmatpush1.bf16.msra.mxu0 %v2068
    %2271 = vmatprep.subr.bf16.mxu0 %v2075
    %2272 = vmatpush1.bf16.msra.mxu0 %v2074
    %2273 = vmatprep.subr.bf16.mxu0 %v2081
    %2274 = vmatpush1.bf16.msra.mxu0 %v2080
    %2275 = vmatprep.subr.bf16.mxu0 %v2087
    %2276 = vmatpush1.bf16.msra.mxu0 %v2086
    %2277 = vmatprep.subr.bf16.mxu0 %v2093
    %2278 = vmatpush1.bf16.msra.mxu0 %v2092
    %2279 = vmatprep.subr.bf16.mxu0 %v2099
    %2280 = vmatpush1.bf16.msra.mxu0 %v2098
    %2281 = vmatprep.subr.bf16.mxu0 %v2105
    %2282 = vmatpush1.bf16.msra.mxu0 %v2104
    %2283 = vmatprep.subr.bf16.mxu0 %v2111
    %2284 = vmatpush1.bf16.msra.mxu0 %v2110
    %2285 = vmatprep.mubr.bf16.mxu0 %v1598
    %2286 = vmatmul.mubr.bf16.gmra.mrb[0].mxu0 %v1597
    %v2287 = vpop.f32.mrb[0].mxu0
    %v2288 = vadd.f32 %v1711, %v2287
    %v2289 = vpop.f32.mrb[0].mxu0
    %v2290 = vadd.f32 %v1715, %v2289
    %v2291 = vpop.f32.mrb[0].mxu0
    %v2292 = vadd.f32 %v1711, %v2291
    %v2293 = vpop.f32.mrb[0].mxu0
    %v2294 = vadd.f32 %v1715, %v2293
    %2295 = vdwg.mxu0
    %2296 = vmatprep.subr.bf16.mxu0 %v2023
    %2297 = vmatpush1.bf16.msra.mxu0 %v2022
    %2298 = vmatprep.subr.bf16.mxu0 %v2029
    %2299 = vmatpush1.bf16.msra.mxu0 %v2028
    %2300 = vmatprep.subr.bf16.mxu0 %v2035
    %2301 = vmatpush1.bf16.msra.mxu0 %v2034
    %2302 = vmatprep.subr.bf16.mxu0 %v2041
    %2303 = vmatpush1.bf16.msra.mxu0 %v2040
    %2304 = vmatprep.subr.bf16.mxu0 %v2047
    %2305 = vmatpush1.bf16.msra.mxu0 %v2046
    %2306 = vmatprep.subr.bf16.mxu0 %v2053
    %2307 = vmatpush1.bf16.msra.mxu0 %v2052
    %2308 = vmatprep.subr.bf16.mxu0 %v2059
    %2309 = vmatpush1.bf16.msra.mxu0 %v2058
    %2310 = vmatprep.subr.bf16.mxu0 %v2065
    %2311 = vmatpush1.bf16.msra.mxu0 %v2064
    %2312 = vmatprep.subr.bf16.mxu0 %v2071
    %2313 = vmatpush1.bf16.msra.mxu0 %v2070
    %2314 = vmatprep.subr.bf16.mxu0 %v2077
    %2315 = vmatpush1.bf16.msra.mxu0 %v2076
    %2316 = vmatprep.subr.bf16.mxu0 %v2083
    %2317 = vmatpush1.bf16.msra.mxu0 %v2082
    %2318 = vmatprep.subr.bf16.mxu0 %v2089
    %2319 = vmatpush1.bf16.msra.mxu0 %v2088
    %2320 = vmatprep.subr.bf16.mxu0 %v2095
    %2321 = vmatpush1.bf16.msra.mxu0 %v2094
    %2322 = vmatprep.subr.bf16.mxu0 %v2101
    %2323 = vmatpush1.bf16.msra.mxu0 %v2100
    %2324 = vmatprep.subr.bf16.mxu0 %v2107
    %2325 = vmatpush1.bf16.msra.mxu0 %v2106
    %2326 = vmatprep.subr.bf16.mxu0 %v2113
    %2327 = vmatpush1.bf16.msra.mxu0 %v2112
    %2328 = vmatprep.mubr.bf16.mxu0 %v1598
    %2329 = vmatmul.mubr.bf16.gmra.mrb[0].mxu0 %v1597
    %v2330 = vpop.f32.mrb[0].mxu0
    %v2331 = vadd.f32 %v1719, %v2330
    %v2332 = vpop.f32.mrb[0].mxu0
    %v2333 = vadd.f32 %v1723, %v2332
    %v2334 = vpop.f32.mrb[0].mxu0
    %v2335 = vadd.f32 %v1719, %v2334
    %v2336 = vpop.f32.mrb[0].mxu0
    %v2337 = vadd.f32 %v1723, %v2336
    %2338 = vdwg.mxu0
    %v2339 = vpack.c.bf16 %v2249, %v2245
    %v2340 = vpack.c.bf16 %v2251, %v2247
    %v2341 = vpack.c.bf16 %v2292, %v2288
    %v2342 = vpack.c.bf16 %v2294, %v2290
    %v2343 = vpack.c.bf16 %v2335, %v2331
    %v2344 = vpack.c.bf16 %v2337, %v2333
    %vm2345 = vcmask 523264
    %v2347 = vsel %vm2345, %v2339, 0
    %v2350 = vsel %vm2345, %v2341, 0
    %2352 = vmatprep.subr.bf16.mxu0 0
    %2353 = vmatpush1.bf16.xpose.msra.mxu0 %v2350
    %2354 = vmatprep.subr.bf16.mxu0 0
    %2355 = vmatpush1.bf16.xpose.msra.mxu0 0
    %2356 = vmatprep.subr.bf16.mxu0 0
    %2357 = vmatpush1.bf16.xpose.msra.mxu0 0
    %2358 = vmatprep.subr.bf16.mxu0 0
    %2359 = vmatpush1.bf16.xpose.msra.mxu0 0
    %2360 = vmatprep.subr.bf16.mxu0 0
    %2361 = vmatpush1.bf16.xpose.msra.mxu0 0
    %2362 = vmatprep.subr.bf16.mxu0 0
    %2363 = vmatpush1.bf16.xpose.msra.mxu0 0
    %2364 = vmatprep.subr.bf16.mxu0 0
    %2365 = vmatpush1.bf16.xpose.msra.mxu0 0
    %2366 = vmatprep.subr.bf16.mxu0 0
    %2367 = vmatpush1.bf16.xpose.msra.mxu0 0
    %2368 = vmatprep.subr.bf16.mxu0 0
    %2369 = vmatpush1.bf16.xpose.msra.mxu0 0
    %2370 = vmatprep.subr.bf16.mxu0 0
    %2371 = vmatpush1.bf16.xpose.msra.mxu0 0
    %2372 = vmatprep.subr.bf16.mxu0 0
    %2373 = vmatpush1.bf16.xpose.msra.mxu0 0
    %2374 = vmatprep.subr.bf16.mxu0 0
    %2375 = vmatpush1.bf16.xpose.msra.mxu0 0
    %2376 = vmatprep.subr.bf16.mxu0 0
    %2377 = vmatpush1.bf16.xpose.msra.mxu0 0
    %2378 = vmatprep.subr.bf16.mxu0 0
    %2379 = vmatpush1.bf16.xpose.msra.mxu0 0
    %2380 = vmatprep.subr.bf16.mxu0 0
    %2381 = vmatpush1.bf16.xpose.msra.mxu0 0
    %2382 = vmatprep.subr.bf16.mxu0 0
    %2383 = vmatpush1.bf16.xpose.msra.mxu0 0
    %2384 = vmatprep.mubr.bf16.mxu0 0
    %2385 = vmatmul.mubr.bf16.gmra.mrb[0].mxu0 %v2347
    %v2386 = vpop.f32.mrb[0].mxu0
    %v2387 = vadd.f32 0.0, %v2386
    %v2388 = vpop.f32.mrb[0].mxu0
    %v2389 = vpop.f32.mrb[0].mxu0
    %v2390 = vpop.f32.mrb[0].mxu0
    %2391 = vdwg.mxu0
    %vm2392 = vcmask 64512
    %v2393 = vsel %vm2392, %v2387, -inf
    %2394 = vmax.xlane.f32.xlu0 %v2393
    %v2395 = vpop.xlane.xlu0 %2394
    %v2396 = vsub.f32 %v2387, %v2395
    %v2397 = vmul.f32 %v2396, 1.442695
    %v2398 = vpow.pop %v2397
    %v2399 = vsel %vm2392, %v2398, 0.0
    %2400 = vadd.xlane.f32.xlu0 %v2399
    %v2401 = vpop.xlane.xlu0 %2400
    %v2402 = vpack.c.bf16 %v2398, %v2398
    %v2404 = vsel %vm2392, %v2402, 0
    %vm2406 = vcmask 1043456
    %v2408 = vsel %vm2406, %v2343, 0
    %2410 = vmatprep.subr.bf16.mxu0 0
    %2411 = vmatpush1.bf16.msra.mxu0 %v2408
    %2412 = vmatprep.subr.bf16.mxu0 0
    %2413 = vmatpush1.bf16.msra.mxu0 0
    %2414 = vmatprep.subr.bf16.mxu0 0
    %2415 = vmatpush1.bf16.msra.mxu0 0
    %2416 = vmatprep.subr.bf16.mxu0 0
    %2417 = vmatpush1.bf16.msra.mxu0 0
    %2418 = vmatprep.subr.bf16.mxu0 0
    %2419 = vmatpush1.bf16.msra.mxu0 0
    %2420 = vmatprep.subr.bf16.mxu0 0
    %2421 = vmatpush1.bf16.msra.mxu0 0
    %2422 = vmatprep.subr.bf16.mxu0 0
    %2423 = vmatpush1.bf16.msra.mxu0 0
    %2424 = vmatprep.subr.bf16.mxu0 0
    %2425 = vmatpush1.bf16.msra.mxu0 0
    %2426 = vmatprep.subr.bf16.mxu0 0
    %2427 = vmatpush1.bf16.msra.mxu0 0
    %2428 = vmatprep.subr.bf16.mxu0 0
    %2429 = vmatpush1.bf16.msra.mxu0 0
    %2430 = vmatprep.subr.bf16.mxu0 0
    %2431 = vmatpush1.bf16.msra.mxu0 0
    %2432 = vmatprep.subr.bf16.mxu0 0
    %2433 = vmatpush1.bf16.msra.mxu0 0
    %2434 = vmatprep.subr.bf16.mxu0 0
    %2435 = vmatpush1.bf16.msra.mxu0 0
    %2436 = vmatprep.subr.bf16.mxu0 0
    %2437 = vmatpush1.bf16.msra.mxu0 0
    %2438 = vmatprep.subr.bf16.mxu0 0
    %2439 = vmatpush1.bf16.msra.mxu0 0
    %2440 = vmatprep.subr.bf16.mxu0 0
    %2441 = vmatpush1.bf16.msra.mxu0 0
    %2442 = vmatprep.mubr.bf16.mxu0 0
    %2443 = vmatmul.mubr.bf16.gmra.mrb[0].mxu0 %v2404
    %v2444 = vpop.f32.mrb[0].mxu0
    %v2445 = vadd.f32 0.0, %v2444
    %v2446 = vpop.f32.mrb[0].mxu0
    %v2447 = vpop.f32.mrb[0].mxu0
    %v2448 = vpop.f32.mrb[0].mxu0
    %2449 = vdwg.mxu0
    %v2450 = vrcp.pop %v2401
    %v2451 = vmul.f32 %v2445, %v2450
    %2453 = vrot.lane.b32.xlu0 %v2339, 64
    %v2454 = vpop.permute.xlu0 %2453
    %2456 = vrot.lane.b32.xlu0 %v2341, 64
    %v2457 = vpop.permute.xlu0 %2456
    %v2459 = vsel %vm2345, %v2454, 0
    %v2462 = vsel %vm2345, %v2457, 0
    %2464 = vmatprep.subr.bf16.mxu0 0
    %2465 = vmatpush1.bf16.xpose.msra.mxu0 %v2462
    %2466 = vmatprep.subr.bf16.mxu0 0
    %2467 = vmatpush1.bf16.xpose.msra.mxu0 0
    %2468 = vmatprep.subr.bf16.mxu0 0
    %2469 = vmatpush1.bf16.xpose.msra.mxu0 0
    %2470 = vmatprep.subr.bf16.mxu0 0
    %2471 = vmatpush1.bf16.xpose.msra.mxu0 0
    %2472 = vmatprep.subr.bf16.mxu0 0
    %2473 = vmatpush1.bf16.xpose.msra.mxu0 0
    %2474 = vmatprep.subr.bf16.mxu0 0
    %2475 = vmatpush1.bf16.xpose.msra.mxu0 0
    %2476 = vmatprep.subr.bf16.mxu0 0
    %2477 = vmatpush1.bf16.xpose.msra.mxu0 0
    %2478 = vmatprep.subr.bf16.mxu0 0
    %2479 = vmatpush1.bf16.xpose.msra.mxu0 0
    %2480 = vmatprep.subr.bf16.mxu0 0
    %2481 = vmatpush1.bf16.xpose.msra.mxu0 0
    %2482 = vmatprep.subr.bf16.mxu0 0
    %2483 = vmatpush1.bf16.xpose.msra.mxu0 0
    %2484 = vmatprep.subr.bf16.mxu0 0
    %2485 = vmatpush1.bf16.xpose.msra.mxu0 0
    %2486 = vmatprep.subr.bf16.mxu0 0
    %2487 = vmatpush1.bf16.xpose.msra.mxu0 0
    %2488 = vmatprep.subr.bf16.mxu0 0
    %2489 = vmatpush1.bf16.xpose.msra.mxu0 0
    %2490 = vmatprep.subr.bf16.mxu0 0
    %2491 = vmatpush1.bf16.xpose.msra.mxu0 0
    %2492 = vmatprep.subr.bf16.mxu0 0
    %2493 = vmatpush1.bf16.xpose.msra.mxu0 0
    %2494 = vmatprep.subr.bf16.mxu0 0
    %2495 = vmatpush1.bf16.xpose.msra.mxu0 0
    %2496 = vmatprep.mubr.bf16.mxu0 0
    %2497 = vmatmul.mubr.bf16.gmra.mrb[0].mxu0 %v2459
    %v2498 = vpop.f32.mrb[0].mxu0
    %v2499 = vadd.f32 0.0, %v2498
    %v2500 = vpop.f32.mrb[0].mxu0
    %v2501 = vpop.f32.mrb[0].mxu0
    %v2502 = vpop.f32.mrb[0].mxu0
    %2503 = vdwg.mxu0
    %v2504 = vsel %vm2392, %v2499, -inf
    %2505 = vmax.xlane.f32.xlu0 %v2504
    %v2506 = vpop.xlane.xlu0 %2505
    %v2507 = vsub.f32 %v2499, %v2506
    %v2508 = vmul.f32 %v2507, 1.442695
    %v2509 = vpow.pop %v2508
    %v2510 = vsel %vm2392, %v2509, 0.0
    %2511 = vadd.xlane.f32.xlu0 %v2510
    %v2512 = vpop.xlane.xlu0 %2511
    %v2513 = vpack.c.bf16 %v2509, %v2509
    %2515 = vrot.lane.b32.xlu0 %v2343, 64
    %v2516 = vpop.permute.xlu0 %2515
    %v2518 = vsel %vm2392, %v2513, 0
    %v2521 = vsel %vm2406, %v2516, 0
    %2523 = vmatprep.subr.bf16.mxu0 0
    %2524 = vmatpush1.bf16.msra.mxu0 %v2521
    %2525 = vmatprep.subr.bf16.mxu0 0
    %2526 = vmatpush1.bf16.msra.mxu0 0
    %2527 = vmatprep.subr.bf16.mxu0 0
    %2528 = vmatpush1.bf16.msra.mxu0 0
    %2529 = vmatprep.subr.bf16.mxu0 0
    %2530 = vmatpush1.bf16.msra.mxu0 0
    %2531 = vmatprep.subr.bf16.mxu0 0
    %2532 = vmatpush1.bf16.msra.mxu0 0
    %2533 = vmatprep.subr.bf16.mxu0 0
    %2534 = vmatpush1.bf16.msra.mxu0 0
    %2535 = vmatprep.subr.bf16.mxu0 0
    %2536 = vmatpush1.bf16.msra.mxu0 0
    %2537 = vmatprep.subr.bf16.mxu0 0
    %2538 = vmatpush1.bf16.msra.mxu0 0
    %2539 = vmatprep.subr.bf16.mxu0 0
    %2540 = vmatpush1.bf16.msra.mxu0 0
    %2541 = vmatprep.subr.bf16.mxu0 0
    %2542 = vmatpush1.bf16.msra.mxu0 0
    %2543 = vmatprep.subr.bf16.mxu0 0
    %2544 = vmatpush1.bf16.msra.mxu0 0
    %2545 = vmatprep.subr.bf16.mxu0 0
    %2546 = vmatpush1.bf16.msra.mxu0 0
    %2547 = vmatprep.subr.bf16.mxu0 0
    %2548 = vmatpush1.bf16.msra.mxu0 0
    %2549 = vmatprep.subr.bf16.mxu0 0
    %2550 = vmatpush1.bf16.msra.mxu0 0
    %2551 = vmatprep.subr.bf16.mxu0 0
    %2552 = vmatpush1.bf16.msra.mxu0 0
    %2553 = vmatprep.subr.bf16.mxu0 0
    %2554 = vmatpush1.bf16.msra.mxu0 0
    %2555 = vmatprep.mubr.bf16.mxu0 0
    %2556 = vmatmul.mubr.bf16.gmra.mrb[0].mxu0 %v2518
    %v2557 = vpop.f32.mrb[0].mxu0
    %v2558 = vadd.f32 0.0, %v2557
    %v2559 = vpop.f32.mrb[0].mxu0
    %v2560 = vpop.f32.mrb[0].mxu0
    %v2561 = vpop.f32.mrb[0].mxu0
    %2562 = vdwg.mxu0
    %v2563 = vrcp.pop %v2512
    %v2564 = vmul.f32 %v2558, %v2563
    %v2566 = vsel %vm2345, %v2340, 0
    %v2569 = vsel %vm2345, %v2342, 0
    %2571 = vmatprep.subr.bf16.mxu0 0
    %2572 = vmatpush1.bf16.xpose.msra.mxu0 %v2569
    %2573 = vmatprep.subr.bf16.mxu0 0
    %2574 = vmatpush1.bf16.xpose.msra.mxu0 0
    %2575 = vmatprep.subr.bf16.mxu0 0
    %2576 = vmatpush1.bf16.xpose.msra.mxu0 0
    %2577 = vmatprep.subr.bf16.mxu0 0
    %2578 = vmatpush1.bf16.xpose.msra.mxu0 0
    %2579 = vmatprep.subr.bf16.mxu0 0
    %2580 = vmatpush1.bf16.xpose.msra.mxu0 0
    %2581 = vmatprep.subr.bf16.mxu0 0
    %2582 = vmatpush1.bf16.xpose.msra.mxu0 0
    %2583 = vmatprep.subr.bf16.mxu0 0
    %2584 = vmatpush1.bf16.xpose.msra.mxu0 0
    %2585 = vmatprep.subr.bf16.mxu0 0
    %2586 = vmatpush1.bf16.xpose.msra.mxu0 0
    %2587 = vmatprep.subr.bf16.mxu0 0
    %2588 = vmatpush1.bf16.xpose.msra.mxu0 0
    %2589 = vmatprep.subr.bf16.mxu0 0
    %2590 = vmatpush1.bf16.xpose.msra.mxu0 0
    %2591 = vmatprep.subr.bf16.mxu0 0
    %2592 = vmatpush1.bf16.xpose.msra.mxu0 0
    %2593 = vmatprep.subr.bf16.mxu0 0
    %2594 = vmatpush1.bf16.xpose.msra.mxu0 0
    %2595 = vmatprep.subr.bf16.mxu0 0
    %2596 = vmatpush1.bf16.xpose.msra.mxu0 0
    %2597 = vmatprep.subr.bf16.mxu0 0
    %2598 = vmatpush1.bf16.xpose.msra.mxu0 0
    %2599 = vmatprep.subr.bf16.mxu0 0
    %2600 = vmatpush1.bf16.xpose.msra.mxu0 0
    %2601 = vmatprep.subr.bf16.mxu0 0
    %2602 = vmatpush1.bf16.xpose.msra.mxu0 0
    %2603 = vmatprep.mubr.bf16.mxu0 0
    %2604 = vmatmul.mubr.bf16.gmra.mrb[0].mxu0 %v2566
    %v2605 = vpop.f32.mrb[0].mxu0
    %v2606 = vadd.f32 0.0, %v2605
    %v2607 = vpop.f32.mrb[0].mxu0
    %v2608 = vpop.f32.mrb[0].mxu0
    %v2609 = vpop.f32.mrb[0].mxu0
    %2610 = vdwg.mxu0
    %v2611 = vsel %vm2392, %v2606, -inf
    %2612 = vmax.xlane.f32.xlu0 %v2611
    %v2613 = vpop.xlane.xlu0 %2612
    %v2614 = vsub.f32 %v2606, %v2613
    %v2615 = vmul.f32 %v2614, 1.442695
    %v2616 = vpow.pop %v2615
    %v2617 = vsel %vm2392, %v2616, 0.0
    %2618 = vadd.xlane.f32.xlu0 %v2617
    %v2619 = vpop.xlane.xlu0 %2618
    %v2620 = vpack.c.bf16 %v2616, %v2616
    %v2622 = vsel %vm2392, %v2620, 0
    %v2625 = vsel %vm2406, %v2344, 0
    %2627 = vmatprep.subr.bf16.mxu0 0
    %2628 = vmatpush1.bf16.msra.mxu0 %v2625
    %2629 = vmatprep.subr.bf16.mxu0 0
    %2630 = vmatpush1.bf16.msra.mxu0 0
    %2631 = vmatprep.subr.bf16.mxu0 0
    %2632 = vmatpush1.bf16.msra.mxu0 0
    %2633 = vmatprep.subr.bf16.mxu0 0
    %2634 = vmatpush1.bf16.msra.mxu0 0
    %2635 = vmatprep.subr.bf16.mxu0 0
    %2636 = vmatpush1.bf16.msra.mxu0 0
    %2637 = vmatprep.subr.bf16.mxu0 0
    %2638 = vmatpush1.bf16.msra.mxu0 0
    %2639 = vmatprep.subr.bf16.mxu0 0
    %2640 = vmatpush1.bf16.msra.mxu0 0
    %2641 = vmatprep.subr.bf16.mxu0 0
    %2642 = vmatpush1.bf16.msra.mxu0 0
    %2643 = vmatprep.subr.bf16.mxu0 0
    %2644 = vmatpush1.bf16.msra.mxu0 0
    %2645 = vmatprep.subr.bf16.mxu0 0
    %2646 = vmatpush1.bf16.msra.mxu0 0
    %2647 = vmatprep.subr.bf16.mxu0 0
    %2648 = vmatpush1.bf16.msra.mxu0 0
    %2649 = vmatprep.subr.bf16.mxu0 0
    %2650 = vmatpush1.bf16.msra.mxu0 0
    %2651 = vmatprep.subr.bf16.mxu0 0
    %2652 = vmatpush1.bf16.msra.mxu0 0
    %2653 = vmatprep.subr.bf16.mxu0 0
    %2654 = vmatpush1.bf16.msra.mxu0 0
    %2655 = vmatprep.subr.bf16.mxu0 0
    %2656 = vmatpush1.bf16.msra.mxu0 0
    %2657 = vmatprep.subr.bf16.mxu0 0
    %2658 = vmatpush1.bf16.msra.mxu0 0
    %2659 = vmatprep.mubr.bf16.mxu0 0
    %2660 = vmatmul.mubr.bf16.gmra.mrb[0].mxu0 %v2622
    %v2661 = vpop.f32.mrb[0].mxu0
    %v2662 = vadd.f32 0.0, %v2661
    %v2663 = vpop.f32.mrb[0].mxu0
    %v2664 = vpop.f32.mrb[0].mxu0
    %v2665 = vpop.f32.mrb[0].mxu0
    %2666 = vdwg.mxu0
    %v2667 = vrcp.pop %v2619
    %v2668 = vmul.f32 %v2662, %v2667
    %2670 = vrot.lane.b32.xlu0 %v2340, 64
    %v2671 = vpop.permute.xlu0 %2670
    %2673 = vrot.lane.b32.xlu0 %v2342, 64
    %v2674 = vpop.permute.xlu0 %2673
    %v2676 = vsel %vm2345, %v2671, 0
    %v2679 = vsel %vm2345, %v2674, 0
    %2681 = vmatprep.subr.bf16.mxu0 0
    %2682 = vmatpush1.bf16.xpose.msra.mxu0 %v2679
    %2683 = vmatprep.subr.bf16.mxu0 0
    %2684 = vmatpush1.bf16.xpose.msra.mxu0 0
    %2685 = vmatprep.subr.bf16.mxu0 0
    %2686 = vmatpush1.bf16.xpose.msra.mxu0 0
    %2687 = vmatprep.subr.bf16.mxu0 0
    %2688 = vmatpush1.bf16.xpose.msra.mxu0 0
    %2689 = vmatprep.subr.bf16.mxu0 0
    %2690 = vmatpush1.bf16.xpose.msra.mxu0 0
    %2691 = vmatprep.subr.bf16.mxu0 0
    %2692 = vmatpush1.bf16.xpose.msra.mxu0 0
    %2693 = vmatprep.subr.bf16.mxu0 0
    %2694 = vmatpush1.bf16.xpose.msra.mxu0 0
    %2695 = vmatprep.subr.bf16.mxu0 0
    %2696 = vmatpush1.bf16.xpose.msra.mxu0 0
    %2697 = vmatprep.subr.bf16.mxu0 0
    %2698 = vmatpush1.bf16.xpose.msra.mxu0 0
    %2699 = vmatprep.subr.bf16.mxu0 0
    %2700 = vmatpush1.bf16.xpose.msra.mxu0 0
    %2701 = vmatprep.subr.bf16.mxu0 0
    %2702 = vmatpush1.bf16.xpose.msra.mxu0 0
    %2703 = vmatprep.subr.bf16.mxu0 0
    %2704 = vmatpush1.bf16.xpose.msra.mxu0 0
    %2705 = vmatprep.subr.bf16.mxu0 0
    %2706 = vmatpush1.bf16.xpose.msra.mxu0 0
    %2707 = vmatprep.subr.bf16.mxu0 0
    %2708 = vmatpush1.bf16.xpose.msra.mxu0 0
    %2709 = vmatprep.subr.bf16.mxu0 0
    %2710 = vmatpush1.bf16.xpose.msra.mxu0 0
    %2711 = vmatprep.subr.bf16.mxu0 0
    %2712 = vmatpush1.bf16.xpose.msra.mxu0 0
    %2713 = vmatprep.mubr.bf16.mxu0 0
    %2714 = vmatmul.mubr.bf16.gmra.mrb[0].mxu0 %v2676
    %v2715 = vpop.f32.mrb[0].mxu0
    %v2716 = vadd.f32 0.0, %v2715
    %v2717 = vpop.f32.mrb[0].mxu0
    %v2718 = vpop.f32.mrb[0].mxu0
    %v2719 = vpop.f32.mrb[0].mxu0
    %2720 = vdwg.mxu0
    %v2721 = vsel %vm2392, %v2716, -inf
    %2722 = vmax.xlane.f32.xlu0 %v2721
    %v2723 = vpop.xlane.xlu0 %2722
    %v2724 = vsub.f32 %v2716, %v2723
    %v2725 = vmul.f32 %v2724, 1.442695
    %v2726 = vpow.pop %v2725
    %v2727 = vsel %vm2392, %v2726, 0.0
    %2728 = vadd.xlane.f32.xlu0 %v2727
    %v2729 = vpop.xlane.xlu0 %2728
    %v2730 = vpack.c.bf16 %v2726, %v2726
    %2732 = vrot.lane.b32.xlu0 %v2344, 64
    %v2733 = vpop.permute.xlu0 %2732
    %v2735 = vsel %vm2392, %v2730, 0
    %v2738 = vsel %vm2406, %v2733, 0
    %2740 = vmatprep.subr.bf16.mxu0 0
    %2741 = vmatpush1.bf16.msra.mxu0 %v2738
    %2742 = vmatprep.subr.bf16.mxu0 0
    %2743 = vmatpush1.bf16.msra.mxu0 0
    %2744 = vmatprep.subr.bf16.mxu0 0
    %2745 = vmatpush1.bf16.msra.mxu0 0
    %2746 = vmatprep.subr.bf16.mxu0 0
    %2747 = vmatpush1.bf16.msra.mxu0 0
    %2748 = vmatprep.subr.bf16.mxu0 0
    %2749 = vmatpush1.bf16.msra.mxu0 0
    %2750 = vmatprep.subr.bf16.mxu0 0
    %2751 = vmatpush1.bf16.msra.mxu0 0
    %2752 = vmatprep.subr.bf16.mxu0 0
    %2753 = vmatpush1.bf16.msra.mxu0 0
    %2754 = vmatprep.subr.bf16.mxu0 0
    %2755 = vmatpush1.bf16.msra.mxu0 0
    %2756 = vmatprep.subr.bf16.mxu0 0
    %2757 = vmatpush1.bf16.msra.mxu0 0
    %2758 = vmatprep.subr.bf16.mxu0 0
    %2759 = vmatpush1.bf16.msra.mxu0 0
    %2760 = vmatprep.subr.bf16.mxu0 0
    %2761 = vmatpush1.bf16.msra.mxu0 0
    %2762 = vmatprep.subr.bf16.mxu0 0
    %2763 = vmatpush1.bf16.msra.mxu0 0
    %2764 = vmatprep.subr.bf16.mxu0 0
    %2765 = vmatpush1.bf16.msra.mxu0 0
    %2766 = vmatprep.subr.bf16.mxu0 0
    %2767 = vmatpush1.bf16.msra.mxu0 0
    %2768 = vmatprep.subr.bf16.mxu0 0
    %2769 = vmatpush1.bf16.msra.mxu0 0
    %2770 = vmatprep.subr.bf16.mxu0 0
    %2771 = vmatpush1.bf16.msra.mxu0 0
    %2772 = vmatprep.mubr.bf16.mxu0 0
    %2773 = vmatmul.mubr.bf16.gmra.mrb[0].mxu0 %v2735
    %v2774 = vpop.f32.mrb[0].mxu0
    %v2775 = vadd.f32 0.0, %v2774
    %v2776 = vpop.f32.mrb[0].mxu0
    %v2777 = vpop.f32.mrb[0].mxu0
    %v2778 = vpop.f32.mrb[0].mxu0
    %2779 = vdwg.mxu0
    %v2780 = vrcp.pop %v2729
    %v2781 = vmul.f32 %v2775, %v2780
    %2783 = vrot.lane.b32.xlu0 %v2564, 64
    %v2784 = vpop.permute.xlu0 %2783
    %2787 = vrot.lane.b32.xlu0 %v2781, 64
    %v2788 = vpop.permute.xlu0 %2787
    %v2790 = vsel %vm2345, %v2451, %v2784
    %v2791 = vsel %vm2345, %v2668, %v2788
    %v2792 = vrot.slane %v2339, 4
    %v2793 = vrot.slane %v2341, 4
    %v2795 = vsel %vm2345, %v2792, 0
    %v2798 = vsel %vm2345, %v2793, 0
    %2800 = vmatprep.subr.bf16.mxu0 0
    %2801 = vmatpush1.bf16.xpose.msra.mxu0 %v2798
    %2802 = vmatprep.subr.bf16.mxu0 0
    %2803 = vmatpush1.bf16.xpose.msra.mxu0 0
    %2804 = vmatprep.subr.bf16.mxu0 0
    %2805 = vmatpush1.bf16.xpose.msra.mxu0 0
    %2806 = vmatprep.subr.bf16.mxu0 0
    %2807 = vmatpush1.bf16.xpose.msra.mxu0 0
    %2808 = vmatprep.subr.bf16.mxu0 0
    %2809 = vmatpush1.bf16.xpose.msra.mxu0 0
    %2810 = vmatprep.subr.bf16.mxu0 0
    %2811 = vmatpush1.bf16.xpose.msra.mxu0 0
    %2812 = vmatprep.subr.bf16.mxu0 0
    %2813 = vmatpush1.bf16.xpose.msra.mxu0 0
    %2814 = vmatprep.subr.bf16.mxu0 0
    %2815 = vmatpush1.bf16.xpose.msra.mxu0 0
    %2816 = vmatprep.subr.bf16.mxu0 0
    %2817 = vmatpush1.bf16.xpose.msra.mxu0 0
    %2818 = vmatprep.subr.bf16.mxu0 0
    %2819 = vmatpush1.bf16.xpose.msra.mxu0 0
    %2820 = vmatprep.subr.bf16.mxu0 0
    %2821 = vmatpush1.bf16.xpose.msra.mxu0 0
    %2822 = vmatprep.subr.bf16.mxu0 0
    %2823 = vmatpush1.bf16.xpose.msra.mxu0 0
    %2824 = vmatprep.subr.bf16.mxu0 0
    %2825 = vmatpush1.bf16.xpose.msra.mxu0 0
    %2826 = vmatprep.subr.bf16.mxu0 0
    %2827 = vmatpush1.bf16.xpose.msra.mxu0 0
    %2828 = vmatprep.subr.bf16.mxu0 0
    %2829 = vmatpush1.bf16.xpose.msra.mxu0 0
    %2830 = vmatprep.subr.bf16.mxu0 0
    %2831 = vmatpush1.bf16.xpose.msra.mxu0 0
    %2832 = vmatprep.mubr.bf16.mxu0 0
    %2833 = vmatmul.mubr.bf16.gmra.mrb[0].mxu0 %v2795
    %v2834 = vpop.f32.mrb[0].mxu0
    %v2835 = vadd.f32 0.0, %v2834
    %v2836 = vpop.f32.mrb[0].mxu0
    %v2837 = vpop.f32.mrb[0].mxu0
    %v2838 = vpop.f32.mrb[0].mxu0
    %2839 = vdwg.mxu0
    %v2840 = vsel %vm2392, %v2835, -inf
    %2841 = vmax.xlane.f32.xlu0 %v2840
    %v2842 = vpop.xlane.xlu0 %2841
    %v2843 = vsub.f32 %v2835, %v2842
    %v2844 = vmul.f32 %v2843, 1.442695
    %v2845 = vpow.pop %v2844
    %v2846 = vsel %vm2392, %v2845, 0.0
    %2847 = vadd.xlane.f32.xlu0 %v2846
    %v2848 = vpop.xlane.xlu0 %2847
    %v2849 = vpack.c.bf16 %v2845, %v2845
    %v2850 = vrot.slane %v2343, 4
    %v2852 = vsel %vm2392, %v2849, 0
    %v2855 = vsel %vm2406, %v2850, 0
    %2857 = vmatprep.subr.bf16.mxu0 0
    %2858 = vmatpush1.bf16.msra.mxu0 %v2855
    %2859 = vmatprep.subr.bf16.mxu0 0
    %2860 = vmatpush1.bf16.msra.mxu0 0
    %2861 = vmatprep.subr.bf16.mxu0 0
    %2862 = vmatpush1.bf16.msra.mxu0 0
    %2863 = vmatprep.subr.bf16.mxu0 0
    %2864 = vmatpush1.bf16.msra.mxu0 0
    %2865 = vmatprep.subr.bf16.mxu0 0
    %2866 = vmatpush1.bf16.msra.mxu0 0
    %2867 = vmatprep.subr.bf16.mxu0 0
    %2868 = vmatpush1.bf16.msra.mxu0 0
    %2869 = vmatprep.subr.bf16.mxu0 0
    %2870 = vmatpush1.bf16.msra.mxu0 0
    %2871 = vmatprep.subr.bf16.mxu0 0
    %2872 = vmatpush1.bf16.msra.mxu0 0
    %2873 = vmatprep.subr.bf16.mxu0 0
    %2874 = vmatpush1.bf16.msra.mxu0 0
    %2875 = vmatprep.subr.bf16.mxu0 0
    %2876 = vmatpush1.bf16.msra.mxu0 0
    %2877 = vmatprep.subr.bf16.mxu0 0
    %2878 = vmatpush1.bf16.msra.mxu0 0
    %2879 = vmatprep.subr.bf16.mxu0 0
    %2880 = vmatpush1.bf16.msra.mxu0 0
    %2881 = vmatprep.subr.bf16.mxu0 0
    %2882 = vmatpush1.bf16.msra.mxu0 0
    %2883 = vmatprep.subr.bf16.mxu0 0
    %2884 = vmatpush1.bf16.msra.mxu0 0
    %2885 = vmatprep.subr.bf16.mxu0 0
    %2886 = vmatpush1.bf16.msra.mxu0 0
    %2887 = vmatprep.subr.bf16.mxu0 0
    %2888 = vmatpush1.bf16.msra.mxu0 0
    %2889 = vmatprep.mubr.bf16.mxu0 0
    %2890 = vmatmul.mubr.bf16.gmra.mrb[0].mxu0 %v2852
    %v2891 = vpop.f32.mrb[0].mxu0
    %v2892 = vadd.f32 0.0, %v2891
    %v2893 = vpop.f32.mrb[0].mxu0
    %v2894 = vpop.f32.mrb[0].mxu0
    %v2895 = vpop.f32.mrb[0].mxu0
    %2896 = vdwg.mxu0
    %v2897 = vrcp.pop %v2848
    %v2898 = vmul.f32 %v2892, %v2897
    %2899 = vrot.lane.b32.xlu0 %v2792, 64
    %v2900 = vpop.permute.xlu0 %2899
    %2901 = vrot.lane.b32.xlu0 %v2793, 64
    %v2902 = vpop.permute.xlu0 %2901
    %v2904 = vsel %vm2345, %v2900, 0
    %v2907 = vsel %vm2345, %v2902, 0
    %2909 = vmatprep.subr.bf16.mxu0 0
    %2910 = vmatpush1.bf16.xpose.msra.mxu0 %v2907
    %2911 = vmatprep.subr.bf16.mxu0 0
    %2912 = vmatpush1.bf16.xpose.msra.mxu0 0
    %2913 = vmatprep.subr.bf16.mxu0 0
    %2914 = vmatpush1.bf16.xpose.msra.mxu0 0
    %2915 = vmatprep.subr.bf16.mxu0 0
    %2916 = vmatpush1.bf16.xpose.msra.mxu0 0
    %2917 = vmatprep.subr.bf16.mxu0 0
    %2918 = vmatpush1.bf16.xpose.msra.mxu0 0
    %2919 = vmatprep.subr.bf16.mxu0 0
    %2920 = vmatpush1.bf16.xpose.msra.mxu0 0
    %2921 = vmatprep.subr.bf16.mxu0 0
    %2922 = vmatpush1.bf16.xpose.msra.mxu0 0
    %2923 = vmatprep.subr.bf16.mxu0 0
    %2924 = vmatpush1.bf16.xpose.msra.mxu0 0
    %2925 = vmatprep.subr.bf16.mxu0 0
    %2926 = vmatpush1.bf16.xpose.msra.mxu0 0
    %2927 = vmatprep.subr.bf16.mxu0 0
    %2928 = vmatpush1.bf16.xpose.msra.mxu0 0
    %2929 = vmatprep.subr.bf16.mxu0 0
    %2930 = vmatpush1.bf16.xpose.msra.mxu0 0
    %2931 = vmatprep.subr.bf16.mxu0 0
    %2932 = vmatpush1.bf16.xpose.msra.mxu0 0
    %2933 = vmatprep.subr.bf16.mxu0 0
    %2934 = vmatpush1.bf16.xpose.msra.mxu0 0
    %2935 = vmatprep.subr.bf16.mxu0 0
    %2936 = vmatpush1.bf16.xpose.msra.mxu0 0
    %2937 = vmatprep.subr.bf16.mxu0 0
    %2938 = vmatpush1.bf16.xpose.msra.mxu0 0
    %2939 = vmatprep.subr.bf16.mxu0 0
    %2940 = vmatpush1.bf16.xpose.msra.mxu0 0
    %2941 = vmatprep.mubr.bf16.mxu0 0
    %2942 = vmatmul.mubr.bf16.gmra.mrb[0].mxu0 %v2904
    %v2943 = vpop.f32.mrb[0].mxu0
    %v2944 = vadd.f32 0.0, %v2943
    %v2945 = vpop.f32.mrb[0].mxu0
    %v2946 = vpop.f32.mrb[0].mxu0
    %v2947 = vpop.f32.mrb[0].mxu0
    %2948 = vdwg.mxu0
    %v2949 = vsel %vm2392, %v2944, -inf
    %2950 = vmax.xlane.f32.xlu0 %v2949
    %v2951 = vpop.xlane.xlu0 %2950
    %v2952 = vsub.f32 %v2944, %v2951
    %v2953 = vmul.f32 %v2952, 1.442695
    %v2954 = vpow.pop %v2953
    %v2955 = vsel %vm2392, %v2954, 0.0
    %2956 = vadd.xlane.f32.xlu0 %v2955
    %v2957 = vpop.xlane.xlu0 %2956
    %v2958 = vpack.c.bf16 %v2954, %v2954
    %2959 = vrot.lane.b32.xlu0 %v2850, 64
    %v2960 = vpop.permute.xlu0 %2959
    %v2962 = vsel %vm2392, %v2958, 0
    %v2965 = vsel %vm2406, %v2960, 0
    %2967 = vmatprep.subr.bf16.mxu0 0
    %2968 = vmatpush1.bf16.msra.mxu0 %v2965
    %2969 = vmatprep.subr.bf16.mxu0 0
    %2970 = vmatpush1.bf16.msra.mxu0 0
    %2971 = vmatprep.subr.bf16.mxu0 0
    %2972 = vmatpush1.bf16.msra.mxu0 0
    %2973 = vmatprep.subr.bf16.mxu0 0
    %2974 = vmatpush1.bf16.msra.mxu0 0
    %2975 = vmatprep.subr.bf16.mxu0 0
    %2976 = vmatpush1.bf16.msra.mxu0 0
    %2977 = vmatprep.subr.bf16.mxu0 0
    %2978 = vmatpush1.bf16.msra.mxu0 0
    %2979 = vmatprep.subr.bf16.mxu0 0
    %2980 = vmatpush1.bf16.msra.mxu0 0
    %2981 = vmatprep.subr.bf16.mxu0 0
    %2982 = vmatpush1.bf16.msra.mxu0 0
    %2983 = vmatprep.subr.bf16.mxu0 0
    %2984 = vmatpush1.bf16.msra.mxu0 0
    %2985 = vmatprep.subr.bf16.mxu0 0
    %2986 = vmatpush1.bf16.msra.mxu0 0
    %2987 = vmatprep.subr.bf16.mxu0 0
    %2988 = vmatpush1.bf16.msra.mxu0 0
    %2989 = vmatprep.subr.bf16.mxu0 0
    %2990 = vmatpush1.bf16.msra.mxu0 0
    %2991 = vmatprep.subr.bf16.mxu0 0
    %2992 = vmatpush1.bf16.msra.mxu0 0
    %2993 = vmatprep.subr.bf16.mxu0 0
    %2994 = vmatpush1.bf16.msra.mxu0 0
    %2995 = vmatprep.subr.bf16.mxu0 0
    %2996 = vmatpush1.bf16.msra.mxu0 0
    %2997 = vmatprep.subr.bf16.mxu0 0
    %2998 = vmatpush1.bf16.msra.mxu0 0
    %2999 = vmatprep.mubr.bf16.mxu0 0
    %3000 = vmatmul.mubr.bf16.gmra.mrb[0].mxu0 %v2962
    %v3001 = vpop.f32.mrb[0].mxu0
    %v3002 = vadd.f32 0.0, %v3001
    %v3003 = vpop.f32.mrb[0].mxu0
    %v3004 = vpop.f32.mrb[0].mxu0
    %v3005 = vpop.f32.mrb[0].mxu0
    %3006 = vdwg.mxu0
    %v3007 = vrcp.pop %v2957
    %v3008 = vmul.f32 %v3002, %v3007
    %v3009 = vrot.slane %v2340, 4
    %v3010 = vrot.slane %v2342, 4
    %v3012 = vsel %vm2345, %v3009, 0
    %v3015 = vsel %vm2345, %v3010, 0
    %3017 = vmatprep.subr.bf16.mxu0 0
    %3018 = vmatpush1.bf16.xpose.msra.mxu0 %v3015
    %3019 = vmatprep.subr.bf16.mxu0 0
    %3020 = vmatpush1.bf16.xpose.msra.mxu0 0
    %3021 = vmatprep.subr.bf16.mxu0 0
    %3022 = vmatpush1.bf16.xpose.msra.mxu0 0
    %3023 = vmatprep.subr.bf16.mxu0 0
    %3024 = vmatpush1.bf16.xpose.msra.mxu0 0
    %3025 = vmatprep.subr.bf16.mxu0 0
    %3026 = vmatpush1.bf16.xpose.msra.mxu0 0
    %3027 = vmatprep.subr.bf16.mxu0 0
    %3028 = vmatpush1.bf16.xpose.msra.mxu0 0
    %3029 = vmatprep.subr.bf16.mxu0 0
    %3030 = vmatpush1.bf16.xpose.msra.mxu0 0
    %3031 = vmatprep.subr.bf16.mxu0 0
    %3032 = vmatpush1.bf16.xpose.msra.mxu0 0
    %3033 = vmatprep.subr.bf16.mxu0 0
    %3034 = vmatpush1.bf16.xpose.msra.mxu0 0
    %3035 = vmatprep.subr.bf16.mxu0 0
    %3036 = vmatpush1.bf16.xpose.msra.mxu0 0
    %3037 = vmatprep.subr.bf16.mxu0 0
    %3038 = vmatpush1.bf16.xpose.msra.mxu0 0
    %3039 = vmatprep.subr.bf16.mxu0 0
    %3040 = vmatpush1.bf16.xpose.msra.mxu0 0
    %3041 = vmatprep.subr.bf16.mxu0 0
    %3042 = vmatpush1.bf16.xpose.msra.mxu0 0
    %3043 = vmatprep.subr.bf16.mxu0 0
    %3044 = vmatpush1.bf16.xpose.msra.mxu0 0
    %3045 = vmatprep.subr.bf16.mxu0 0
    %3046 = vmatpush1.bf16.xpose.msra.mxu0 0
    %3047 = vmatprep.subr.bf16.mxu0 0
    %3048 = vmatpush1.bf16.xpose.msra.mxu0 0
    %3049 = vmatprep.mubr.bf16.mxu0 0
    %3050 = vmatmul.mubr.bf16.gmra.mrb[0].mxu0 %v3012
    %v3051 = vpop.f32.mrb[0].mxu0
    %v3052 = vadd.f32 0.0, %v3051
    %v3053 = vpop.f32.mrb[0].mxu0
    %v3054 = vpop.f32.mrb[0].mxu0
    %v3055 = vpop.f32.mrb[0].mxu0
    %3056 = vdwg.mxu0
    %v3057 = vsel %vm2392, %v3052, -inf
    %3058 = vmax.xlane.f32.xlu0 %v3057
    %v3059 = vpop.xlane.xlu0 %3058
    %v3060 = vsub.f32 %v3052, %v3059
    %v3061 = vmul.f32 %v3060, 1.442695
    %v3062 = vpow.pop %v3061
    %v3063 = vsel %vm2392, %v3062, 0.0
    %3064 = vadd.xlane.f32.xlu0 %v3063
    %v3065 = vpop.xlane.xlu0 %3064
    %v3066 = vpack.c.bf16 %v3062, %v3062
    %v3067 = vrot.slane %v2344, 4
    %v3069 = vsel %vm2392, %v3066, 0
    %v3072 = vsel %vm2406, %v3067, 0
    %3074 = vmatprep.subr.bf16.mxu0 0
    %3075 = vmatpush1.bf16.msra.mxu0 %v3072
    %3076 = vmatprep.subr.bf16.mxu0 0
    %3077 = vmatpush1.bf16.msra.mxu0 0
    %3078 = vmatprep.subr.bf16.mxu0 0
    %3079 = vmatpush1.bf16.msra.mxu0 0
    %3080 = vmatprep.subr.bf16.mxu0 0
    %3081 = vmatpush1.bf16.msra.mxu0 0
    %3082 = vmatprep.subr.bf16.mxu0 0
    %3083 = vmatpush1.bf16.msra.mxu0 0
    %3084 = vmatprep.subr.bf16.mxu0 0
    %3085 = vmatpush1.bf16.msra.mxu0 0
    %3086 = vmatprep.subr.bf16.mxu0 0
    %3087 = vmatpush1.bf16.msra.mxu0 0
    %3088 = vmatprep.subr.bf16.mxu0 0
    %3089 = vmatpush1.bf16.msra.mxu0 0
    %3090 = vmatprep.subr.bf16.mxu0 0
    %3091 = vmatpush1.bf16.msra.mxu0 0
    %3092 = vmatprep.subr.bf16.mxu0 0
    %3093 = vmatpush1.bf16.msra.mxu0 0
    %3094 = vmatprep.subr.bf16.mxu0 0
    %3095 = vmatpush1.bf16.msra.mxu0 0
    %3096 = vmatprep.subr.bf16.mxu0 0
    %3097 = vmatpush1.bf16.msra.mxu0 0
    %3098 = vmatprep.subr.bf16.mxu0 0
    %3099 = vmatpush1.bf16.msra.mxu0 0
    %3100 = vmatprep.subr.bf16.mxu0 0
    %3101 = vmatpush1.bf16.msra.mxu0 0
    %3102 = vmatprep.subr.bf16.mxu0 0
    %3103 = vmatpush1.bf16.msra.mxu0 0
    %3104 = vmatprep.subr.bf16.mxu0 0
    %3105 = vmatpush1.bf16.msra.mxu0 0
    %3106 = vmatprep.mubr.bf16.mxu0 0
    %3107 = vmatmul.mubr.bf16.gmra.mrb[0].mxu0 %v3069
    %v3108 = vpop.f32.mrb[0].mxu0
    %v3109 = vadd.f32 0.0, %v3108
    %v3110 = vpop.f32.mrb[0].mxu0
    %v3111 = vpop.f32.mrb[0].mxu0
    %v3112 = vpop.f32.mrb[0].mxu0
    %3113 = vdwg.mxu0
    %v3114 = vrcp.pop %v3065
    %v3115 = vmul.f32 %v3109, %v3114
    %3116 = vrot.lane.b32.xlu0 %v3009, 64
    %v3117 = vpop.permute.xlu0 %3116
    %3118 = vrot.lane.b32.xlu0 %v3010, 64
    %v3119 = vpop.permute.xlu0 %3118
    %v3121 = vsel %vm2345, %v3117, 0
    %v3124 = vsel %vm2345, %v3119, 0
    %3126 = vmatprep.subr.bf16.mxu0 0
    %3127 = vmatpush1.bf16.xpose.msra.mxu0 %v3124
    %3128 = vmatprep.subr.bf16.mxu0 0
    %3129 = vmatpush1.bf16.xpose.msra.mxu0 0
    %3130 = vmatprep.subr.bf16.mxu0 0
    %3131 = vmatpush1.bf16.xpose.msra.mxu0 0
    %3132 = vmatprep.subr.bf16.mxu0 0
    %3133 = vmatpush1.bf16.xpose.msra.mxu0 0
    %3134 = vmatprep.subr.bf16.mxu0 0
    %3135 = vmatpush1.bf16.xpose.msra.mxu0 0
    %3136 = vmatprep.subr.bf16.mxu0 0
    %3137 = vmatpush1.bf16.xpose.msra.mxu0 0
    %3138 = vmatprep.subr.bf16.mxu0 0
    %3139 = vmatpush1.bf16.xpose.msra.mxu0 0
    %3140 = vmatprep.subr.bf16.mxu0 0
    %3141 = vmatpush1.bf16.xpose.msra.mxu0 0
    %3142 = vmatprep.subr.bf16.mxu0 0
    %3143 = vmatpush1.bf16.xpose.msra.mxu0 0
    %3144 = vmatprep.subr.bf16.mxu0 0
    %3145 = vmatpush1.bf16.xpose.msra.mxu0 0
    %3146 = vmatprep.subr.bf16.mxu0 0
    %3147 = vmatpush1.bf16.xpose.msra.mxu0 0
    %3148 = vmatprep.subr.bf16.mxu0 0
    %3149 = vmatpush1.bf16.xpose.msra.mxu0 0
    %3150 = vmatprep.subr.bf16.mxu0 0
    %3151 = vmatpush1.bf16.xpose.msra.mxu0 0
    %3152 = vmatprep.subr.bf16.mxu0 0
    %3153 = vmatpush1.bf16.xpose.msra.mxu0 0
    %3154 = vmatprep.subr.bf16.mxu0 0
    %3155 = vmatpush1.bf16.xpose.msra.mxu0 0
    %3156 = vmatprep.subr.bf16.mxu0 0
    %3157 = vmatpush1.bf16.xpose.msra.mxu0 0
    %3158 = vmatprep.mubr.bf16.mxu0 0
    %3159 = vmatmul.mubr.bf16.gmra.mrb[0].mxu0 %v3121
    %v3160 = vpop.f32.mrb[0].mxu0
    %v3161 = vadd.f32 0.0, %v3160
    %v3162 = vpop.f32.mrb[0].mxu0
    %v3163 = vpop.f32.mrb[0].mxu0
    %v3164 = vpop.f32.mrb[0].mxu0
    %3165 = vdwg.mxu0
    %v3166 = vsel %vm2392, %v3161, -inf
    %3167 = vmax.xlane.f32.xlu0 %v3166
    %v3168 = vpop.xlane.xlu0 %3167
    %v3169 = vsub.f32 %v3161, %v3168
    %v3170 = vmul.f32 %v3169, 1.442695
    %v3171 = vpow.pop %v3170
    %v3172 = vsel %vm2392, %v3171, 0.0
    %3173 = vadd.xlane.f32.xlu0 %v3172
    %v3174 = vpop.xlane.xlu0 %3173
    %v3175 = vpack.c.bf16 %v3171, %v3171
    %3176 = vrot.lane.b32.xlu0 %v3067, 64
    %v3177 = vpop.permute.xlu0 %3176
    %v3179 = vsel %vm2392, %v3175, 0
    %v3182 = vsel %vm2406, %v3177, 0
    %3184 = vmatprep.subr.bf16.mxu0 0
    %3185 = vmatpush1.bf16.msra.mxu0 %v3182
    %3186 = vmatprep.subr.bf16.mxu0 0
    %3187 = vmatpush1.bf16.msra.mxu0 0
    %3188 = vmatprep.subr.bf16.mxu0 0
    %3189 = vmatpush1.bf16.msra.mxu0 0
    %3190 = vmatprep.subr.bf16.mxu0 0
    %3191 = vmatpush1.bf16.msra.mxu0 0
    %3192 = vmatprep.subr.bf16.mxu0 0
    %3193 = vmatpush1.bf16.msra.mxu0 0
    %3194 = vmatprep.subr.bf16.mxu0 0
    %3195 = vmatpush1.bf16.msra.mxu0 0
    %3196 = vmatprep.subr.bf16.mxu0 0
    %3197 = vmatpush1.bf16.msra.mxu0 0
    %3198 = vmatprep.subr.bf16.mxu0 0
    %3199 = vmatpush1.bf16.msra.mxu0 0
    %3200 = vmatprep.subr.bf16.mxu0 0
    %3201 = vmatpush1.bf16.msra.mxu0 0
    %3202 = vmatprep.subr.bf16.mxu0 0
    %3203 = vmatpush1.bf16.msra.mxu0 0
    %3204 = vmatprep.subr.bf16.mxu0 0
    %3205 = vmatpush1.bf16.msra.mxu0 0
    %3206 = vmatprep.subr.bf16.mxu0 0
    %3207 = vmatpush1.bf16.msra.mxu0 0
    %3208 = vmatprep.subr.bf16.mxu0 0
    %3209 = vmatpush1.bf16.msra.mxu0 0
    %3210 = vmatprep.subr.bf16.mxu0 0
    %3211 = vmatpush1.bf16.msra.mxu0 0
    %3212 = vmatprep.subr.bf16.mxu0 0
    %3213 = vmatpush1.bf16.msra.mxu0 0
    %3214 = vmatprep.subr.bf16.mxu0 0
    %3215 = vmatpush1.bf16.msra.mxu0 0
    %3216 = vmatprep.mubr.bf16.mxu0 0
    %3217 = vmatmul.mubr.bf16.gmra.mrb[0].mxu0 %v3179
    %v3218 = vpop.f32.mrb[0].mxu0
    %v3219 = vadd.f32 0.0, %v3218
    %v3220 = vpop.f32.mrb[0].mxu0
    %v3221 = vpop.f32.mrb[0].mxu0
    %v3222 = vpop.f32.mrb[0].mxu0
    %3223 = vdwg.mxu0
    %v3224 = vrcp.pop %v3174
    %v3225 = vmul.f32 %v3219, %v3224
    %3227 = vrot.lane.b32.xlu0 %v3008, 64
    %v3228 = vpop.permute.xlu0 %3227
    %3231 = vrot.lane.b32.xlu0 %v3225, 64
    %v3232 = vpop.permute.xlu0 %3231
    %v3234 = vsel %vm2345, %v2898, %v3228
    %v3235 = vsel %vm2345, %v3115, %v3232
    %v3236 = vpack.c.bf16 %v3234, %v2790
    %v3237 = vpack.c.bf16 %v3235, %v2791
    %v3238 = vld [vmem:[#allocation8 + $0x18] sm:$0xff]
    %v3239 = vld [vmem:[#allocation8 + $0x48] sm:$0xff]
    %v3240 = vld [vmem:[#allocation8 + $0x78] sm:$0xff]
    %v3241 = vld [vmem:[#allocation8 + $0xa8] sm:$0xff]
    %v3242 = vld [vmem:[#allocation8 + $0xd8] sm:$0xff]
    %v3243 = vld [vmem:[#allocation8 + $0x108] sm:$0xff]
    %v3244 = vld [vmem:[#allocation8 + $0x138] sm:$0xff]
    %v3245 = vld [vmem:[#allocation8 + $0x168] sm:$0xff]
    %v3246 = vld [vmem:[#allocation8 + $0x198] sm:$0xff]
    %v3247 = vld [vmem:[#allocation8 + $0x1c8] sm:$0xff]
    %v3248 = vld [vmem:[#allocation8 + $0x1f8] sm:$0xff]
    %v3249 = vld [vmem:[#allocation8 + $0x228] sm:$0xff]
    %v3250 = vld [vmem:[#allocation8 + $0x258] sm:$0xff]
    %v3251 = vld [vmem:[#allocation8 + $0x288] sm:$0xff]
    %v3252 = vld [vmem:[#allocation8 + $0x2b8] sm:$0xff]
    %v3253 = vld [vmem:[#allocation8 + $0x2e8] sm:$0xff]
    %v3254 = vld [vmem:[#allocation8 + $0x318] sm:$0xff]
    %v3255 = vld [vmem:[#allocation8 + $0x348] sm:$0xff]
    %v3256 = vld [vmem:[#allocation8 + $0x378] sm:$0xff]
    %v3257 = vld [vmem:[#allocation8 + $0x3a8] sm:$0xff]
    %v3258 = vld [vmem:[#allocation8 + $0x3d8] sm:$0xff]
    %v3259 = vld [vmem:[#allocation8 + $0x408] sm:$0xff]
    %v3260 = vld [vmem:[#allocation8 + $0x438] sm:$0xff]
    %v3261 = vld [vmem:[#allocation8 + $0x468] sm:$0xff]
    %v3262 = vld [vmem:[#allocation8 + $0x498] sm:$0xff]
    %v3263 = vld [vmem:[#allocation8 + $0x4c8] sm:$0xff]
    %v3264 = vld [vmem:[#allocation8 + $0x4f8] sm:$0xff]
    %v3265 = vld [vmem:[#allocation8 + $0x528] sm:$0xff]
    %v3266 = vld [vmem:[#allocation8 + $0x558] sm:$0xff]
    %v3267 = vld [vmem:[#allocation8 + $0x588] sm:$0xff]
    %v3268 = vld [vmem:[#allocation8 + $0x5b8] sm:$0xff]
    %v3269 = vld [vmem:[#allocation8 + $0x5e8] sm:$0xff]
    %v3302 = vunpack.c.l.b16 %v3238
    %v3303 = vunpack.c.h.b16 %v3238
    %v3304 = vunpack.c.l.b16 %v3239
    %v3305 = vunpack.c.h.b16 %v3239
    %v3306 = vunpack.c.l.b16 %v3240
    %v3307 = vunpack.c.h.b16 %v3240
    %v3308 = vunpack.c.l.b16 %v3241
    %v3309 = vunpack.c.h.b16 %v3241
    %v3310 = vunpack.c.l.b16 %v3242
    %v3311 = vunpack.c.h.b16 %v3242
    %v3312 = vunpack.c.l.b16 %v3243
    %v3313 = vunpack.c.h.b16 %v3243
    %v3314 = vunpack.c.l.b16 %v3244
    %v3315 = vunpack.c.h.b16 %v3244
    %v3316 = vunpack.c.l.b16 %v3245
    %v3317 = vunpack.c.h.b16 %v3245
    %v3318 = vunpack.c.l.b16 %v3246
    %v3319 = vunpack.c.h.b16 %v3246
    %v3320 = vunpack.c.l.b16 %v3247
    %v3321 = vunpack.c.h.b16 %v3247
    %v3322 = vunpack.c.l.b16 %v3248
    %v3323 = vunpack.c.h.b16 %v3248
    %v3324 = vunpack.c.l.b16 %v3249
    %v3325 = vunpack.c.h.b16 %v3249
    %v3326 = vunpack.c.l.b16 %v3250
    %v3327 = vunpack.c.h.b16 %v3250
    %v3328 = vunpack.c.l.b16 %v3251
    %v3329 = vunpack.c.h.b16 %v3251
    %v3330 = vunpack.c.l.b16 %v3252
    %v3331 = vunpack.c.h.b16 %v3252
    %v3332 = vunpack.c.l.b16 %v3253
    %v3333 = vunpack.c.h.b16 %v3253
    %v3334 = vunpack.c.l.b16 %v3254
    %v3335 = vunpack.c.h.b16 %v3254
    %v3336 = vunpack.c.l.b16 %v3255
    %v3337 = vunpack.c.h.b16 %v3255
    %v3338 = vunpack.c.l.b16 %v3256
    %v3339 = vunpack.c.h.b16 %v3256
    %v3340 = vunpack.c.l.b16 %v3257
    %v3341 = vunpack.c.h.b16 %v3257
    %v3342 = vunpack.c.l.b16 %v3258
    %v3343 = vunpack.c.h.b16 %v3258
    %v3344 = vunpack.c.l.b16 %v3259
    %v3345 = vunpack.c.h.b16 %v3259
    %v3346 = vunpack.c.l.b16 %v3260
    %v3347 = vunpack.c.h.b16 %v3260
    %v3348 = vunpack.c.l.b16 %v3261
    %v3349 = vunpack.c.h.b16 %v3261
    %v3350 = vunpack.c.l.b16 %v3262
    %v3351 = vunpack.c.h.b16 %v3262
    %v3352 = vunpack.c.l.b16 %v3263
    %v3353 = vunpack.c.h.b16 %v3263
    %v3354 = vunpack.c.l.b16 %v3264
    %v3355 = vunpack.c.h.b16 %v3264
    %v3356 = vunpack.c.l.b16 %v3265
    %v3357 = vunpack.c.h.b16 %v3265
    %v3358 = vunpack.c.l.b16 %v3266
    %v3359 = vunpack.c.h.b16 %v3266
    %v3360 = vunpack.c.l.b16 %v3267
    %v3361 = vunpack.c.h.b16 %v3267
    %v3362 = vunpack.c.l.b16 %v3268
    %v3363 = vunpack.c.h.b16 %v3268
    %v3364 = vunpack.c.l.b16 %v3269
    %v3365 = vunpack.c.h.b16 %v3269
    %v3366 = vpack.c.b16 %v3304, %v3302
    %v3367 = vpack.c.b16 %v3305, %v3303
    %v3368 = vpack.c.b16 %v3308, %v3306
    %v3369 = vpack.c.b16 %v3309, %v3307
    %v3370 = vpack.c.b16 %v3312, %v3310
    %v3371 = vpack.c.b16 %v3313, %v3311
    %v3372 = vpack.c.b16 %v3316, %v3314
    %v3373 = vpack.c.b16 %v3317, %v3315
    %v3374 = vpack.c.b16 %v3320, %v3318
    %v3375 = vpack.c.b16 %v3321, %v3319
    %v3376 = vpack.c.b16 %v3324, %v3322
    %v3377 = vpack.c.b16 %v3325, %v3323
    %v3378 = vpack.c.b16 %v3328, %v3326
    %v3379 = vpack.c.b16 %v3329, %v3327
    %v3380 = vpack.c.b16 %v3332, %v3330
    %v3381 = vpack.c.b16 %v3333, %v3331
    %v3382 = vpack.c.b16 %v3336, %v3334
    %v3383 = vpack.c.b16 %v3337, %v3335
    %v3384 = vpack.c.b16 %v3340, %v3338
    %v3385 = vpack.c.b16 %v3341, %v3339
    %v3386 = vpack.c.b16 %v3344, %v3342
    %v3387 = vpack.c.b16 %v3345, %v3343
    %v3388 = vpack.c.b16 %v3348, %v3346
    %v3389 = vpack.c.b16 %v3349, %v3347
    %v3390 = vpack.c.b16 %v3352, %v3350
    %v3391 = vpack.c.b16 %v3353, %v3351
    %v3392 = vpack.c.b16 %v3356, %v3354
    %v3393 = vpack.c.b16 %v3357, %v3355
    %v3394 = vpack.c.b16 %v3360, %v3358
    %v3395 = vpack.c.b16 %v3361, %v3359
    %v3396 = vpack.c.b16 %v3364, %v3362
    %v3397 = vpack.c.b16 %v3365, %v3363
    %3430 = vmatprep.subr.bf16.mxu0 %v3367
    %3431 = vmatpush1.bf16.msra.mxu0 %v3366
    %3432 = vmatprep.subr.bf16.mxu0 %v3369
    %3433 = vmatpush1.bf16.msra.mxu0 %v3368
    %3434 = vmatprep.subr.bf16.mxu0 %v3371
    %3435 = vmatpush1.bf16.msra.mxu0 %v3370
    %3436 = vmatprep.subr.bf16.mxu0 %v3373
    %3437 = vmatpush1.bf16.msra.mxu0 %v3372
    %3438 = vmatprep.subr.bf16.mxu0 %v3375
    %3439 = vmatpush1.bf16.msra.mxu0 %v3374
    %3440 = vmatprep.subr.bf16.mxu0 %v3377
    %3441 = vmatpush1.bf16.msra.mxu0 %v3376
    %3442 = vmatprep.subr.bf16.mxu0 %v3379
    %3443 = vmatpush1.bf16.msra.mxu0 %v3378
    %3444 = vmatprep.subr.bf16.mxu0 %v3381
    %3445 = vmatpush1.bf16.msra.mxu0 %v3380
    %3446 = vmatprep.subr.bf16.mxu0 %v3383
    %3447 = vmatpush1.bf16.msra.mxu0 %v3382
    %3448 = vmatprep.subr.bf16.mxu0 %v3385
    %3449 = vmatpush1.bf16.msra.mxu0 %v3384
    %3450 = vmatprep.subr.bf16.mxu0 %v3387
    %3451 = vmatpush1.bf16.msra.mxu0 %v3386
    %3452 = vmatprep.subr.bf16.mxu0 %v3389
    %3453 = vmatpush1.bf16.msra.mxu0 %v3388
    %3454 = vmatprep.subr.bf16.mxu0 %v3391
    %3455 = vmatpush1.bf16.msra.mxu0 %v3390
    %3456 = vmatprep.subr.bf16.mxu0 %v3393
    %3457 = vmatpush1.bf16.msra.mxu0 %v3392
    %3458 = vmatprep.subr.bf16.mxu0 %v3395
    %3459 = vmatpush1.bf16.msra.mxu0 %v3394
    %3460 = vmatprep.subr.bf16.mxu0 %v3397
    %3461 = vmatpush1.bf16.msra.mxu0 %v3396
    %3462 = vmatprep.mubr.bf16.mxu0 %v3237
    %3463 = vmatmul.mubr.bf16.gmra.mrb[0].mxu0 %v3236
    %v3464 = vpop.f32.mrb[0].mxu0
    %v3465 = vadd.f32 0.0, %v3464
    %v3466 = vpop.f32.mrb[0].mxu0
    %v3467 = vadd.f32 0.0, %v3466
    %v3468 = vpop.f32.mrb[0].mxu0
    %v3469 = vadd.f32 0.0, %v3468
    %v3470 = vpop.f32.mrb[0].mxu0
    %v3471 = vadd.f32 0.0, %v3470
    %3472 = vdwg.mxu0
    %v3473 = vadd.f32 %v96, %v3465
    %v3474 = vadd.f32 %v97, %v3467
    %v3475 = vadd.f32 %v98, %v3469
    %v3476 = vadd.f32 %v99, %v3471
    %s3477 = scalar_lea.vmem %s5, 4
    %v3478 = vld [vmem:[%s3477] ss:$8 sm:$0x3]
    %v3480 = vlaneseq
    %v3481 = vshrl.u32 %v3480, 7
    %v3482 = vsub.s32 0, %v3481
    %v3483 = vrot.slane %v3478, %v3482
    %v3484 = vlaneseq
    %v3485 = vshrl.u32 %v3484, 7
    %v3486 = vsub.s32 1, %v3485
    %v3487 = vrot.slane %v3478, %v3486
    %v3490 = vadd.f32 %v3473, %v3483
    %v3491 = vadd.f32 %v3474, %v3487
    %v3492 = vadd.f32 %v3475, %v3483
    %v3493 = vadd.f32 %v3476, %v3487
    %v3494 = vlaneseq
    %v3495 = vshrl.u32 %v3494, 7
    %v3496 = vadd.s32 %v3495, 8
    %vm3497 = vcmp.lt.s32.totalorder %v3495, 0
    %v3498 = vsub.s32 0, %v3495
    %v3499 = vsel %vm3497, %v3498, %v3495
    %v3500 = vshrl.u32 %v3499, 3
    %v3501 = vand.u32 %v3499, 7
    %v3502 = vsub.s32 0, %v3501
    %v3503 = vsel %vm3497, %v3502, %v3501
    %vm3504 = vcmp.lt.s32.totalorder %v3496, 0
    %v3505 = vsub.s32 0, %v3496
    %v3506 = vsel %vm3504, %v3505, %v3496
    %v3507 = vshrl.u32 %v3506, 3
    %v3508 = vand.u32 %v3506, 7
    %v3509 = vsub.s32 0, %v3508
    %v3510 = vsel %vm3504, %v3509, %v3508
    %vm3511 = vcmp.ne.s32.totalorder %v3503, 0
    %vm3512 = vcmp.ne.s32.totalorder %v3510, 0
    %vm3513 = vcmp.lt.s32.totalorder %v3503, 0
    %vm3514 = vcmp.lt.s32.totalorder %v3510, 0
    %vm3515 = vmand %vm3513, %vm3511
    %vm3516 = vmand %vm3514, %vm3512
    %v3517 = vadd.s32 %v3503, 8
    %v3518 = vadd.s32 %v3510, 8
    %v3519 = vsel %vm3515, %v3517, %v3503
    %v3520 = vsel %vm3516, %v3518, %v3510
    %vm3521 = vcmp.eq.s32.totalorder %v3519, 0
    %vm3522 = vcmp.eq.s32.totalorder %v3520, 0
    %v3523 = vrot.slane %v3490, 7
    %v3524 = vrot.slane %v3491, 7
    %v3525 = vrot.slane %v3492, 7
    %v3526 = vrot.slane %v3493, 7
    %vm3527 = vcmp.lt.s32.totalorder %v3495, 1
    %v3528 = vsel %vm3527, %v3523, %v3525
    %v3529 = vsel %vm3527, %v3524, %v3526
    %v3530 = vsel %vm3527, %v3525, %v3523
    %v3531 = vsel %vm3527, %v3526, %v3524
    %v3532 = vsel %vm3521, 1, 0
    %v3533 = vsel %vm3522, 1, 0
    %vm3534 = vcmp.eq.s32.totalorder %v3532, 1
    %vm3535 = vcmp.eq.s32.totalorder %v3533, 1
    %v3536 = vsel %vm3534, 0.0, %v3530
    %v3537 = vsel %vm3534, 0.0, %v3531
    %v3538 = vsel %vm3535, 0.0, %v3528
    %v3539 = vsel %vm3535, 0.0, %v3529
    %vm3540 = vcmp.eq.s32.totalorder %v3519, 7
    %vm3541 = vcmp.eq.s32.totalorder %v3520, 7
    %v3542 = vrot.slane %v3490, 1
    %v3543 = vrot.slane %v3491, 1
    %v3544 = vrot.slane %v3492, 1
    %v3545 = vrot.slane %v3493, 1
    %vm3546 = vcmp.lt.s32.totalorder %v3495, 7
    %v3547 = vsel %vm3546, %v3542, %v3544
    %v3548 = vsel %vm3546, %v3543, %v3545
    %v3549 = vsel %vm3546, %v3544, %v3542
    %v3550 = vsel %vm3546, %v3545, %v3543
    %v3551 = vsel %vm3540, 1, 0
    %v3552 = vsel %vm3541, 1, 0
    %vm3553 = vcmp.eq.s32.totalorder %v3551, 1
    %vm3554 = vcmp.eq.s32.totalorder %v3552, 1
    %v3555 = vsel %vm3553, 0.0, %v3547
    %v3556 = vsel %vm3553, 0.0, %v3548
    %v3557 = vsel %vm3554, 0.0, %v3549
    %v3558 = vsel %vm3554, 0.0, %v3550
    %s3559 = scalar_lea.vmem %s5, 5
    %v3560 = vld [vmem:[%s3559] ss:$8 sm:$0x3]
    %v3562 = vlaneseq
    %v3563 = vshrl.u32 %v3562, 7
    %v3564 = vsub.s32 0, %v3563
    %v3565 = vrot.slane %v3560, %v3564
    %v3566 = vlaneseq
    %v3567 = vshrl.u32 %v3566, 7
    %v3568 = vsub.s32 1, %v3567
    %v3569 = vrot.slane %v3560, %v3568
    %v3572 = vmul.f32 %v3536, %v3565
    %v3573 = vmul.f32 %v3537, %v3569
    %v3574 = vmul.f32 %v3538, %v3565
    %v3575 = vmul.f32 %v3539, %v3569
    %s3576 = scalar_lea.vmem %s5, 6
    %v3577 = vld [vmem:[%s3576] ss:$8 sm:$0x3]
    %v3579 = vlaneseq
    %v3580 = vshrl.u32 %v3579, 7
    %v3581 = vsub.s32 0, %v3580
    %v3582 = vrot.slane %v3577, %v3581
    %v3583 = vlaneseq
    %v3584 = vshrl.u32 %v3583, 7
    %v3585 = vsub.s32 1, %v3584
    %v3586 = vrot.slane %v3577, %v3585
    %v3589 = vmul.f32 %v3490, %v3582
    %v3590 = vmul.f32 %v3491, %v3586
    %v3591 = vmul.f32 %v3492, %v3582
    %v3592 = vmul.f32 %v3493, %v3586
    %v3593 = vadd.f32 %v3572, %v3589
    %v3594 = vadd.f32 %v3573, %v3590
    %v3595 = vadd.f32 %v3574, %v3591
    %v3596 = vadd.f32 %v3575, %v3592
    %s3597 = scalar_lea.vmem %s5, 7
    %v3598 = vld [vmem:[%s3597] ss:$8 sm:$0x3]
    %v3600 = vlaneseq
    %v3601 = vshrl.u32 %v3600, 7
    %v3602 = vsub.s32 0, %v3601
    %v3603 = vrot.slane %v3598, %v3602
    %v3604 = vlaneseq
    %v3605 = vshrl.u32 %v3604, 7
    %v3606 = vsub.s32 1, %v3605
    %v3607 = vrot.slane %v3598, %v3606
    %v3610 = vmul.f32 %v3555, %v3603
    %v3611 = vmul.f32 %v3556, %v3607
    %v3612 = vmul.f32 %v3557, %v3603
    %v3613 = vmul.f32 %v3558, %v3607
    %v3614 = vadd.f32 %v3593, %v3610
    %v3615 = vadd.f32 %v3594, %v3611
    %v3616 = vadd.f32 %v3595, %v3612
    %v3617 = vadd.f32 %v3596, %v3613
    %s3618 = scalar_lea.vmem %s5, 48
    %v3619 = vld [vmem:[%s3618] ss:$8 sm:$0x3]
    %v3621 = vlaneseq
    %v3622 = vshrl.u32 %v3621, 7
    %v3623 = vsub.s32 0, %v3622
    %v3624 = vrot.slane %v3619, %v3623
    %v3625 = vlaneseq
    %v3626 = vshrl.u32 %v3625, 7
    %v3627 = vsub.s32 1, %v3626
    %v3628 = vrot.slane %v3619, %v3627
    %v3631 = vadd.f32 %v3614, %v3624
    %v3632 = vadd.f32 %v3615, %v3628
    %v3633 = vadd.f32 %v3616, %v3624
    %v3634 = vadd.f32 %v3617, %v3628
    %v3635 = vxor.u32 %v3631, 2147483648
    %v3636 = vxor.u32 %v3632, 2147483648
    %v3637 = vxor.u32 %v3633, 2147483648
    %v3638 = vxor.u32 %v3634, 2147483648
    %v3639 = vmul.f32 %v3635, 1.442695
    %v3640 = vpow.pop %v3639
    %v3641 = vmul.f32 %v3636, 1.442695
    %v3642 = vpow.pop %v3641
    %v3643 = vmul.f32 %v3637, 1.442695
    %v3644 = vpow.pop %v3643
    %v3645 = vmul.f32 %v3638, 1.442695
    %v3646 = vpow.pop %v3645
    %v3647 = vadd.f32 %v3640, 1.0
    %v3648 = vadd.f32 %v3642, 1.0
    %v3649 = vadd.f32 %v3644, 1.0
    %v3650 = vadd.f32 %v3646, 1.0
    %v3651 = vrcp.pop %v3647
    %v3652 = vmul.f32 1.0, %v3651
    %v3653 = vrcp.pop %v3648
    %v3654 = vmul.f32 1.0, %v3653
    %v3655 = vrcp.pop %v3649
    %v3656 = vmul.f32 1.0, %v3655
    %v3657 = vrcp.pop %v3650
    %v3658 = vmul.f32 1.0, %v3657
    %v3659 = vmul.f32 %v3631, %v3652
    %v3660 = vmul.f32 %v3632, %v3654
    %v3661 = vmul.f32 %v3633, %v3656
    %v3662 = vmul.f32 %v3634, %v3658
    %v3663 = vadd.f32 %v3490, %v3659
    %v3664 = vadd.f32 %v3491, %v3660
    %v3665 = vadd.f32 %v3492, %v3661
    %v3666 = vadd.f32 %v3493, %v3662
    %v3667 = vadd.f32 %v3663, %v1526
    %v3668 = vadd.f32 %v3664, %v1527
    %v3669 = vadd.f32 %v3665, %v1528
    %v3670 = vadd.f32 %v3666, %v1529
    %s3671 = scalar_lea.vmem %s5, 49
    %v3672 = vld [vmem:[%s3671] ss:$8 sm:$0x3]
    %s3673 = scalar_lea.vmem %s5, 50
    %v3674 = vld [vmem:[%s3673] ss:$8 sm:$0x3]
    %v3675 = vadd.f32 %v3667, %v3668
    %3676 = vadd.xlane.f32.xlu0 %v3675
    %v3677 = vpop.xlane.xlu0 %3676
    %v3678 = vadd.f32 %v3669, %v3670
    %3679 = vadd.xlane.f32.xlu0 %v3678
    %v3680 = vpop.xlane.xlu0 %3679
    %v3681 = vmul.f32 %v3677, %v1540
    %v3682 = vmul.f32 %v3680, %v1540
    %v3683 = vsub.f32 %v3667, %v3681
    %v3684 = vsub.f32 %v3668, %v3681
    %v3685 = vsub.f32 %v3669, %v3682
    %v3686 = vsub.f32 %v3670, %v3682
    %v3687 = vmul.f32 %v3683, %v3683
    %v3688 = vmul.f32 %v3684, %v3684
    %v3689 = vmul.f32 %v3685, %v3685
    %v3690 = vmul.f32 %v3686, %v3686
    %v3691 = vadd.f32 %v3687, %v3688
    %3692 = vadd.xlane.f32.xlu0 %v3691
    %v3693 = vpop.xlane.xlu0 %3692
    %v3694 = vadd.f32 %v3689, %v3690
    %3695 = vadd.xlane.f32.xlu0 %v3694
    %v3696 = vpop.xlane.xlu0 %3695
    %v3697 = vmul.f32 %v3693, %v1540
    %v3698 = vmul.f32 %v3696, %v1540
    %v3699 = vadd.f32 %v3697, 1e-05
    %v3700 = vadd.f32 %v3698, 1e-05
    %v3701 = vrsqrt.pop %v3699
    %v3702 = vrsqrt.pop %v3700
    %v3703 = vmul.f32 %v3683, %v3701
    %v3704 = vmul.f32 %v3684, %v3701
    %v3705 = vmul.f32 %v3685, %v3702
    %v3706 = vmul.f32 %v3686, %v3702
    %v3708 = vlaneseq
    %v3709 = vshrl.u32 %v3708, 7
    %v3710 = vsub.s32 0, %v3709
    %v3711 = vrot.slane %v3672, %v3710
    %v3712 = vlaneseq
    %v3713 = vshrl.u32 %v3712, 7
    %v3714 = vsub.s32 1, %v3713
    %v3715 = vrot.slane %v3672, %v3714
    %v3718 = vmul.f32 %v3703, %v3711
    %v3719 = vmul.f32 %v3704, %v3715
    %v3720 = vmul.f32 %v3705, %v3711
    %v3721 = vmul.f32 %v3706, %v3715
    %v3723 = vlaneseq
    %v3724 = vshrl.u32 %v3723, 7
    %v3725 = vsub.s32 0, %v3724
    %v3726 = vrot.slane %v3674, %v3725
    %v3727 = vlaneseq
    %v3728 = vshrl.u32 %v3727, 7
    %v3729 = vsub.s32 1, %v3728
    %v3730 = vrot.slane %v3674, %v3729
    %v3733 = vadd.f32 %v3718, %v3726
    %v3734 = vadd.f32 %v3719, %v3730
    %v3735 = vadd.f32 %v3720, %v3726
    %v3736 = vadd.f32 %v3721, %v3730
    %v3737 = vpack.c.bf16 %v3735, %v3733
    %v3738 = vpack.c.bf16 %v3736, %v3734
    %v3739 = vld [vmem:[#allocation8 + $0x20] sm:$0xff]
    %v3740 = vld [vmem:[#allocation8 + $0x28] sm:$0xff]
    %v3741 = vld [vmem:[#allocation8 + $0x50] sm:$0xff]
    %v3742 = vld [vmem:[#allocation8 + $0x58] sm:$0xff]
    %v3743 = vld [vmem:[#allocation8 + $0x80] sm:$0xff]
    %v3744 = vld [vmem:[#allocation8 + $0x88] sm:$0xff]
    %v3745 = vld [vmem:[#allocation8 + $0xb0] sm:$0xff]
    %v3746 = vld [vmem:[#allocation8 + $0xb8] sm:$0xff]
    %v3747 = vld [vmem:[#allocation8 + $0xe0] sm:$0xff]
    %v3748 = vld [vmem:[#allocation8 + $0xe8] sm:$0xff]
    %v3749 = vld [vmem:[#allocation8 + $0x110] sm:$0xff]
    %v3750 = vld [vmem:[#allocation8 + $0x118] sm:$0xff]
    %v3751 = vld [vmem:[#allocation8 + $0x140] sm:$0xff]
    %v3752 = vld [vmem:[#allocation8 + $0x148] sm:$0xff]
    %v3753 = vld [vmem:[#allocation8 + $0x170] sm:$0xff]
    %v3754 = vld [vmem:[#allocation8 + $0x178] sm:$0xff]
    %v3755 = vld [vmem:[#allocation8 + $0x1a0] sm:$0xff]
    %v3756 = vld [vmem:[#allocation8 + $0x1a8] sm:$0xff]
    %v3757 = vld [vmem:[#allocation8 + $0x1d0] sm:$0xff]
    %v3758 = vld [vmem:[#allocation8 + $0x1d8] sm:$0xff]
    %v3759 = vld [vmem:[#allocation8 + $0x200] sm:$0xff]
    %v3760 = vld [vmem:[#allocation8 + $0x208] sm:$0xff]
    %v3761 = vld [vmem:[#allocation8 + $0x230] sm:$0xff]
    %v3762 = vld [vmem:[#allocation8 + $0x238] sm:$0xff]
    %v3763 = vld [vmem:[#allocation8 + $0x260] sm:$0xff]
    %v3764 = vld [vmem:[#allocation8 + $0x268] sm:$0xff]
    %v3765 = vld [vmem:[#allocation8 + $0x290] sm:$0xff]
    %v3766 = vld [vmem:[#allocation8 + $0x298] sm:$0xff]
    %v3767 = vld [vmem:[#allocation8 + $0x2c0] sm:$0xff]
    %v3768 = vld [vmem:[#allocation8 + $0x2c8] sm:$0xff]
    %v3769 = vld [vmem:[#allocation8 + $0x2f0] sm:$0xff]
    %v3770 = vld [vmem:[#allocation8 + $0x2f8] sm:$0xff]
    %v3771 = vld [vmem:[#allocation8 + $0x320] sm:$0xff]
    %v3772 = vld [vmem:[#allocation8 + $0x328] sm:$0xff]
    %v3773 = vld [vmem:[#allocation8 + $0x350] sm:$0xff]
    %v3774 = vld [vmem:[#allocation8 + $0x358] sm:$0xff]
    %v3775 = vld [vmem:[#allocation8 + $0x380] sm:$0xff]
    %v3776 = vld [vmem:[#allocation8 + $0x388] sm:$0xff]
    %v3777 = vld [vmem:[#allocation8 + $0x3b0] sm:$0xff]
    %v3778 = vld [vmem:[#allocation8 + $0x3b8] sm:$0xff]
    %v3779 = vld [vmem:[#allocation8 + $0x3e0] sm:$0xff]
    %v3780 = vld [vmem:[#allocation8 + $0x3e8] sm:$0xff]
    %v3781 = vld [vmem:[#allocation8 + $0x410] sm:$0xff]
    %v3782 = vld [vmem:[#allocation8 + $0x418] sm:$0xff]
    %v3783 = vld [vmem:[#allocation8 + $0x440] sm:$0xff]
    %v3784 = vld [vmem:[#allocation8 + $0x448] sm:$0xff]
    %v3785 = vld [vmem:[#allocation8 + $0x470] sm:$0xff]
    %v3786 = vld [vmem:[#allocation8 + $0x478] sm:$0xff]
    %v3787 = vld [vmem:[#allocation8 + $0x4a0] sm:$0xff]
    %v3788 = vld [vmem:[#allocation8 + $0x4a8] sm:$0xff]
    %v3789 = vld [vmem:[#allocation8 + $0x4d0] sm:$0xff]
    %v3790 = vld [vmem:[#allocation8 + $0x4d8] sm:$0xff]
    %v3791 = vld [vmem:[#allocation8 + $0x500] sm:$0xff]
    %v3792 = vld [vmem:[#allocation8 + $0x508] sm:$0xff]
    %v3793 = vld [vmem:[#allocation8 + $0x530] sm:$0xff]
    %v3794 = vld [vmem:[#allocation8 + $0x538] sm:$0xff]
    %v3795 = vld [vmem:[#allocation8 + $0x560] sm:$0xff]
    %v3796 = vld [vmem:[#allocation8 + $0x568] sm:$0xff]
    %v3797 = vld [vmem:[#allocation8 + $0x590] sm:$0xff]
    %v3798 = vld [vmem:[#allocation8 + $0x598] sm:$0xff]
    %v3799 = vld [vmem:[#allocation8 + $0x5c0] sm:$0xff]
    %v3800 = vld [vmem:[#allocation8 + $0x5c8] sm:$0xff]
    %v3801 = vld [vmem:[#allocation8 + $0x5f0] sm:$0xff]
    %v3802 = vld [vmem:[#allocation8 + $0x5f8] sm:$0xff]
    %s3803 = scalar_lea.vmem %s5, 51
    %v3804 = vld [vmem:[%s3803] ss:$8 sm:$0xf]
    %v3806 = vlaneseq
    %v3807 = vshrl.u32 %v3806, 7
    %v3808 = vsub.s32 0, %v3807
    %v3809 = vrot.slane %v3804, %v3808
    %v3810 = vlaneseq
    %v3811 = vshrl.u32 %v3810, 7
    %v3812 = vsub.s32 1, %v3811
    %v3813 = vrot.slane %v3804, %v3812
    %v3814 = vlaneseq
    %v3815 = vshrl.u32 %v3814, 7
    %v3816 = vsub.s32 2, %v3815
    %v3817 = vrot.slane %v3804, %v3816
    %v3818 = vlaneseq
    %v3819 = vshrl.u32 %v3818, 7
    %v3820 = vsub.s32 3, %v3819
    %v3821 = vrot.slane %v3804, %v3820
    %v3890 = vunpack.c.l.b16 %v3739
    %v3891 = vunpack.c.h.b16 %v3739
    %v3892 = vunpack.c.l.b16 %v3740
    %v3893 = vunpack.c.h.b16 %v3740
    %v3894 = vunpack.c.l.b16 %v3741
    %v3895 = vunpack.c.h.b16 %v3741
    %v3896 = vunpack.c.l.b16 %v3742
    %v3897 = vunpack.c.h.b16 %v3742
    %v3898 = vunpack.c.l.b16 %v3743
    %v3899 = vunpack.c.h.b16 %v3743
    %v3900 = vunpack.c.l.b16 %v3744
    %v3901 = vunpack.c.h.b16 %v3744
    %v3902 = vunpack.c.l.b16 %v3745
    %v3903 = vunpack.c.h.b16 %v3745
    %v3904 = vunpack.c.l.b16 %v3746
    %v3905 = vunpack.c.h.b16 %v3746
    %v3906 = vunpack.c.l.b16 %v3747
    %v3907 = vunpack.c.h.b16 %v3747
    %v3908 = vunpack.c.l.b16 %v3748
    %v3909 = vunpack.c.h.b16 %v3748
    %v3910 = vunpack.c.l.b16 %v3749
    %v3911 = vunpack.c.h.b16 %v3749
    %v3912 = vunpack.c.l.b16 %v3750
    %v3913 = vunpack.c.h.b16 %v3750
    %v3914 = vunpack.c.l.b16 %v3751
    %v3915 = vunpack.c.h.b16 %v3751
    %v3916 = vunpack.c.l.b16 %v3752
    %v3917 = vunpack.c.h.b16 %v3752
    %v3918 = vunpack.c.l.b16 %v3753
    %v3919 = vunpack.c.h.b16 %v3753
    %v3920 = vunpack.c.l.b16 %v3754
    %v3921 = vunpack.c.h.b16 %v3754
    %v3922 = vunpack.c.l.b16 %v3755
    %v3923 = vunpack.c.h.b16 %v3755
    %v3924 = vunpack.c.l.b16 %v3756
    %v3925 = vunpack.c.h.b16 %v3756
    %v3926 = vunpack.c.l.b16 %v3757
    %v3927 = vunpack.c.h.b16 %v3757
    %v3928 = vunpack.c.l.b16 %v3758
    %v3929 = vunpack.c.h.b16 %v3758
    %v3930 = vunpack.c.l.b16 %v3759
    %v3931 = vunpack.c.h.b16 %v3759
    %v3932 = vunpack.c.l.b16 %v3760
    %v3933 = vunpack.c.h.b16 %v3760
    %v3934 = vunpack.c.l.b16 %v3761
    %v3935 = vunpack.c.h.b16 %v3761
    %v3936 = vunpack.c.l.b16 %v3762
    %v3937 = vunpack.c.h.b16 %v3762
    %v3938 = vunpack.c.l.b16 %v3763
    %v3939 = vunpack.c.h.b16 %v3763
    %v3940 = vunpack.c.l.b16 %v3764
    %v3941 = vunpack.c.h.b16 %v3764
    %v3942 = vunpack.c.l.b16 %v3765
    %v3943 = vunpack.c.h.b16 %v3765
    %v3944 = vunpack.c.l.b16 %v3766
    %v3945 = vunpack.c.h.b16 %v3766
    %v3946 = vunpack.c.l.b16 %v3767
    %v3947 = vunpack.c.h.b16 %v3767
    %v3948 = vunpack.c.l.b16 %v3768
    %v3949 = vunpack.c.h.b16 %v3768
    %v3950 = vunpack.c.l.b16 %v3769
    %v3951 = vunpack.c.h.b16 %v3769
    %v3952 = vunpack.c.l.b16 %v3770
    %v3953 = vunpack.c.h.b16 %v3770
    %v3954 = vunpack.c.l.b16 %v3771
    %v3955 = vunpack.c.h.b16 %v3771
    %v3956 = vunpack.c.l.b16 %v3772
    %v3957 = vunpack.c.h.b16 %v3772
    %v3958 = vunpack.c.l.b16 %v3773
    %v3959 = vunpack.c.h.b16 %v3773
    %v3960 = vunpack.c.l.b16 %v3774
    %v3961 = vunpack.c.h.b16 %v3774
    %v3962 = vunpack.c.l.b16 %v3775
    %v3963 = vunpack.c.h.b16 %v3775
    %v3964 = vunpack.c.l.b16 %v3776
    %v3965 = vunpack.c.h.b16 %v3776
    %v3966 = vunpack.c.l.b16 %v3777
    %v3967 = vunpack.c.h.b16 %v3777
    %v3968 = vunpack.c.l.b16 %v3778
    %v3969 = vunpack.c.h.b16 %v3778
    %v3970 = vunpack.c.l.b16 %v3779
    %v3971 = vunpack.c.h.b16 %v3779
    %v3972 = vunpack.c.l.b16 %v3780
    %v3973 = vunpack.c.h.b16 %v3780
    %v3974 = vunpack.c.l.b16 %v3781
    %v3975 = vunpack.c.h.b16 %v3781
    %v3976 = vunpack.c.l.b16 %v3782
    %v3977 = vunpack.c.h.b16 %v3782
    %v3978 = vunpack.c.l.b16 %v3783
    %v3979 = vunpack.c.h.b16 %v3783
    %v3980 = vunpack.c.l.b16 %v3784
    %v3981 = vunpack.c.h.b16 %v3784
    %v3982 = vunpack.c.l.b16 %v3785
    %v3983 = vunpack.c.h.b16 %v3785
    %v3984 = vunpack.c.l.b16 %v3786
    %v3985 = vunpack.c.h.b16 %v3786
    %v3986 = vunpack.c.l.b16 %v3787
    %v3987 = vunpack.c.h.b16 %v3787
    %v3988 = vunpack.c.l.b16 %v3788
    %v3989 = vunpack.c.h.b16 %v3788
    %v3990 = vunpack.c.l.b16 %v3789
    %v3991 = vunpack.c.h.b16 %v3789
    %v3992 = vunpack.c.l.b16 %v3790
    %v3993 = vunpack.c.h.b16 %v3790
    %v3994 = vunpack.c.l.b16 %v3791
    %v3995 = vunpack.c.h.b16 %v3791
    %v3996 = vunpack.c.l.b16 %v3792
    %v3997 = vunpack.c.h.b16 %v3792
    %v3998 = vunpack.c.l.b16 %v3793
    %v3999 = vunpack.c.h.b16 %v3793
    %v4000 = vunpack.c.l.b16 %v3794
    %v4001 = vunpack.c.h.b16 %v3794
    %v4002 = vunpack.c.l.b16 %v3795
    %v4003 = vunpack.c.h.b16 %v3795
    %v4004 = vunpack.c.l.b16 %v3796
    %v4005 = vunpack.c.h.b16 %v3796
    %v4006 = vunpack.c.l.b16 %v3797
    %v4007 = vunpack.c.h.b16 %v3797
    %v4008 = vunpack.c.l.b16 %v3798
    %v4009 = vunpack.c.h.b16 %v3798
    %v4010 = vunpack.c.l.b16 %v3799
    %v4011 = vunpack.c.h.b16 %v3799
    %v4012 = vunpack.c.l.b16 %v3800
    %v4013 = vunpack.c.h.b16 %v3800
    %v4014 = vunpack.c.l.b16 %v3801
    %v4015 = vunpack.c.h.b16 %v3801
    %v4016 = vunpack.c.l.b16 %v3802
    %v4017 = vunpack.c.h.b16 %v3802
    %v4018 = vpack.c.b16 %v3894, %v3890
    %v4019 = vpack.c.b16 %v3895, %v3891
    %v4020 = vpack.c.b16 %v3896, %v3892
    %v4021 = vpack.c.b16 %v3897, %v3893
    %v4022 = vpack.c.b16 %v3902, %v3898
    %v4023 = vpack.c.b16 %v3903, %v3899
    %v4024 = vpack.c.b16 %v3904, %v3900
    %v4025 = vpack.c.b16 %v3905, %v3901
    %v4026 = vpack.c.b16 %v3910, %v3906
    %v4027 = vpack.c.b16 %v3911, %v3907
    %v4028 = vpack.c.b16 %v3912, %v3908
    %v4029 = vpack.c.b16 %v3913, %v3909
    %v4030 = vpack.c.b16 %v3918, %v3914
    %v4031 = vpack.c.b16 %v3919, %v3915
    %v4032 = vpack.c.b16 %v3920, %v3916
    %v4033 = vpack.c.b16 %v3921, %v3917
    %v4034 = vpack.c.b16 %v3926, %v3922
    %v4035 = vpack.c.b16 %v3927, %v3923
    %v4036 = vpack.c.b16 %v3928, %v3924
    %v4037 = vpack.c.b16 %v3929, %v3925
    %v4038 = vpack.c.b16 %v3934, %v3930
    %v4039 = vpack.c.b16 %v3935, %v3931
    %v4040 = vpack.c.b16 %v3936, %v3932
    %v4041 = vpack.c.b16 %v3937, %v3933
    %v4042 = vpack.c.b16 %v3942, %v3938
    %v4043 = vpack.c.b16 %v3943, %v3939
    %v4044 = vpack.c.b16 %v3944, %v3940
    %v4045 = vpack.c.b16 %v3945, %v3941
    %v4046 = vpack.c.b16 %v3950, %v3946
    %v4047 = vpack.c.b16 %v3951, %v3947
    %v4048 = vpack.c.b16 %v3952, %v3948
    %v4049 = vpack.c.b16 %v3953, %v3949
    %v4050 = vpack.c.b16 %v3958, %v3954
    %v4051 = vpack.c.b16 %v3959, %v3955
    %v4052 = vpack.c.b16 %v3960, %v3956
    %v4053 = vpack.c.b16 %v3961, %v3957
    %v4054 = vpack.c.b16 %v3966, %v3962
    %v4055 = vpack.c.b16 %v3967, %v3963
    %v4056 = vpack.c.b16 %v3968, %v3964
    %v4057 = vpack.c.b16 %v3969, %v3965
    %v4058 = vpack.c.b16 %v3974, %v3970
    %v4059 = vpack.c.b16 %v3975, %v3971
    %v4060 = vpack.c.b16 %v3976, %v3972
    %v4061 = vpack.c.b16 %v3977, %v3973
    %v4062 = vpack.c.b16 %v3982, %v3978
    %v4063 = vpack.c.b16 %v3983, %v3979
    %v4064 = vpack.c.b16 %v3984, %v3980
    %v4065 = vpack.c.b16 %v3985, %v3981
    %v4066 = vpack.c.b16 %v3990, %v3986
    %v4067 = vpack.c.b16 %v3991, %v3987
    %v4068 = vpack.c.b16 %v3992, %v3988
    %v4069 = vpack.c.b16 %v3993, %v3989
    %v4070 = vpack.c.b16 %v3998, %v3994
    %v4071 = vpack.c.b16 %v3999, %v3995
    %v4072 = vpack.c.b16 %v4000, %v3996
    %v4073 = vpack.c.b16 %v4001, %v3997
    %v4074 = vpack.c.b16 %v4006, %v4002
    %v4075 = vpack.c.b16 %v4007, %v4003
    %v4076 = vpack.c.b16 %v4008, %v4004
    %v4077 = vpack.c.b16 %v4009, %v4005
    %v4078 = vpack.c.b16 %v4014, %v4010
    %v4079 = vpack.c.b16 %v4015, %v4011
    %v4080 = vpack.c.b16 %v4016, %v4012
    %v4081 = vpack.c.b16 %v4017, %v4013
    %4146 = vmatprep.subr.bf16.mxu0 %v4019
    %4147 = vmatpush1.bf16.msra.mxu0 %v4018
    %4148 = vmatprep.subr.bf16.mxu0 %v4023
    %4149 = vmatpush1.bf16.msra.mxu0 %v4022
    %4150 = vmatprep.subr.bf16.mxu0 %v4027
    %4151 = vmatpush1.bf16.msra.mxu0 %v4026
    %4152 = vmatprep.subr.bf16.mxu0 %v4031
    %4153 = vmatpush1.bf16.msra.mxu0 %v4030
    %4154 = vmatprep.subr.bf16.mxu0 %v4035
    %4155 = vmatpush1.bf16.msra.mxu0 %v4034
    %4156 = vmatprep.subr.bf16.mxu0 %v4039
    %4157 = vmatpush1.bf16.msra.mxu0 %v4038
    %4158 = vmatprep.subr.bf16.mxu0 %v4043
    %4159 = vmatpush1.bf16.msra.mxu0 %v4042
    %4160 = vmatprep.subr.bf16.mxu0 %v4047
    %4161 = vmatpush1.bf16.msra.mxu0 %v4046
    %4162 = vmatprep.subr.bf16.mxu0 %v4051
    %4163 = vmatpush1.bf16.msra.mxu0 %v4050
    %4164 = vmatprep.subr.bf16.mxu0 %v4055
    %4165 = vmatpush1.bf16.msra.mxu0 %v4054
    %4166 = vmatprep.subr.bf16.mxu0 %v4059
    %4167 = vmatpush1.bf16.msra.mxu0 %v4058
    %4168 = vmatprep.subr.bf16.mxu0 %v4063
    %4169 = vmatpush1.bf16.msra.mxu0 %v4062
    %4170 = vmatprep.subr.bf16.mxu0 %v4067
    %4171 = vmatpush1.bf16.msra.mxu0 %v4066
    %4172 = vmatprep.subr.bf16.mxu0 %v4071
    %4173 = vmatpush1.bf16.msra.mxu0 %v4070
    %4174 = vmatprep.subr.bf16.mxu0 %v4075
    %4175 = vmatpush1.bf16.msra.mxu0 %v4074
    %4176 = vmatprep.subr.bf16.mxu0 %v4079
    %4177 = vmatpush1.bf16.msra.mxu0 %v4078
    %4178 = vmatprep.mubr.bf16.mxu0 %v3738
    %4179 = vmatmul.mubr.bf16.gmra.mrb[0].mxu0 %v3737
    %v4180 = vpop.f32.mrb[0].mxu0
    %v4181 = vadd.f32 %v3809, %v4180
    %v4182 = vpop.f32.mrb[0].mxu0
    %v4183 = vadd.f32 %v3813, %v4182
    %v4184 = vpop.f32.mrb[0].mxu0
    %v4185 = vadd.f32 %v3809, %v4184
    %v4186 = vpop.f32.mrb[0].mxu0
    %v4187 = vadd.f32 %v3813, %v4186
    %4188 = vdwg.mxu0
    %4189 = vmatprep.subr.bf16.mxu0 %v4021
    %4190 = vmatpush1.bf16.msra.mxu0 %v4020
    %4191 = vmatprep.subr.bf16.mxu0 %v4025
    %4192 = vmatpush1.bf16.msra.mxu0 %v4024
    %4193 = vmatprep.subr.bf16.mxu0 %v4029
    %4194 = vmatpush1.bf16.msra.mxu0 %v4028
    %4195 = vmatprep.subr.bf16.mxu0 %v4033
    %4196 = vmatpush1.bf16.msra.mxu0 %v4032
    %4197 = vmatprep.subr.bf16.mxu0 %v4037
    %4198 = vmatpush1.bf16.msra.mxu0 %v4036
    %4199 = vmatprep.subr.bf16.mxu0 %v4041
    %4200 = vmatpush1.bf16.msra.mxu0 %v4040
    %4201 = vmatprep.subr.bf16.mxu0 %v4045
    %4202 = vmatpush1.bf16.msra.mxu0 %v4044
    %4203 = vmatprep.subr.bf16.mxu0 %v4049
    %4204 = vmatpush1.bf16.msra.mxu0 %v4048
    %4205 = vmatprep.subr.bf16.mxu0 %v4053
    %4206 = vmatpush1.bf16.msra.mxu0 %v4052
    %4207 = vmatprep.subr.bf16.mxu0 %v4057
    %4208 = vmatpush1.bf16.msra.mxu0 %v4056
    %4209 = vmatprep.subr.bf16.mxu0 %v4061
    %4210 = vmatpush1.bf16.msra.mxu0 %v4060
    %4211 = vmatprep.subr.bf16.mxu0 %v4065
    %4212 = vmatpush1.bf16.msra.mxu0 %v4064
    %4213 = vmatprep.subr.bf16.mxu0 %v4069
    %4214 = vmatpush1.bf16.msra.mxu0 %v4068
    %4215 = vmatprep.subr.bf16.mxu0 %v4073
    %4216 = vmatpush1.bf16.msra.mxu0 %v4072
    %4217 = vmatprep.subr.bf16.mxu0 %v4077
    %4218 = vmatpush1.bf16.msra.mxu0 %v4076
    %4219 = vmatprep.subr.bf16.mxu0 %v4081
    %4220 = vmatpush1.bf16.msra.mxu0 %v4080
    %4221 = vmatprep.mubr.bf16.mxu0 %v3738
    %4222 = vmatmul.mubr.bf16.gmra.mrb[0].mxu0 %v3737
    %v4223 = vpop.f32.mrb[0].mxu0
    %v4224 = vadd.f32 %v3817, %v4223
    %v4225 = vpop.f32.mrb[0].mxu0
    %v4226 = vadd.f32 %v3821, %v4225
    %v4227 = vpop.f32.mrb[0].mxu0
    %v4228 = vadd.f32 %v3817, %v4227
    %v4229 = vpop.f32.mrb[0].mxu0
    %v4230 = vadd.f32 %v3821, %v4229
    %4231 = vdwg.mxu0
    %v4232 = vmul.f32 %v4181, 0.5
    %v4233 = vmul.f32 %v4183, 0.5
    %v4234 = vmul.f32 %v4224, 0.5
    %v4235 = vmul.f32 %v4226, 0.5
    %v4236 = vmul.f32 %v4185, 0.5
    %v4237 = vmul.f32 %v4187, 0.5
    %v4238 = vmul.f32 %v4228, 0.5
    %v4239 = vmul.f32 %v4230, 0.5
    %v4240 = vmul.f32 %v4181, 0.044715
    %v4241 = vmul.f32 %v4183, 0.044715
    %v4242 = vmul.f32 %v4224, 0.044715
    %v4243 = vmul.f32 %v4226, 0.044715
    %v4244 = vmul.f32 %v4185, 0.044715
    %v4245 = vmul.f32 %v4187, 0.044715
    %v4246 = vmul.f32 %v4228, 0.044715
    %v4247 = vmul.f32 %v4230, 0.044715
    %v4248 = vmul.f32 %v4240, %v4181
    %v4249 = vmul.f32 %v4241, %v4183
    %v4250 = vmul.f32 %v4242, %v4224
    %v4251 = vmul.f32 %v4243, %v4226
    %v4252 = vmul.f32 %v4244, %v4185
    %v4253 = vmul.f32 %v4245, %v4187
    %v4254 = vmul.f32 %v4246, %v4228
    %v4255 = vmul.f32 %v4247, %v4230
    %v4256 = vmul.f32 %v4248, %v4181
    %v4257 = vmul.f32 %v4249, %v4183
    %v4258 = vmul.f32 %v4250, %v4224
    %v4259 = vmul.f32 %v4251, %v4226
    %v4260 = vmul.f32 %v4252, %v4185
    %v4261 = vmul.f32 %v4253, %v4187
    %v4262 = vmul.f32 %v4254, %v4228
    %v4263 = vmul.f32 %v4255, %v4230
    %v4264 = vadd.f32 %v4181, %v4256
    %v4265 = vadd.f32 %v4183, %v4257
    %v4266 = vadd.f32 %v4224, %v4258
    %v4267 = vadd.f32 %v4226, %v4259
    %v4268 = vadd.f32 %v4185, %v4260
    %v4269 = vadd.f32 %v4187, %v4261
    %v4270 = vadd.f32 %v4228, %v4262
    %v4271 = vadd.f32 %v4230, %v4263
    %v4272 = vmul.f32 %v4264, 0.7978846
    %v4273 = vmul.f32 %v4265, 0.7978846
    %v4274 = vmul.f32 %v4266, 0.7978846
    %v4275 = vmul.f32 %v4267, 0.7978846
    %v4276 = vmul.f32 %v4268, 0.7978846
    %v4277 = vmul.f32 %v4269, 0.7978846
    %v4278 = vmul.f32 %v4270, 0.7978846
    %v4279 = vmul.f32 %v4271, 0.7978846
    %v4280 = vtanh.pop %v4272
    %v4281 = vtanh.pop %v4273
    %v4282 = vtanh.pop %v4274
    %v4283 = vtanh.pop %v4275
    %v4284 = vtanh.pop %v4276
    %v4285 = vtanh.pop %v4277
    %v4286 = vtanh.pop %v4278
    %v4287 = vtanh.pop %v4279
    %v4288 = vadd.f32 %v4280, 1.0
    %v4289 = vadd.f32 %v4281, 1.0
    %v4290 = vadd.f32 %v4282, 1.0
    %v4291 = vadd.f32 %v4283, 1.0
    %v4292 = vadd.f32 %v4284, 1.0
    %v4293 = vadd.f32 %v4285, 1.0
    %v4294 = vadd.f32 %v4286, 1.0
    %v4295 = vadd.f32 %v4287, 1.0
    %v4296 = vmul.f32 %v4232, %v4288
    %v4297 = vmul.f32 %v4233, %v4289
    %v4298 = vmul.f32 %v4234, %v4290
    %v4299 = vmul.f32 %v4235, %v4291
    %v4300 = vmul.f32 %v4236, %v4292
    %v4301 = vmul.f32 %v4237, %v4293
    %v4302 = vmul.f32 %v4238, %v4294
    %v4303 = vmul.f32 %v4239, %v4295
    %v4304 = vpack.c.bf16 %v4300, %v4296
    %v4305 = vpack.c.bf16 %v4301, %v4297
    %v4306 = vpack.c.bf16 %v4302, %v4298
    %v4307 = vpack.c.bf16 %v4303, %v4299
    %v4308 = vld [vmem:[#allocation10] sm:$0xff]
    %v4309 = vld [vmem:[#allocation10 + $0x8] sm:$0xff]
    %v4310 = vld [vmem:[#allocation10 + $0x10] sm:$0xff]
    %v4311 = vld [vmem:[#allocation10 + $0x18] sm:$0xff]
    %v4312 = vld [vmem:[#allocation10 + $0x20] sm:$0xff]
    %v4313 = vld [vmem:[#allocation10 + $0x28] sm:$0xff]
    %v4314 = vld [vmem:[#allocation10 + $0x30] sm:$0xff]
    %v4315 = vld [vmem:[#allocation10 + $0x38] sm:$0xff]
    %v4316 = vld [vmem:[#allocation10 + $0x40] sm:$0xff]
    %v4317 = vld [vmem:[#allocation10 + $0x48] sm:$0xff]
    %v4318 = vld [vmem:[#allocation10 + $0x50] sm:$0xff]
    %v4319 = vld [vmem:[#allocation10 + $0x58] sm:$0xff]
    %v4320 = vld [vmem:[#allocation10 + $0x60] sm:$0xff]
    %v4321 = vld [vmem:[#allocation10 + $0x68] sm:$0xff]
    %v4322 = vld [vmem:[#allocation10 + $0x70] sm:$0xff]
    %v4323 = vld [vmem:[#allocation10 + $0x78] sm:$0xff]
    %v4324 = vld [vmem:[#allocation10 + $0x80] sm:$0xff]
    %v4325 = vld [vmem:[#allocation10 + $0x88] sm:$0xff]
    %v4326 = vld [vmem:[#allocation10 + $0x90] sm:$0xff]
    %v4327 = vld [vmem:[#allocation10 + $0x98] sm:$0xff]
    %v4328 = vld [vmem:[#allocation10 + $0xa0] sm:$0xff]
    %v4329 = vld [vmem:[#allocation10 + $0xa8] sm:$0xff]
    %v4330 = vld [vmem:[#allocation10 + $0xb0] sm:$0xff]
    %v4331 = vld [vmem:[#allocation10 + $0xb8] sm:$0xff]
    %v4332 = vld [vmem:[#allocation10 + $0xc0] sm:$0xff]
    %v4333 = vld [vmem:[#allocation10 + $0xc8] sm:$0xff]
    %v4334 = vld [vmem:[#allocation10 + $0xd0] sm:$0xff]
    %v4335 = vld [vmem:[#allocation10 + $0xd8] sm:$0xff]
    %v4336 = vld [vmem:[#allocation10 + $0xe0] sm:$0xff]
    %v4337 = vld [vmem:[#allocation10 + $0xe8] sm:$0xff]
    %v4338 = vld [vmem:[#allocation10 + $0xf0] sm:$0xff]
    %v4339 = vld [vmem:[#allocation10 + $0xf8] sm:$0xff]
    %v4340 = vld [vmem:[#allocation10 + $0x100] sm:$0xff]
    %v4341 = vld [vmem:[#allocation10 + $0x108] sm:$0xff]
    %v4342 = vld [vmem:[#allocation10 + $0x110] sm:$0xff]
    %v4343 = vld [vmem:[#allocation10 + $0x118] sm:$0xff]
    %v4344 = vld [vmem:[#allocation10 + $0x120] sm:$0xff]
    %v4345 = vld [vmem:[#allocation10 + $0x128] sm:$0xff]
    %v4346 = vld [vmem:[#allocation10 + $0x130] sm:$0xff]
    %v4347 = vld [vmem:[#allocation10 + $0x138] sm:$0xff]
    %v4348 = vld [vmem:[#allocation10 + $0x140] sm:$0xff]
    %v4349 = vld [vmem:[#allocation10 + $0x148] sm:$0xff]
    %v4350 = vld [vmem:[#allocation10 + $0x150] sm:$0xff]
    %v4351 = vld [vmem:[#allocation10 + $0x158] sm:$0xff]
    %v4352 = vld [vmem:[#allocation10 + $0x160] sm:$0xff]
    %v4353 = vld [vmem:[#allocation10 + $0x168] sm:$0xff]
    %v4354 = vld [vmem:[#allocation10 + $0x170] sm:$0xff]
    %v4355 = vld [vmem:[#allocation10 + $0x178] sm:$0xff]
    %v4356 = vld [vmem:[#allocation10 + $0x180] sm:$0xff]
    %v4357 = vld [vmem:[#allocation10 + $0x188] sm:$0xff]
    %v4358 = vld [vmem:[#allocation10 + $0x190] sm:$0xff]
    %v4359 = vld [vmem:[#allocation10 + $0x198] sm:$0xff]
    %v4360 = vld [vmem:[#allocation10 + $0x1a0] sm:$0xff]
    %v4361 = vld [vmem:[#allocation10 + $0x1a8] sm:$0xff]
    %v4362 = vld [vmem:[#allocation10 + $0x1b0] sm:$0xff]
    %v4363 = vld [vmem:[#allocation10 + $0x1b8] sm:$0xff]
    %v4364 = vld [vmem:[#allocation10 + $0x1c0] sm:$0xff]
    %v4365 = vld [vmem:[#allocation10 + $0x1c8] sm:$0xff]
    %v4366 = vld [vmem:[#allocation10 + $0x1d0] sm:$0xff]
    %v4367 = vld [vmem:[#allocation10 + $0x1d8] sm:$0xff]
    %v4368 = vld [vmem:[#allocation10 + $0x1e0] sm:$0xff]
    %v4369 = vld [vmem:[#allocation10 + $0x1e8] sm:$0xff]
    %v4370 = vld [vmem:[#allocation10 + $0x1f0] sm:$0xff]
    %v4371 = vld [vmem:[#allocation10 + $0x1f8] sm:$0xff]
    %s4372 = scalar_lea.vmem %s5, 52
    %v4373 = vld [vmem:[%s4372] ss:$8 sm:$0x3]
    %v4375 = vlaneseq
    %v4376 = vshrl.u32 %v4375, 7
    %v4377 = vsub.s32 0, %v4376
    %v4378 = vrot.slane %v4373, %v4377
    %v4379 = vlaneseq
    %v4380 = vshrl.u32 %v4379, 7
    %v4381 = vsub.s32 1, %v4380
    %v4382 = vrot.slane %v4373, %v4381
    %v4449 = vunpack.c.l.b16 %v4308
    %v4450 = vunpack.c.h.b16 %v4308
    %v4451 = vunpack.c.l.b16 %v4309
    %v4452 = vunpack.c.h.b16 %v4309
    %v4453 = vunpack.c.l.b16 %v4310
    %v4454 = vunpack.c.h.b16 %v4310
    %v4455 = vunpack.c.l.b16 %v4311
    %v4456 = vunpack.c.h.b16 %v4311
    %v4457 = vunpack.c.l.b16 %v4312
    %v4458 = vunpack.c.h.b16 %v4312
    %v4459 = vunpack.c.l.b16 %v4313
    %v4460 = vunpack.c.h.b16 %v4313
    %v4461 = vunpack.c.l.b16 %v4314
    %v4462 = vunpack.c.h.b16 %v4314
    %v4463 = vunpack.c.l.b16 %v4315
    %v4464 = vunpack.c.h.b16 %v4315
    %v4465 = vunpack.c.l.b16 %v4316
    %v4466 = vunpack.c.h.b16 %v4316
    %v4467 = vunpack.c.l.b16 %v4317
    %v4468 = vunpack.c.h.b16 %v4317
    %v4469 = vunpack.c.l.b16 %v4318
    %v4470 = vunpack.c.h.b16 %v4318
    %v4471 = vunpack.c.l.b16 %v4319
    %v4472 = vunpack.c.h.b16 %v4319
    %v4473 = vunpack.c.l.b16 %v4320
    %v4474 = vunpack.c.h.b16 %v4320
    %v4475 = vunpack.c.l.b16 %v4321
    %v4476 = vunpack.c.h.b16 %v4321
    %v4477 = vunpack.c.l.b16 %v4322
    %v4478 = vunpack.c.h.b16 %v4322
    %v4479 = vunpack.c.l.b16 %v4323
    %v4480 = vunpack.c.h.b16 %v4323
    %v4481 = vunpack.c.l.b16 %v4324
    %v4482 = vunpack.c.h.b16 %v4324
    %v4483 = vunpack.c.l.b16 %v4325
    %v4484 = vunpack.c.h.b16 %v4325
    %v4485 = vunpack.c.l.b16 %v4326
    %v4486 = vunpack.c.h.b16 %v4326
    %v4487 = vunpack.c.l.b16 %v4327
    %v4488 = vunpack.c.h.b16 %v4327
    %v4489 = vunpack.c.l.b16 %v4328
    %v4490 = vunpack.c.h.b16 %v4328
    %v4491 = vunpack.c.l.b16 %v4329
    %v4492 = vunpack.c.h.b16 %v4329
    %v4493 = vunpack.c.l.b16 %v4330
    %v4494 = vunpack.c.h.b16 %v4330
    %v4495 = vunpack.c.l.b16 %v4331
    %v4496 = vunpack.c.h.b16 %v4331
    %v4497 = vunpack.c.l.b16 %v4332
    %v4498 = vunpack.c.h.b16 %v4332
    %v4499 = vunpack.c.l.b16 %v4333
    %v4500 = vunpack.c.h.b16 %v4333
    %v4501 = vunpack.c.l.b16 %v4334
    %v4502 = vunpack.c.h.b16 %v4334
    %v4503 = vunpack.c.l.b16 %v4335
    %v4504 = vunpack.c.h.b16 %v4335
    %v4505 = vunpack.c.l.b16 %v4336
    %v4506 = vunpack.c.h.b16 %v4336
    %v4507 = vunpack.c.l.b16 %v4337
    %v4508 = vunpack.c.h.b16 %v4337
    %v4509 = vunpack.c.l.b16 %v4338
    %v4510 = vunpack.c.h.b16 %v4338
    %v4511 = vunpack.c.l.b16 %v4339
    %v4512 = vunpack.c.h.b16 %v4339
    %v4513 = vunpack.c.l.b16 %v4340
    %v4514 = vunpack.c.h.b16 %v4340
    %v4515 = vunpack.c.l.b16 %v4341
    %v4516 = vunpack.c.h.b16 %v4341
    %v4517 = vunpack.c.l.b16 %v4342
    %v4518 = vunpack.c.h.b16 %v4342
    %v4519 = vunpack.c.l.b16 %v4343
    %v4520 = vunpack.c.h.b16 %v4343
    %v4521 = vunpack.c.l.b16 %v4344
    %v4522 = vunpack.c.h.b16 %v4344
    %v4523 = vunpack.c.l.b16 %v4345
    %v4524 = vunpack.c.h.b16 %v4345
    %v4525 = vunpack.c.l.b16 %v4346
    %v4526 = vunpack.c.h.b16 %v4346
    %v4527 = vunpack.c.l.b16 %v4347
    %v4528 = vunpack.c.h.b16 %v4347
    %v4529 = vunpack.c.l.b16 %v4348
    %v4530 = vunpack.c.h.b16 %v4348
    %v4531 = vunpack.c.l.b16 %v4349
    %v4532 = vunpack.c.h.b16 %v4349
    %v4533 = vunpack.c.l.b16 %v4350
    %v4534 = vunpack.c.h.b16 %v4350
    %v4535 = vunpack.c.l.b16 %v4351
    %v4536 = vunpack.c.h.b16 %v4351
    %v4537 = vunpack.c.l.b16 %v4352
    %v4538 = vunpack.c.h.b16 %v4352
    %v4539 = vunpack.c.l.b16 %v4353
    %v4540 = vunpack.c.h.b16 %v4353
    %v4541 = vunpack.c.l.b16 %v4354
    %v4542 = vunpack.c.h.b16 %v4354
    %v4543 = vunpack.c.l.b16 %v4355
    %v4544 = vunpack.c.h.b16 %v4355
    %v4545 = vunpack.c.l.b16 %v4356
    %v4546 = vunpack.c.h.b16 %v4356
    %v4547 = vunpack.c.l.b16 %v4357
    %v4548 = vunpack.c.h.b16 %v4357
    %v4549 = vunpack.c.l.b16 %v4358
    %v4550 = vunpack.c.h.b16 %v4358
    %v4551 = vunpack.c.l.b16 %v4359
    %v4552 = vunpack.c.h.b16 %v4359
    %v4553 = vunpack.c.l.b16 %v4360
    %v4554 = vunpack.c.h.b16 %v4360
    %v4555 = vunpack.c.l.b16 %v4361
    %v4556 = vunpack.c.h.b16 %v4361
    %v4557 = vunpack.c.l.b16 %v4362
    %v4558 = vunpack.c.h.b16 %v4362
    %v4559 = vunpack.c.l.b16 %v4363
    %v4560 = vunpack.c.h.b16 %v4363
    %v4561 = vunpack.c.l.b16 %v4364
    %v4562 = vunpack.c.h.b16 %v4364
    %v4563 = vunpack.c.l.b16 %v4365
    %v4564 = vunpack.c.h.b16 %v4365
    %v4565 = vunpack.c.l.b16 %v4366
    %v4566 = vunpack.c.h.b16 %v4366
    %v4567 = vunpack.c.l.b16 %v4367
    %v4568 = vunpack.c.h.b16 %v4367
    %v4569 = vunpack.c.l.b16 %v4368
    %v4570 = vunpack.c.h.b16 %v4368
    %v4571 = vunpack.c.l.b16 %v4369
    %v4572 = vunpack.c.h.b16 %v4369
    %v4573 = vunpack.c.l.b16 %v4370
    %v4574 = vunpack.c.h.b16 %v4370
    %v4575 = vunpack.c.l.b16 %v4371
    %v4576 = vunpack.c.h.b16 %v4371
    %v4577 = vpack.c.b16 %v4451, %v4449
    %v4578 = vpack.c.b16 %v4452, %v4450
    %v4579 = vpack.c.b16 %v4455, %v4453
    %v4580 = vpack.c.b16 %v4456, %v4454
    %v4581 = vpack.c.b16 %v4459, %v4457
    %v4582 = vpack.c.b16 %v4460, %v4458
    %v4583 = vpack.c.b16 %v4463, %v4461
    %v4584 = vpack.c.b16 %v4464, %v4462
    %v4585 = vpack.c.b16 %v4467, %v4465
    %v4586 = vpack.c.b16 %v4468, %v4466
    %v4587 = vpack.c.b16 %v4471, %v4469
    %v4588 = vpack.c.b16 %v4472, %v4470
    %v4589 = vpack.c.b16 %v4475, %v4473
    %v4590 = vpack.c.b16 %v4476, %v4474
    %v4591 = vpack.c.b16 %v4479, %v4477
    %v4592 = vpack.c.b16 %v4480, %v4478
    %v4593 = vpack.c.b16 %v4483, %v4481
    %v4594 = vpack.c.b16 %v4484, %v4482
    %v4595 = vpack.c.b16 %v4487, %v4485
    %v4596 = vpack.c.b16 %v4488, %v4486
    %v4597 = vpack.c.b16 %v4491, %v4489
    %v4598 = vpack.c.b16 %v4492, %v4490
    %v4599 = vpack.c.b16 %v4495, %v4493
    %v4600 = vpack.c.b16 %v4496, %v4494
    %v4601 = vpack.c.b16 %v4499, %v4497
    %v4602 = vpack.c.b16 %v4500, %v4498
    %v4603 = vpack.c.b16 %v4503, %v4501
    %v4604 = vpack.c.b16 %v4504, %v4502
    %v4605 = vpack.c.b16 %v4507, %v4505
    %v4606 = vpack.c.b16 %v4508, %v4506
    %v4607 = vpack.c.b16 %v4511, %v4509
    %v4608 = vpack.c.b16 %v4512, %v4510
    %v4609 = vpack.c.b16 %v4515, %v4513
    %v4610 = vpack.c.b16 %v4516, %v4514
    %v4611 = vpack.c.b16 %v4519, %v4517
    %v4612 = vpack.c.b16 %v4520, %v4518
    %v4613 = vpack.c.b16 %v4523, %v4521
    %v4614 = vpack.c.b16 %v4524, %v4522
    %v4615 = vpack.c.b16 %v4527, %v4525
    %v4616 = vpack.c.b16 %v4528, %v4526
    %v4617 = vpack.c.b16 %v4531, %v4529
    %v4618 = vpack.c.b16 %v4532, %v4530
    %v4619 = vpack.c.b16 %v4535, %v4533
    %v4620 = vpack.c.b16 %v4536, %v4534
    %v4621 = vpack.c.b16 %v4539, %v4537
    %v4622 = vpack.c.b16 %v4540, %v4538
    %v4623 = vpack.c.b16 %v4543, %v4541
    %v4624 = vpack.c.b16 %v4544, %v4542
    %v4625 = vpack.c.b16 %v4547, %v4545
    %v4626 = vpack.c.b16 %v4548, %v4546
    %v4627 = vpack.c.b16 %v4551, %v4549
    %v4628 = vpack.c.b16 %v4552, %v4550
    %v4629 = vpack.c.b16 %v4555, %v4553
    %v4630 = vpack.c.b16 %v4556, %v4554
    %v4631 = vpack.c.b16 %v4559, %v4557
    %v4632 = vpack.c.b16 %v4560, %v4558
    %v4633 = vpack.c.b16 %v4563, %v4561
    %v4634 = vpack.c.b16 %v4564, %v4562
    %v4635 = vpack.c.b16 %v4567, %v4565
    %v4636 = vpack.c.b16 %v4568, %v4566
    %v4637 = vpack.c.b16 %v4571, %v4569
    %v4638 = vpack.c.b16 %v4572, %v4570
    %v4639 = vpack.c.b16 %v4575, %v4573
    %v4640 = vpack.c.b16 %v4576, %v4574
    %4705 = vmatprep.subr.bf16.mxu0 %v4578
    %4706 = vmatpush1.bf16.msra.mxu0 %v4577
    %4707 = vmatprep.subr.bf16.mxu0 %v4580
    %4708 = vmatpush1.bf16.msra.mxu0 %v4579
    %4709 = vmatprep.subr.bf16.mxu0 %v4582
    %4710 = vmatpush1.bf16.msra.mxu0 %v4581
    %4711 = vmatprep.subr.bf16.mxu0 %v4584
    %4712 = vmatpush1.bf16.msra.mxu0 %v4583
    %4713 = vmatprep.subr.bf16.mxu0 %v4586
    %4714 = vmatpush1.bf16.msra.mxu0 %v4585
    %4715 = vmatprep.subr.bf16.mxu0 %v4588
    %4716 = vmatpush1.bf16.msra.mxu0 %v4587
    %4717 = vmatprep.subr.bf16.mxu0 %v4590
    %4718 = vmatpush1.bf16.msra.mxu0 %v4589
    %4719 = vmatprep.subr.bf16.mxu0 %v4592
    %4720 = vmatpush1.bf16.msra.mxu0 %v4591
    %4721 = vmatprep.subr.bf16.mxu0 %v4594
    %4722 = vmatpush1.bf16.msra.mxu0 %v4593
    %4723 = vmatprep.subr.bf16.mxu0 %v4596
    %4724 = vmatpush1.bf16.msra.mxu0 %v4595
    %4725 = vmatprep.subr.bf16.mxu0 %v4598
    %4726 = vmatpush1.bf16.msra.mxu0 %v4597
    %4727 = vmatprep.subr.bf16.mxu0 %v4600
    %4728 = vmatpush1.bf16.msra.mxu0 %v4599
    %4729 = vmatprep.subr.bf16.mxu0 %v4602
    %4730 = vmatpush1.bf16.msra.mxu0 %v4601
    %4731 = vmatprep.subr.bf16.mxu0 %v4604
    %4732 = vmatpush1.bf16.msra.mxu0 %v4603
    %4733 = vmatprep.subr.bf16.mxu0 %v4606
    %4734 = vmatpush1.bf16.msra.mxu0 %v4605
    %4735 = vmatprep.subr.bf16.mxu0 %v4608
    %4736 = vmatpush1.bf16.msra.mxu0 %v4607
    %4737 = vmatprep.mubr.bf16.mxu0 %v4305
    %4738 = vmatmul.mubr.bf16.gmra.mrb[0].mxu0 %v4304
    %v4739 = vpop.f32.mrb[0].mxu0
    %v4740 = vadd.f32 %v4378, %v4739
    %v4741 = vpop.f32.mrb[0].mxu0
    %v4742 = vadd.f32 %v4382, %v4741
    %v4743 = vpop.f32.mrb[0].mxu0
    %v4744 = vadd.f32 %v4378, %v4743
    %v4745 = vpop.f32.mrb[0].mxu0
    %v4746 = vadd.f32 %v4382, %v4745
    %4747 = vdwg.mxu0
    %4748 = vmatprep.subr.bf16.mxu0 %v4610
    %4749 = vmatpush1.bf16.msra.mxu0 %v4609
    %4750 = vmatprep.subr.bf16.mxu0 %v4612
    %4751 = vmatpush1.bf16.msra.mxu0 %v4611
    %4752 = vmatprep.subr.bf16.mxu0 %v4614
    %4753 = vmatpush1.bf16.msra.mxu0 %v4613
    %4754 = vmatprep.subr.bf16.mxu0 %v4616
    %4755 = vmatpush1.bf16.msra.mxu0 %v4615
    %4756 = vmatprep.subr.bf16.mxu0 %v4618
    %4757 = vmatpush1.bf16.msra.mxu0 %v4617
    %4758 = vmatprep.subr.bf16.mxu0 %v4620
    %4759 = vmatpush1.bf16.msra.mxu0 %v4619
    %4760 = vmatprep.subr.bf16.mxu0 %v4622
    %4761 = vmatpush1.bf16.msra.mxu0 %v4621
    %4762 = vmatprep.subr.bf16.mxu0 %v4624
    %4763 = vmatpush1.bf16.msra.mxu0 %v4623
    %4764 = vmatprep.subr.bf16.mxu0 %v4626
    %4765 = vmatpush1.bf16.msra.mxu0 %v4625
    %4766 = vmatprep.subr.bf16.mxu0 %v4628
    %4767 = vmatpush1.bf16.msra.mxu0 %v4627
    %4768 = vmatprep.subr.bf16.mxu0 %v4630
    %4769 = vmatpush1.bf16.msra.mxu0 %v4629
    %4770 = vmatprep.subr.bf16.mxu0 %v4632
    %4771 = vmatpush1.bf16.msra.mxu0 %v4631
    %4772 = vmatprep.subr.bf16.mxu0 %v4634
    %4773 = vmatpush1.bf16.msra.mxu0 %v4633
    %4774 = vmatprep.subr.bf16.mxu0 %v4636
    %4775 = vmatpush1.bf16.msra.mxu0 %v4635
    %4776 = vmatprep.subr.bf16.mxu0 %v4638
    %4777 = vmatpush1.bf16.msra.mxu0 %v4637
    %4778 = vmatprep.subr.bf16.mxu0 %v4640
    %4779 = vmatpush1.bf16.msra.mxu0 %v4639
    %4780 = vmatprep.mubr.bf16.mxu0 %v4307
    %4781 = vmatmul.mubr.bf16.gmra.mrb[0].mxu0 %v4306
    %v4782 = vpop.f32.mrb[0].mxu0
    %v4783 = vadd.f32 %v4740, %v4782
    %v4784 = vpop.f32.mrb[0].mxu0
    %v4785 = vadd.f32 %v4742, %v4784
    %v4786 = vpop.f32.mrb[0].mxu0
    %v4787 = vadd.f32 %v4744, %v4786
    %v4788 = vpop.f32.mrb[0].mxu0
    %v4789 = vadd.f32 %v4746, %v4788
    %4790 = vdwg.mxu0
    %v4791 = vadd.f32 %v3667, %v4783
    %v4792 = vadd.f32 %v3668, %v4785
    %v4793 = vadd.f32 %v3669, %v4787
    %v4794 = vadd.f32 %v3670, %v4789
    %4795 = vst [vmem:[#allocation11] sm:$0xff] %v4791
    %4796 = vst [vmem:[#allocation11 + $0x8] sm:$0xff] %v4792
    %4797 = vst [vmem:[#allocation11 + $0x10] sm:$0xff] %v4793
    %4798 = vst [vmem:[#allocation11 + $0x18] sm:$0xff] %v4794
    %4799 = vst [vmem:[#allocation12] sm:$0xff] %v1526
    %4800 = vst [vmem:[#allocation12 + $0x8] sm:$0xff] %v1527
    %4801 = vst [vmem:[#allocation12 + $0x10] sm:$0xff] %v1528
    %4802 = vst [vmem:[#allocation12 + $0x18] sm:$0xff] %v1529
    // Predicated region
    $region46: #{tpu_custom_call.1} parent=1 // pred_check
      _
    $region47: #{tpu_custom_call.1} parent=1 // pred_check_branch
      %4804 = sbr.rel (0) target = $region49
    $region48: #{tpu_custom_call.1} parent=1 // pred_region
      %s4806 = ssub.s32 512, 512
      %4807 = vsyncadd [#allocation4], %s4806
      %s4808 = sshll.u32 [#allocation11], 4
      %s4809 = int_to_ptr.vmem [resolvable:$true] %s4808
      %4814 = dma.vmem_to_hbm [thread:$0]  %s4809, 512, %s6, [#allocation4], 256, 256, 16
    $region49: #{tpu_custom_call.1} parent=1 // pred_fallthru
      _
    // Predicated region
    $region50: #{tpu_custom_call.1} parent=1 // pred_check
      _
    $region51: #{tpu_custom_call.1} parent=1 // pred_check_branch
      %4816 = sbr.rel (0) target = $region53
    $region52: #{tpu_custom_call.1} parent=1 // pred_region
      %s4818 = ssub.s32 512, 512
      %4819 = vsyncadd [#allocation13], %s4818
      %s4820 = sshll.u32 [#allocation12], 4
      %s4821 = int_to_ptr.vmem [resolvable:$true] %s4820
      %4826 = dma.vmem_to_hbm [thread:$0]  %s4821, 512, %s7, [#allocation13], 256, 256, 16
    $region53: #{tpu_custom_call.1} parent=1 // pred_fallthru
      _
    // Predicated region
    $region54: #{tpu_custom_call.1} parent=1 // pred_check
      _
    $region55: #{tpu_custom_call.1} parent=1 // pred_check_branch
      %4828 = sbr.rel (0) target = $region57
    $region56: #{tpu_custom_call.1} parent=1 // pred_region
      %4829 = dma.done [#allocation4], 512
    $region57: #{tpu_custom_call.1} parent=1 // pred_fallthru
      _
    // Predicated region
    $region58: #{tpu_custom_call.1} parent=1 // pred_check
      _
    $region59: #{tpu_custom_call.1} parent=1 // pred_check_branch
      %4831 = sbr.rel (0) target = $region61
    $region60: #{tpu_custom_call.1} parent=1 // pred_region
      %4832 = dma.done [#allocation13], 512
    $region61: #{tpu_custom_call.1} parent=1 // pred_fallthru
      _
    %4833 = vsyncpa [#allocation3], 1
    %4834 = vsyncpa [#allocation6], 1
    %4835 = vsyncpa [#allocation9], 1
    %4836 = vsyncpa [#allocation4], 1
    %4837 = vsyncpa [#allocation13], 1

</llo_original>
